<compile_context>
chip_gen: v5e
topology: v5e:2x2
jax: 0.10.0
libtpu: 0.0.40
codegen_flags: <defaults>
</compile_context>

<pallas_src>
import functools
import math

import jax
import jax.numpy as jnp
import numpy as np
from jax import lax
from jax.experimental import pallas as pl
from jax.experimental.pallas import tpu as pltpu

NEG_SLOPE = 0.01   # nn.LeakyReLU() default negative_slope
LANES = 128        # lane-dense W padding (one full lane tile)
R_ROWS = 4         # output rows batched per GEMM  -> 4*128 = 512 output lanes


def _round_up(x, m):
    return (x + m - 1) // m * m


# ---------------------------------------------------------------------------
# Fused kernel: runs deconv1 -> deconv2 -> deconv3 for one image per grid step.
#
# Layouts (W is always the lane dimension, padded to 128):
#   up1_ref   : (1, Hp1, Cp1, 128)   dilated+padded input image (built in XLA)
#   w*_ref    : (Coutp, K*K*Cp)      flipped, channel-padded GEMM weights
#   b*_ref    : (Coutp, 1)
#   out_ref   : (1, Ho3, Coutp3, 128)
#   up2/up3   : VMEM scratch holding the dilated+padded inputs of layers 2/3
#   patch_ref : (Kd_max, R_ROWS*128) VMEM im2col scratch (R rows per GEMM)
# ---------------------------------------------------------------------------
def _fused_kernel(up1_ref, w1_ref, b1_ref, w2_ref, b2_ref, w3_ref, b3_ref,
                  out_ref, up2_ref, up3_ref, patch_ref, *, cfg):
    # Zero scratch once per image: the padding rows/cols of up2/up3 must be
    # exact zeros, and the patch scratch must never contain non-finite
    # garbage (its padding lanes feed the spread matmuls below).
    up2_ref[...] = jnp.zeros_like(up2_ref)
    up3_ref[...] = jnp.zeros_like(up3_ref)
    patch_ref[...] = jnp.zeros_like(patch_ref)

    def make_spread_store(dst_ref, stride, offset, wo_src):
        # 0/1 matrix S with S[w, offset + stride*w] = 1 for w < wo_src.
        # row @ S performs zero-insertion (stride) + left padding (offset)
        # along the lane axis and zeroes the garbage lanes >= wo_src, so the
        # next layer's dilated input is built with plain dense stores.
        r_i = lax.broadcasted_iota(jnp.int32, (LANES, LANES), 0)
        c_i = lax.broadcasted_iota(jnp.int32, (LANES, LANES), 1)
        spread = jnp.where((c_i == stride * r_i + offset) & (r_i < wo_src),
                           1.0, 0.0).astype(jnp.float32)

        def store(h, val):                      # val: (Cp_next, 128)
            dil = jnp.dot(val, spread, preferred_element_type=jnp.float32)
            dst_ref[offset + stride * h, :, :] = dil
        return store

    def store_final(h, val):
        out_ref[0, h, :, :] = val.astype(out_ref.dtype)

    def run_layer(get_row, w_ref, b_ref, store_row, *, K, Cp, Ho, Wo, act):
        Kd = K * K * Cp
        R = min(R_ROWS, Ho)
        w = w_ref[...]                          # (Coutp, Kd), loaded once
        coutp = w.shape[0]
        bias = jnp.broadcast_to(b_ref[...], (coutp, R_ROWS * LANES))
        nblocks = (Ho + R - 1) // R

        def block_body(i, carry):
            # clamp so the last (possibly partial) block overlaps the previous
            # one -> all loads/stores stay in bounds, rewrites are idempotent.
            h0 = jnp.minimum(i * R, Ho - R)
            rows = [get_row(h0 + j) for j in range(R + K - 1)]   # (Cp,128) each
            # in-VMEM im2col for R output rows: (Kd, R*128) patch block,
            # sublane-aligned (Cp multiple of 8), lane segments 128-aligned.
            for r in range(R):
                for kh in range(K):
                    row = rows[r + kh]
                    base = (kh * K) * Cp
                    for kw in range(K):
                        patch_ref[base + kw * Cp:base + (kw + 1) * Cp,
                                  r * LANES:r * LANES + Wo] = row[:, kw:kw + Wo]
            acc = jnp.dot(w, patch_ref[0:Kd, :],
                          preferred_element_type=jnp.float32)   # (coutp, R*128)
            acc = acc + bias
            if act:
                acc = jnp.where(acc >= 0.0, acc, NEG_SLOPE * acc)
            for r in range(R):
                store_row(h0 + r, acc[:, r * LANES:(r + 1) * LANES])
            return carry

        lax.fori_loop(0, nblocks, block_body, 0)

    store1 = make_spread_store(up2_ref, cfg["s2"], cfg["pc2"], cfg["Wo1"])
    store2 = make_spread_store(up3_ref, cfg["s3"], cfg["pc3"], cfg["Wo2"])

    run_layer(lambda h: up1_ref[0, h, :, :], w1_ref, b1_ref, store1,
              K=cfg["K1"], Cp=cfg["cp1"], Ho=cfg["Ho1"], Wo=cfg["Wo1"], act=True)
    run_layer(lambda h: up2_ref[h, :, :], w2_ref, b2_ref, store2,
              K=cfg["K2"], Cp=cfg["cp2"], Ho=cfg["Ho2"], Wo=cfg["Wo2"], act=True)
    run_layer(lambda h: up3_ref[h, :, :], w3_ref, b3_ref, store_final,
              K=cfg["K3"], Cp=cfg["cp3"], Ho=cfg["Ho3"], Wo=cfg["Wo3"], act=False)


# ---------------------------------------------------------------------------
# Weight / bias prep: PyTorch ConvTranspose2d weight (Cin,Cout,K,K) ->
# flipped, channel-padded (Coutp, K*K*Cinp) GEMM matrix; padded rows/cols zero.
# ---------------------------------------------------------------------------
def _prep_weight(weight, cin_p, cout_p):
    Cin, Cout, K, _ = weight.shape
    wf = jnp.transpose(weight, (2, 3, 0, 1))[::-1, ::-1, :, :]   # (K,K,Cin,Cout)
    wf = jnp.pad(wf, ((0, 0), (0, 0), (0, cin_p - Cin), (0, cout_p - Cout)))
    return wf.reshape(K * K * cin_p, cout_p).T                   # (Coutp, Kd)


def _prep_bias(bias, cout_p):
    return jnp.pad(bias, (0, cout_p - bias.shape[0])).reshape(cout_p, 1)


@jax.jit
def hyper_decoder(x_nchw, params):
    """Forward pass matching PyTorch HyperDecoder.forward (NCHW in / NCHW out)."""
    (w1, b1), (w2, b2), (w3, b3) = params
    N, Cin1, H, W = x_nchw.shape
    Cout1, Cout2, Cout3 = w1.shape[1], w2.shape[1], w3.shape[1]
    K1, K2, K3 = w1.shape[2], w2.shape[2], w3.shape[2]
    s1, s2, s3 = 2, 2, 1                       # module strides
    p1, p2, p3 = 0, 1, 0                       # module paddings
    pc1, pc2, pc3 = K1 - 1 - p1, K2 - 1 - p2, K3 - 1 - p3   # correlation pads

    def osz(i, k, s, p):                       # ConvTranspose2d output size
        return (i - 1) * s - 2 * p + k

    Ho1, Wo1 = osz(H, K1, s1, p1), osz(W, K1, s1, p1)
    Ho2, Wo2 = osz(Ho1, K2, s2, p2), osz(Wo1, K2, s2, p2)
    Ho3, Wo3 = osz(Ho2, K3, s3, p3), osz(Wo2, K3, s3, p3)
    Hp1, Wp1 = Ho1 + K1 - 1, Wo1 + K1 - 1
    Hp2, Hp3 = Ho2 + K2 - 1, Ho3 + K3 - 1
    assert max(Wp1, Wo2 + K2 - 1, Wo3 + K3 - 1) <= LANES, "W exceeds one lane tile"

    cp1 = _round_up(Cin1, 8)
    coutp1 = _round_up(Cout1, 8); cp2 = coutp1
    coutp2 = _round_up(Cout2, 8); cp3 = coutp2
    coutp3 = _round_up(Cout3, 8)

    w1m, b1m = _prep_weight(w1, cp1, coutp1), _prep_bias(b1, coutp1)
    w2m, b2m = _prep_weight(w2, cp2, coutp2), _prep_bias(b2, coutp2)
    w3m, b3m = _prep_weight(w3, cp3, coutp3), _prep_bias(b3, coutp3)
    Kd1, Kd2, Kd3 = K1 * K1 * cp1, K2 * K2 * cp2, K3 * K3 * cp3
    kd_max = max(Kd1, Kd2, Kd3)

    # NCHW -> NHCW (W on lanes); dilate + pad the layer-1 input once in XLA
    # (tiny), pad channels to a sublane multiple and W to a full 128-lane tile.
    x = jnp.transpose(x_nchw, (0, 2, 1, 3)).astype(jnp.float32)
    zero = jnp.array(0.0, jnp.float32)
    up1 = lax.pad(x, zero,
                  ((0, 0, 0),
                   (pc1, pc1, s1 - 1),
                   (0, cp1 - Cin1, 0),
                   (pc1, pc1 + (LANES - Wp1), s1 - 1)))   # (N, Hp1, cp1, 128)

    cfg = dict(K1=K1, K2=K2, K3=K3, cp1=cp1, cp2=cp2, cp3=cp3,
               Ho1=Ho1, Ho2=Ho2, Ho3=Ho3, Wo1=Wo1, Wo2=Wo2, Wo3=Wo3,
               s2=s2, s3=s3, pc2=pc2, pc3=pc3)
    kernel = functools.partial(_fused_kernel, cfg=cfg)

    out = pl.pallas_call(
        kernel,
        out_shape=jax.ShapeDtypeStruct((N, Ho3, coutp3, LANES), jnp.float32),
        grid_spec=pltpu.PrefetchScalarGridSpec(
            num_scalar_prefetch=0,
            grid=(N,),
            in_specs=[
                pl.BlockSpec((1, Hp1, cp1, LANES), lambda n: (n, 0, 0, 0)),
                pl.BlockSpec((coutp1, Kd1), lambda n: (0, 0)),
                pl.BlockSpec((coutp1, 1), lambda n: (0, 0)),
                pl.BlockSpec((coutp2, Kd2), lambda n: (0, 0)),
                pl.BlockSpec((coutp2, 1), lambda n: (0, 0)),
                pl.BlockSpec((coutp3, Kd3), lambda n: (0, 0)),
                pl.BlockSpec((coutp3, 1), lambda n: (0, 0)),
            ],
            out_specs=pl.BlockSpec((1, Ho3, coutp3, LANES),
                                   lambda n: (n, 0, 0, 0)),
            scratch_shapes=[
                pltpu.VMEM((Hp2, cp2, LANES), jnp.float32),        # up2
                pltpu.VMEM((Hp3, cp3, LANES), jnp.float32),        # up3
                pltpu.VMEM((kd_max, R_ROWS * LANES), jnp.float32), # im2col
            ],
        ),
        compiler_params=pltpu.CompilerParams(
            dimension_semantics=("parallel",)),   # batch over TCs (v7x)
    )(up1, w1m, b1m, w2m, b2m, w3m, b3m)

    out = out[:, :, :Cout3, :Wo3]                 # crop lane / channel padding
    return jnp.transpose(out, (0, 2, 1, 3))       # NHCW -> NCHW


# ---------------------------------------------------------------------------
# Parameter init (deterministic, xavier_normal-style, bias = 0.01)
# ---------------------------------------------------------------------------
def _xavier_normal(key, shape, fan_in, fan_out):
    std = math.sqrt(2.0 / (fan_in + fan_out))
    return std * jax.random.normal(key, shape, dtype=jnp.float32)


def init_params(key, dim_in, dim):
    specs = [
        (dim_in, dim, 5),                  # deconv1: k=5, s=2, p=0
        (dim, dim * 3 // 2, 5),            # deconv2: k=5, s=2, p=1
        (dim * 3 // 2, dim * 2, 3),        # deconv3: k=3, s=1, p=0
    ]
    params = []
    for ci, co, k in specs:
        key, sub = jax.random.split(key)
        # PyTorch fan for ConvTranspose2d weight (Cin, Cout, K, K):
        #   fan_in = Cout*K*K, fan_out = Cin*K*K
        w = _xavier_normal(sub, (ci, co, k, k), co * k * k, ci * k * k)
        b = jnp.full((co,), 0.01, jnp.float32)
        params.append((w, b))
    return params


# ---------------------------------------------------------------------------
# Pure-JAX (XLA conv) reference for validation
# ---------------------------------------------------------------------------
def _ref_deconv(x_nhwc, weight, bias, stride, padding):
    _, _, K, _ = weight.shape
    w_hwio = jnp.transpose(weight, (2, 3, 0, 1))[::-1, ::-1, :, :]
    pad = K - 1 - padding
    y = lax.conv_general_dilated(
        x_nhwc, w_hwio, window_strides=(1, 1),
        padding=[(pad, pad), (pad, pad)],
        lhs_dilation=(stride, stride),
        dimension_numbers=("NHWC", "HWIO", "NHWC"))
    return y + bias


def _ref_forward(x_nchw, params):
    x = jnp.transpose(x_nchw, (0, 2, 3, 1))
    (w1, b1), (w2, b2), (w3, b3) = params
    x = _ref_deconv(x, w1, b1, 2, 0)
    x = jnp.where(x >= 0, x, NEG_SLOPE * x)
    x = _ref_deconv(x, w2, b2, 2, 1)
    x = jnp.where(x >= 0, x, NEG_SLOPE * x)
    x = _ref_deconv(x, w3, b3, 1, 0)
    return jnp.transpose(x, (0, 3, 1, 2))


if __name__ == "__main__":
    key = jax.random.PRNGKey(0)
    kx, kp = jax.random.split(key)

    dim_in, dim = 4, 8
    x = jax.random.normal(kx, (2, dim_in, 16, 16), dtype=jnp.float32)
    params = init_params(kp, dim_in, dim)

    out = jax.block_until_ready(hyper_decoder(x, params))
    # spatial: 16 -> 35 -> 71 -> 73 ; channels: 4 -> 8 -> 12 -> 16
    assert out.shape == (2, dim * 2, 73, 73), out.shape

    ref = jax.block_until_ready(_ref_forward(x, params))
    np.testing.assert_allclose(np.asarray(out), np.asarray(ref),
                               rtol=1e-3, atol=1e-3)
    print("KERNEL_OK")
</pallas_src>

<mosaic_0001>
module attributes {stable_mosaic.version = 11 : i64} {
  func.func @_fused_kernel(%arg0: i32, %arg1: memref<1x39x8x128xf32, #tpu.memory_space<vmem>>, %arg2: memref<8x200xf32, #tpu.memory_space<vmem>>, %arg3: memref<8x1xf32, #tpu.memory_space<vmem>>, %arg4: memref<16x200xf32, #tpu.memory_space<vmem>>, %arg5: memref<16x1xf32, #tpu.memory_space<vmem>>, %arg6: memref<16x144xf32, #tpu.memory_space<vmem>>, %arg7: memref<16x1xf32, #tpu.memory_space<vmem>>, %arg8: memref<1x73x16x128xf32, #tpu.memory_space<vmem>>, %arg9: memref<75x8x128xf32, #tpu.memory_space<vmem>>, %arg10: memref<75x16x128xf32, #tpu.memory_space<vmem>>, %arg11: memref<200x512xf32, #tpu.memory_space<vmem>>) attributes {dimension_semantics = [#tpu.dimension_semantics<parallel>], iteration_bounds = array<i64: 2>, scalar_prefetch = 0 : i64, scratch_operands = 3 : i64, tpu.core_type = #tpu.core_type<tc>, window_params = [{transform_indices = @transform_0, window_bounds = array<i64: 1, 39, 8, 128>}, {pipeline_mode = #tpu.pipeline_mode<synchronous>, transform_indices = @transform_1, window_bounds = array<i64: 8, 200>}, {pipeline_mode = #tpu.pipeline_mode<synchronous>, transform_indices = @transform_2, window_bounds = array<i64: 8, 1>}, {pipeline_mode = #tpu.pipeline_mode<synchronous>, transform_indices = @transform_3, window_bounds = array<i64: 16, 200>}, {pipeline_mode = #tpu.pipeline_mode<synchronous>, transform_indices = @transform_4, window_bounds = array<i64: 16, 1>}, {pipeline_mode = #tpu.pipeline_mode<synchronous>, transform_indices = @transform_5, window_bounds = array<i64: 16, 144>}, {pipeline_mode = #tpu.pipeline_mode<synchronous>, transform_indices = @transform_6, window_bounds = array<i64: 16, 1>}, {transform_indices = @transform_7, window_bounds = array<i64: 1, 73, 16, 128>}]} {
    %cst = arith.constant 0.000000e+00 : f32
    %0 = vector.broadcast %cst : f32 to vector<75x8x128xf32>
    %c0 = arith.constant 0 : index
    %c0_0 = arith.constant 0 : index
    %c0_1 = arith.constant 0 : index
    %1 = vector.load %arg9[%c0, %c0_0, %c0_1] : memref<75x8x128xf32, #tpu.memory_space<vmem>>, vector<75x8x128xf32>
    tpu.vector_store %arg9[%c0, %c0_0, %c0_1], %0 {strides = array<i32>} : memref<75x8x128xf32, #tpu.memory_space<vmem>>, vector<75x8x128xf32>,
    %cst_2 = arith.constant 0.000000e+00 : f32
    %2 = vector.broadcast %cst_2 : f32 to vector<75x16x128xf32>
    %c0_3 = arith.constant 0 : index
    %c0_4 = arith.constant 0 : index
    %c0_5 = arith.constant 0 : index
    %3 = vector.load %arg10[%c0_3, %c0_4, %c0_5] : memref<75x16x128xf32, #tpu.memory_space<vmem>>, vector<75x16x128xf32>
    tpu.vector_store %arg10[%c0_3, %c0_4, %c0_5], %2 {strides = array<i32>} : memref<75x16x128xf32, #tpu.memory_space<vmem>>, vector<75x16x128xf32>,
    %cst_6 = arith.constant 0.000000e+00 : f32
    %4 = vector.broadcast %cst_6 : f32 to vector<200x512xf32>
    %c0_7 = arith.constant 0 : index
    %c0_8 = arith.constant 0 : index
    %5 = vector.load %arg11[%c0_7, %c0_8] : memref<200x512xf32, #tpu.memory_space<vmem>>, vector<200x512xf32>
    tpu.vector_store %arg11[%c0_7, %c0_8], %4 {strides = array<i32>} : memref<200x512xf32, #tpu.memory_space<vmem>>, vector<200x512xf32>,
    %6 = tpu.iota {dimensions = array<i32: 0>} : vector<128x128xi32>
    %7 = tpu.iota {dimensions = array<i32: 1>} : vector<128x128xi32>
    %c2_i32 = arith.constant 2 : i32
    %8 = vector.broadcast %c2_i32 : i32 to vector<128x128xi32>
    %9 = arith.muli %8, %6 : vector<128x128xi32>
    %c3_i32 = arith.constant 3 : i32
    %10 = vector.broadcast %c3_i32 : i32 to vector<128x128xi32>
    %11 = arith.addi %9, %10 : vector<128x128xi32>
    %12 = arith.cmpi eq, %7, %11 : vector<128x128xi32>
    %c35_i32 = arith.constant 35 : i32
    %13 = vector.broadcast %c35_i32 : i32 to vector<128x128xi32>
    %14 = arith.cmpi slt, %6, %13 : vector<128x128xi32>
    %15 = arith.andi %12, %14 : vector<128x128xi1>
    %cst_9 = arith.constant 1.000000e+00 : f32
    %cst_10 = arith.constant 0.000000e+00 : f32
    %16 = vector.broadcast %cst_9 : f32 to vector<128x128xf32>
    %17 = vector.broadcast %cst_10 : f32 to vector<128x128xf32>
    %18 = arith.select %15, %16, %17 : vector<128x128xi1>, vector<128x128xf32>
    %19 = tpu.iota {dimensions = array<i32: 0>} : vector<128x128xi32>
    %20 = tpu.iota {dimensions = array<i32: 1>} : vector<128x128xi32>
    %c1_i32 = arith.constant 1 : i32
    %21 = vector.broadcast %c1_i32 : i32 to vector<128x128xi32>
    %22 = arith.muli %21, %19 : vector<128x128xi32>
    %c2_i32_11 = arith.constant 2 : i32
    %23 = vector.broadcast %c2_i32_11 : i32 to vector<128x128xi32>
    %24 = arith.addi %22, %23 : vector<128x128xi32>
    %25 = arith.cmpi eq, %20, %24 : vector<128x128xi32>
    %c71_i32 = arith.constant 71 : i32
    %26 = vector.broadcast %c71_i32 : i32 to vector<128x128xi32>
    %27 = arith.cmpi slt, %19, %26 : vector<128x128xi32>
    %28 = arith.andi %25, %27 : vector<128x128xi1>
    %cst_12 = arith.constant 1.000000e+00 : f32
    %cst_13 = arith.constant 0.000000e+00 : f32
    %29 = vector.broadcast %cst_12 : f32 to vector<128x128xf32>
    %30 = vector.broadcast %cst_13 : f32 to vector<128x128xf32>
    %31 = arith.select %28, %29, %30 : vector<128x128xi1>, vector<128x128xf32>
    %c0_14 = arith.constant 0 : index
    %c0_15 = arith.constant 0 : index
    %32 = vector.load %arg2[%c0_14, %c0_15] : memref<8x200xf32, #tpu.memory_space<vmem>>, vector<8x200xf32>
    %c0_16 = arith.constant 0 : index
    %c0_17 = arith.constant 0 : index
    %33 = vector.load %arg3[%c0_16, %c0_17] : memref<8x1xf32, #tpu.memory_space<vmem>>, vector<8x1xf32>
    %34 = vector.shape_cast %33 : vector<8x1xf32> to vector<8x1xf32>
    %35 = vector.broadcast %34 : vector<8x1xf32> to vector<8x512xf32>
    %c0_i32 = arith.constant 0 : i32
    %c9_i32 = arith.constant 9 : i32
    %36 = arith.addi %c0_i32, %c9_i32 : i32
    %c1_i32_18 = arith.constant 1 : i32
    scf.for %arg12 = %c0_i32 to %36 step %c1_i32_18  : i32 {
      %c4_i32 = arith.constant 4 : i32
      %47 = arith.muli %arg12, %c4_i32 : i32
      %c31_i32 = arith.constant 31 : i32
      %48 = arith.minsi %47, %c31_i32 : i32
      %c0_i32_34 = arith.constant 0 : i32
      %49 = arith.addi %48, %c0_i32_34 : i32
      %c0_35 = arith.constant 0 : index
      %50 = arith.index_cast %49 : i32 to index
      %c0_36 = arith.constant 0 : index
      %c0_37 = arith.constant 0 : index
      %51 = vector.load %arg1[%c0_35, %50, %c0_36, %c0_37] : memref<1x39x8x128xf32, #tpu.memory_space<vmem>>, vector<1x1x8x128xf32>
      %52 = vector.shape_cast %51 : vector<1x1x8x128xf32> to vector<8x128xf32>
      %c1_i32_38 = arith.constant 1 : i32
      %53 = arith.addi %48, %c1_i32_38 : i32
      %c0_39 = arith.constant 0 : index
      %54 = arith.index_cast %53 : i32 to index
      %c0_40 = arith.constant 0 : index
      %c0_41 = arith.constant 0 : index
      %55 = vector.load %arg1[%c0_39, %54, %c0_40, %c0_41] : memref<1x39x8x128xf32, #tpu.memory_space<vmem>>, vector<1x1x8x128xf32>
      %56 = vector.shape_cast %55 : vector<1x1x8x128xf32> to vector<8x128xf32>
      %c2_i32_42 = arith.constant 2 : i32
      %57 = arith.addi %48, %c2_i32_42 : i32
      %c0_43 = arith.constant 0 : index
      %58 = arith.index_cast %57 : i32 to index
      %c0_44 = arith.constant 0 : index
      %c0_45 = arith.constant 0 : index
      %59 = vector.load %arg1[%c0_43, %58, %c0_44, %c0_45] : memref<1x39x8x128xf32, #tpu.memory_space<vmem>>, vector<1x1x8x128xf32>
      %60 = vector.shape_cast %59 : vector<1x1x8x128xf32> to vector<8x128xf32>
      %c3_i32_46 = arith.constant 3 : i32
      %61 = arith.addi %48, %c3_i32_46 : i32
      %c0_47 = arith.constant 0 : index
      %62 = arith.index_cast %61 : i32 to index
      %c0_48 = arith.constant 0 : index
      %c0_49 = arith.constant 0 : index
      %63 = vector.load %arg1[%c0_47, %62, %c0_48, %c0_49] : memref<1x39x8x128xf32, #tpu.memory_space<vmem>>, vector<1x1x8x128xf32>
      %64 = vector.shape_cast %63 : vector<1x1x8x128xf32> to vector<8x128xf32>
      %c4_i32_50 = arith.constant 4 : i32
      %65 = arith.addi %48, %c4_i32_50 : i32
      %c0_51 = arith.constant 0 : index
      %66 = arith.index_cast %65 : i32 to index
      %c0_52 = arith.constant 0 : index
      %c0_53 = arith.constant 0 : index
      %67 = vector.load %arg1[%c0_51, %66, %c0_52, %c0_53] : memref<1x39x8x128xf32, #tpu.memory_space<vmem>>, vector<1x1x8x128xf32>
      %68 = vector.shape_cast %67 : vector<1x1x8x128xf32> to vector<8x128xf32>
      %c5_i32 = arith.constant 5 : i32
      %69 = arith.addi %48, %c5_i32 : i32
      %c0_54 = arith.constant 0 : index
      %70 = arith.index_cast %69 : i32 to index
      %c0_55 = arith.constant 0 : index
      %c0_56 = arith.constant 0 : index
      %71 = vector.load %arg1[%c0_54, %70, %c0_55, %c0_56] : memref<1x39x8x128xf32, #tpu.memory_space<vmem>>, vector<1x1x8x128xf32>
      %72 = vector.shape_cast %71 : vector<1x1x8x128xf32> to vector<8x128xf32>
      %c6_i32 = arith.constant 6 : i32
      %73 = arith.addi %48, %c6_i32 : i32
      %c0_57 = arith.constant 0 : index
      %74 = arith.index_cast %73 : i32 to index
      %c0_58 = arith.constant 0 : index
      %c0_59 = arith.constant 0 : index
      %75 = vector.load %arg1[%c0_57, %74, %c0_58, %c0_59] : memref<1x39x8x128xf32, #tpu.memory_space<vmem>>, vector<1x1x8x128xf32>
      %76 = vector.shape_cast %75 : vector<1x1x8x128xf32> to vector<8x128xf32>
      %c7_i32 = arith.constant 7 : i32
      %77 = arith.addi %48, %c7_i32 : i32
      %c0_60 = arith.constant 0 : index
      %78 = arith.index_cast %77 : i32 to index
      %c0_61 = arith.constant 0 : index
      %c0_62 = arith.constant 0 : index
      %79 = vector.load %arg1[%c0_60, %78, %c0_61, %c0_62] : memref<1x39x8x128xf32, #tpu.memory_space<vmem>>, vector<1x1x8x128xf32>
      %80 = vector.shape_cast %79 : vector<1x1x8x128xf32> to vector<8x128xf32>
      %81 = vector.extract_strided_slice %52 {offsets = [0, 0], sizes = [8, 35], strides = [1, 1]} : vector<8x128xf32> to vector<8x35xf32>
      %c0_63 = arith.constant 0 : index
      %c0_64 = arith.constant 0 : index
      %82 = vector.load %arg11[%c0_63, %c0_64] : memref<200x512xf32, #tpu.memory_space<vmem>>, vector<8x35xf32>
      tpu.vector_store %arg11[%c0_63, %c0_64], %81 {strides = array<i32>} : memref<200x512xf32, #tpu.memory_space<vmem>>, vector<8x35xf32>,
      %83 = vector.extract_strided_slice %52 {offsets = [0, 1], sizes = [8, 35], strides = [1, 1]} : vector<8x128xf32> to vector<8x35xf32>
      %c8 = arith.constant 8 : index
      %c0_65 = arith.constant 0 : index
      %84 = vector.load %arg11[%c8, %c0_65] : memref<200x512xf32, #tpu.memory_space<vmem>>, vector<8x35xf32>
      tpu.vector_store %arg11[%c8, %c0_65], %83 {strides = array<i32>} : memref<200x512xf32, #tpu.memory_space<vmem>>, vector<8x35xf32>,
      %85 = vector.extract_strided_slice %52 {offsets = [0, 2], sizes = [8, 35], strides = [1, 1]} : vector<8x128xf32> to vector<8x35xf32>
      %c16 = arith.constant 16 : index
      %c0_66 = arith.constant 0 : index
      %86 = vector.load %arg11[%c16, %c0_66] : memref<200x512xf32, #tpu.memory_space<vmem>>, vector<8x35xf32>
      tpu.vector_store %arg11[%c16, %c0_66], %85 {strides = array<i32>} : memref<200x512xf32, #tpu.memory_space<vmem>>, vector<8x35xf32>,
      %87 = vector.extract_strided_slice %52 {offsets = [0, 3], sizes = [8, 35], strides = [1, 1]} : vector<8x128xf32> to vector<8x35xf32>
      %c24 = arith.constant 24 : index
      %c0_67 = arith.constant 0 : index
      %88 = vector.load %arg11[%c24, %c0_67] : memref<200x512xf32, #tpu.memory_space<vmem>>, vector<8x35xf32>
      tpu.vector_store %arg11[%c24, %c0_67], %87 {strides = array<i32>} : memref<200x512xf32, #tpu.memory_space<vmem>>, vector<8x35xf32>,
      %89 = vector.extract_strided_slice %52 {offsets = [0, 4], sizes = [8, 35], strides = [1, 1]} : vector<8x128xf32> to vector<8x35xf32>
      %c32 = arith.constant 32 : index
      %c0_68 = arith.constant 0 : index
      %90 = vector.load %arg11[%c32, %c0_68] : memref<200x512xf32, #tpu.memory_space<vmem>>, vector<8x35xf32>
      tpu.vector_store %arg11[%c32, %c0_68], %89 {strides = array<i32>} : memref<200x512xf32, #tpu.memory_space<vmem>>, vector<8x35xf32>,
      %91 = vector.extract_strided_slice %56 {offsets = [0, 0], sizes = [8, 35], strides = [1, 1]} : vector<8x128xf32> to vector<8x35xf32>
      %c40 = arith.constant 40 : index
      %c0_69 = arith.constant 0 : index
      %92 = vector.load %arg11[%c40, %c0_69] : memref<200x512xf32, #tpu.memory_space<vmem>>, vector<8x35xf32>
      tpu.vector_store %arg11[%c40, %c0_69], %91 {strides = array<i32>} : memref<200x512xf32, #tpu.memory_space<vmem>>, vector<8x35xf32>,
      %93 = vector.extract_strided_slice %56 {offsets = [0, 1], sizes = [8, 35], strides = [1, 1]} : vector<8x128xf32> to vector<8x35xf32>
      %c48 = arith.constant 48 : index
      %c0_70 = arith.constant 0 : index
      %94 = vector.load %arg11[%c48, %c0_70] : memref<200x512xf32, #tpu.memory_space<vmem>>, vector<8x35xf32>
      tpu.vector_store %arg11[%c48, %c0_70], %93 {strides = array<i32>} : memref<200x512xf32, #tpu.memory_space<vmem>>, vector<8x35xf32>,
      %95 = vector.extract_strided_slice %56 {offsets = [0, 2], sizes = [8, 35], strides = [1, 1]} : vector<8x128xf32> to vector<8x35xf32>
      %c56 = arith.constant 56 : index
      %c0_71 = arith.constant 0 : index
      %96 = vector.load %arg11[%c56, %c0_71] : memref<200x512xf32, #tpu.memory_space<vmem>>, vector<8x35xf32>
      tpu.vector_store %arg11[%c56, %c0_71], %95 {strides = array<i32>} : memref<200x512xf32, #tpu.memory_space<vmem>>, vector<8x35xf32>,
      %97 = vector.extract_strided_slice %56 {offsets = [0, 3], sizes = [8, 35], strides = [1, 1]} : vector<8x128xf32> to vector<8x35xf32>
      %c64 = arith.constant 64 : index
      %c0_72 = arith.constant 0 : index
      %98 = vector.load %arg11[%c64, %c0_72] : memref<200x512xf32, #tpu.memory_space<vmem>>, vector<8x35xf32>
      tpu.vector_store %arg11[%c64, %c0_72], %97 {strides = array<i32>} : memref<200x512xf32, #tpu.memory_space<vmem>>, vector<8x35xf32>,
      %99 = vector.extract_strided_slice %56 {offsets = [0, 4], sizes = [8, 35], strides = [1, 1]} : vector<8x128xf32> to vector<8x35xf32>
      %c72 = arith.constant 72 : index
      %c0_73 = arith.constant 0 : index
      %100 = vector.load %arg11[%c72, %c0_73] : memref<200x512xf32, #tpu.memory_space<vmem>>, vector<8x35xf32>
      tpu.vector_store %arg11[%c72, %c0_73], %99 {strides = array<i32>} : memref<200x512xf32, #tpu.memory_space<vmem>>, vector<8x35xf32>,
      %101 = vector.extract_strided_slice %60 {offsets = [0, 0], sizes = [8, 35], strides = [1, 1]} : vector<8x128xf32> to vector<8x35xf32>
      %c80 = arith.constant 80 : index
      %c0_74 = arith.constant 0 : index
      %102 = vector.load %arg11[%c80, %c0_74] : memref<200x512xf32, #tpu.memory_space<vmem>>, vector<8x35xf32>
      tpu.vector_store %arg11[%c80, %c0_74], %101 {strides = array<i32>} : memref<200x512xf32, #tpu.memory_space<vmem>>, vector<8x35xf32>,
      %103 = vector.extract_strided_slice %60 {offsets = [0, 1], sizes = [8, 35], strides = [1, 1]} : vector<8x128xf32> to vector<8x35xf32>
      %c88 = arith.constant 88 : index
      %c0_75 = arith.constant 0 : index
      %104 = vector.load %arg11[%c88, %c0_75] : memref<200x512xf32, #tpu.memory_space<vmem>>, vector<8x35xf32>
      tpu.vector_store %arg11[%c88, %c0_75], %103 {strides = array<i32>} : memref<200x512xf32, #tpu.memory_space<vmem>>, vector<8x35xf32>,
      %105 = vector.extract_strided_slice %60 {offsets = [0, 2], sizes = [8, 35], strides = [1, 1]} : vector<8x128xf32> to vector<8x35xf32>
      %c96 = arith.constant 96 : index
      %c0_76 = arith.constant 0 : index
      %106 = vector.load %arg11[%c96, %c0_76] : memref<200x512xf32, #tpu.memory_space<vmem>>, vector<8x35xf32>
      tpu.vector_store %arg11[%c96, %c0_76], %105 {strides = array<i32>} : memref<200x512xf32, #tpu.memory_space<vmem>>, vector<8x35xf32>,
      %107 = vector.extract_strided_slice %60 {offsets = [0, 3], sizes = [8, 35], strides = [1, 1]} : vector<8x128xf32> to vector<8x35xf32>
      %c104 = arith.constant 104 : index
      %c0_77 = arith.constant 0 : index
      %108 = vector.load %arg11[%c104, %c0_77] : memref<200x512xf32, #tpu.memory_space<vmem>>, vector<8x35xf32>
      tpu.vector_store %arg11[%c104, %c0_77], %107 {strides = array<i32>} : memref<200x512xf32, #tpu.memory_space<vmem>>, vector<8x35xf32>,
      %109 = vector.extract_strided_slice %60 {offsets = [0, 4], sizes = [8, 35], strides = [1, 1]} : vector<8x128xf32> to vector<8x35xf32>
      %c112 = arith.constant 112 : index
      %c0_78 = arith.constant 0 : index
      %110 = vector.load %arg11[%c112, %c0_78] : memref<200x512xf32, #tpu.memory_space<vmem>>, vector<8x35xf32>
      tpu.vector_store %arg11[%c112, %c0_78], %109 {strides = array<i32>} : memref<200x512xf32, #tpu.memory_space<vmem>>, vector<8x35xf32>,
      %111 = vector.extract_strided_slice %64 {offsets = [0, 0], sizes = [8, 35], strides = [1, 1]} : vector<8x128xf32> to vector<8x35xf32>
      %c120 = arith.constant 120 : index
      %c0_79 = arith.constant 0 : index
      %112 = vector.load %arg11[%c120, %c0_79] : memref<200x512xf32, #tpu.memory_space<vmem>>, vector<8x35xf32>
      tpu.vector_store %arg11[%c120, %c0_79], %111 {strides = array<i32>} : memref<200x512xf32, #tpu.memory_space<vmem>>, vector<8x35xf32>,
      %113 = vector.extract_strided_slice %64 {offsets = [0, 1], sizes = [8, 35], strides = [1, 1]} : vector<8x128xf32> to vector<8x35xf32>
      %c128 = arith.constant 128 : index
      %c0_80 = arith.constant 0 : index
      %114 = vector.load %arg11[%c128, %c0_80] : memref<200x512xf32, #tpu.memory_space<vmem>>, vector<8x35xf32>
      tpu.vector_store %arg11[%c128, %c0_80], %113 {strides = array<i32>} : memref<200x512xf32, #tpu.memory_space<vmem>>, vector<8x35xf32>,
      %115 = vector.extract_strided_slice %64 {offsets = [0, 2], sizes = [8, 35], strides = [1, 1]} : vector<8x128xf32> to vector<8x35xf32>
      %c136 = arith.constant 136 : index
      %c0_81 = arith.constant 0 : index
      %116 = vector.load %arg11[%c136, %c0_81] : memref<200x512xf32, #tpu.memory_space<vmem>>, vector<8x35xf32>
      tpu.vector_store %arg11[%c136, %c0_81], %115 {strides = array<i32>} : memref<200x512xf32, #tpu.memory_space<vmem>>, vector<8x35xf32>,
      %117 = vector.extract_strided_slice %64 {offsets = [0, 3], sizes = [8, 35], strides = [1, 1]} : vector<8x128xf32> to vector<8x35xf32>
      %c144 = arith.constant 144 : index
      %c0_82 = arith.constant 0 : index
      %118 = vector.load %arg11[%c144, %c0_82] : memref<200x512xf32, #tpu.memory_space<vmem>>, vector<8x35xf32>
      tpu.vector_store %arg11[%c144, %c0_82], %117 {strides = array<i32>} : memref<200x512xf32, #tpu.memory_space<vmem>>, vector<8x35xf32>,
      %119 = vector.extract_strided_slice %64 {offsets = [0, 4], sizes = [8, 35], strides = [1, 1]} : vector<8x128xf32> to vector<8x35xf32>
      %c152 = arith.constant 152 : index
      %c0_83 = arith.constant 0 : index
      %120 = vector.load %arg11[%c152, %c0_83] : memref<200x512xf32, #tpu.memory_space<vmem>>, vector<8x35xf32>
      tpu.vector_store %arg11[%c152, %c0_83], %119 {strides = array<i32>} : memref<200x512xf32, #tpu.memory_space<vmem>>, vector<8x35xf32>,
      %121 = vector.extract_strided_slice %68 {offsets = [0, 0], sizes = [8, 35], strides = [1, 1]} : vector<8x128xf32> to vector<8x35xf32>
      %c160 = arith.constant 160 : index
      %c0_84 = arith.constant 0 : index
      %122 = vector.load %arg11[%c160, %c0_84] : memref<200x512xf32, #tpu.memory_space<vmem>>, vector<8x35xf32>
      tpu.vector_store %arg11[%c160, %c0_84], %121 {strides = array<i32>} : memref<200x512xf32, #tpu.memory_space<vmem>>, vector<8x35xf32>,
      %123 = vector.extract_strided_slice %68 {offsets = [0, 1], sizes = [8, 35], strides = [1, 1]} : vector<8x128xf32> to vector<8x35xf32>
      %c168 = arith.constant 168 : index
      %c0_85 = arith.constant 0 : index
      %124 = vector.load %arg11[%c168, %c0_85] : memref<200x512xf32, #tpu.memory_space<vmem>>, vector<8x35xf32>
      tpu.vector_store %arg11[%c168, %c0_85], %123 {strides = array<i32>} : memref<200x512xf32, #tpu.memory_space<vmem>>, vector<8x35xf32>,
      %125 = vector.extract_strided_slice %68 {offsets = [0, 2], sizes = [8, 35], strides = [1, 1]} : vector<8x128xf32> to vector<8x35xf32>
      %c176 = arith.constant 176 : index
      %c0_86 = arith.constant 0 : index
      %126 = vector.load %arg11[%c176, %c0_86] : memref<200x512xf32, #tpu.memory_space<vmem>>, vector<8x35xf32>
      tpu.vector_store %arg11[%c176, %c0_86], %125 {strides = array<i32>} : memref<200x512xf32, #tpu.memory_space<vmem>>, vector<8x35xf32>,
      %127 = vector.extract_strided_slice %68 {offsets = [0, 3], sizes = [8, 35], strides = [1, 1]} : vector<8x128xf32> to vector<8x35xf32>
      %c184 = arith.constant 184 : index
      %c0_87 = arith.constant 0 : index
      %128 = vector.load %arg11[%c184, %c0_87] : memref<200x512xf32, #tpu.memory_space<vmem>>, vector<8x35xf32>
      tpu.vector_store %arg11[%c184, %c0_87], %127 {strides = array<i32>} : memref<200x512xf32, #tpu.memory_space<vmem>>, vector<8x35xf32>,
      %129 = vector.extract_strided_slice %68 {offsets = [0, 4], sizes = [8, 35], strides = [1, 1]} : vector<8x128xf32> to vector<8x35xf32>
      %c192 = arith.constant 192 : index
      %c0_88 = arith.constant 0 : index
      %130 = vector.load %arg11[%c192, %c0_88] : memref<200x512xf32, #tpu.memory_space<vmem>>, vector<8x35xf32>
      tpu.vector_store %arg11[%c192, %c0_88], %129 {strides = array<i32>} : memref<200x512xf32, #tpu.memory_space<vmem>>, vector<8x35xf32>,
      %131 = vector.extract_strided_slice %56 {offsets = [0, 0], sizes = [8, 35], strides = [1, 1]} : vector<8x128xf32> to vector<8x35xf32>
      %c0_89 = arith.constant 0 : index
      %c128_90 = arith.constant 128 : index
      %132 = vector.load %arg11[%c0_89, %c128_90] : memref<200x512xf32, #tpu.memory_space<vmem>>, vector<8x35xf32>
      tpu.vector_store %arg11[%c0_89, %c128_90], %131 {strides = array<i32>} : memref<200x512xf32, #tpu.memory_space<vmem>>, vector<8x35xf32>,
      %133 = vector.extract_strided_slice %56 {offsets = [0, 1], sizes = [8, 35], strides = [1, 1]} : vector<8x128xf32> to vector<8x35xf32>
      %c8_91 = arith.constant 8 : index
      %c128_92 = arith.constant 128 : index
      %134 = vector.load %arg11[%c8_91, %c128_92] : memref<200x512xf32, #tpu.memory_space<vmem>>, vector<8x35xf32>
      tpu.vector_store %arg11[%c8_91, %c128_92], %133 {strides = array<i32>} : memref<200x512xf32, #tpu.memory_space<vmem>>, vector<8x35xf32>,
      %135 = vector.extract_strided_slice %56 {offsets = [0, 2], sizes = [8, 35], strides = [1, 1]} : vector<8x128xf32> to vector<8x35xf32>
      %c16_93 = arith.constant 16 : index
      %c128_94 = arith.constant 128 : index
      %136 = vector.load %arg11[%c16_93, %c128_94] : memref<200x512xf32, #tpu.memory_space<vmem>>, vector<8x35xf32>
      tpu.vector_store %arg11[%c16_93, %c128_94], %135 {strides = array<i32>} : memref<200x512xf32, #tpu.memory_space<vmem>>, vector<8x35xf32>,
      %137 = vector.extract_strided_slice %56 {offsets = [0, 3], sizes = [8, 35], strides = [1, 1]} : vector<8x128xf32> to vector<8x35xf32>
      %c24_95 = arith.constant 24 : index
      %c128_96 = arith.constant 128 : index
      %138 = vector.load %arg11[%c24_95, %c128_96] : memref<200x512xf32, #tpu.memory_space<vmem>>, vector<8x35xf32>
      tpu.vector_store %arg11[%c24_95, %c128_96], %137 {strides = array<i32>} : memref<200x512xf32, #tpu.memory_space<vmem>>, vector<8x35xf32>,
      %139 = vector.extract_strided_slice %56 {offsets = [0, 4], sizes = [8, 35], strides = [1, 1]} : vector<8x128xf32> to vector<8x35xf32>
      %c32_97 = arith.constant 32 : index
      %c128_98 = arith.constant 128 : index
      %140 = vector.load %arg11[%c32_97, %c128_98] : memref<200x512xf32, #tpu.memory_space<vmem>>, vector<8x35xf32>
      tpu.vector_store %arg11[%c32_97, %c128_98], %139 {strides = array<i32>} : memref<200x512xf32, #tpu.memory_space<vmem>>, vector<8x35xf32>,
      %141 = vector.extract_strided_slice %60 {offsets = [0, 0], sizes = [8, 35], strides = [1, 1]} : vector<8x128xf32> to vector<8x35xf32>
      %c40_99 = arith.constant 40 : index
      %c128_100 = arith.constant 128 : index
      %142 = vector.load %arg11[%c40_99, %c128_100] : memref<200x512xf32, #tpu.memory_space<vmem>>, vector<8x35xf32>
      tpu.vector_store %arg11[%c40_99, %c128_100], %141 {strides = array<i32>} : memref<200x512xf32, #tpu.memory_space<vmem>>, vector<8x35xf32>,
      %143 = vector.extract_strided_slice %60 {offsets = [0, 1], sizes = [8, 35], strides = [1, 1]} : vector<8x128xf32> to vector<8x35xf32>
      %c48_101 = arith.constant 48 : index
      %c128_102 = arith.constant 128 : index
      %144 = vector.load %arg11[%c48_101, %c128_102] : memref<200x512xf32, #tpu.memory_space<vmem>>, vector<8x35xf32>
      tpu.vector_store %arg11[%c48_101, %c128_102], %143 {strides = array<i32>} : memref<200x512xf32, #tpu.memory_space<vmem>>, vector<8x35xf32>,
      %145 = vector.extract_strided_slice %60 {offsets = [0, 2], sizes = [8, 35], strides = [1, 1]} : vector<8x128xf32> to vector<8x35xf32>
      %c56_103 = arith.constant 56 : index
      %c128_104 = arith.constant 128 : index
      %146 = vector.load %arg11[%c56_103, %c128_104] : memref<200x512xf32, #tpu.memory_space<vmem>>, vector<8x35xf32>
      tpu.vector_store %arg11[%c56_103, %c128_104], %145 {strides = array<i32>} : memref<200x512xf32, #tpu.memory_space<vmem>>, vector<8x35xf32>,
      %147 = vector.extract_strided_slice %60 {offsets = [0, 3], sizes = [8, 35], strides = [1, 1]} : vector<8x128xf32> to vector<8x35xf32>
      %c64_105 = arith.constant 64 : index
      %c128_106 = arith.constant 128 : index
      %148 = vector.load %arg11[%c64_105, %c128_106] : memref<200x512xf32, #tpu.memory_space<vmem>>, vector<8x35xf32>
      tpu.vector_store %arg11[%c64_105, %c128_106], %147 {strides = array<i32>} : memref<200x512xf32, #tpu.memory_space<vmem>>, vector<8x35xf32>,
      %149 = vector.extract_strided_slice %60 {offsets = [0, 4], sizes = [8, 35], strides = [1, 1]} : vector<8x128xf32> to vector<8x35xf32>
      %c72_107 = arith.constant 72 : index
      %c128_108 = arith.constant 128 : index
      %150 = vector.load %arg11[%c72_107, %c128_108] : memref<200x512xf32, #tpu.memory_space<vmem>>, vector<8x35xf32>
      tpu.vector_store %arg11[%c72_107, %c128_108], %149 {strides = array<i32>} : memref<200x512xf32, #tpu.memory_space<vmem>>, vector<8x35xf32>,
      %151 = vector.extract_strided_slice %64 {offsets = [0, 0], sizes = [8, 35], strides = [1, 1]} : vector<8x128xf32> to vector<8x35xf32>
      %c80_109 = arith.constant 80 : index
      %c128_110 = arith.constant 128 : index
      %152 = vector.load %arg11[%c80_109, %c128_110] : memref<200x512xf32, #tpu.memory_space<vmem>>, vector<8x35xf32>
      tpu.vector_store %arg11[%c80_109, %c128_110], %151 {strides = array<i32>} : memref<200x512xf32, #tpu.memory_space<vmem>>, vector<8x35xf32>,
      %153 = vector.extract_strided_slice %64 {offsets = [0, 1], sizes = [8, 35], strides = [1, 1]} : vector<8x128xf32> to vector<8x35xf32>
      %c88_111 = arith.constant 88 : index
      %c128_112 = arith.constant 128 : index
      %154 = vector.load %arg11[%c88_111, %c128_112] : memref<200x512xf32, #tpu.memory_space<vmem>>, vector<8x35xf32>
      tpu.vector_store %arg11[%c88_111, %c128_112], %153 {strides = array<i32>} : memref<200x512xf32, #tpu.memory_space<vmem>>, vector<8x35xf32>,
      %155 = vector.extract_strided_slice %64 {offsets = [0, 2], sizes = [8, 35], strides = [1, 1]} : vector<8x128xf32> to vector<8x35xf32>
      %c96_113 = arith.constant 96 : index
      %c128_114 = arith.constant 128 : index
      %156 = vector.load %arg11[%c96_113, %c128_114] : memref<200x512xf32, #tpu.memory_space<vmem>>, vector<8x35xf32>
      tpu.vector_store %arg11[%c96_113, %c128_114], %155 {strides = array<i32>} : memref<200x512xf32, #tpu.memory_space<vmem>>, vector<8x35xf32>,
      %157 = vector.extract_strided_slice %64 {offsets = [0, 3], sizes = [8, 35], strides = [1, 1]} : vector<8x128xf32> to vector<8x35xf32>
      %c104_115 = arith.constant 104 : index
      %c128_116 = arith.constant 128 : index
      %158 = vector.load %arg11[%c104_115, %c128_116] : memref<200x512xf32, #tpu.memory_space<vmem>>, vector<8x35xf32>
      tpu.vector_store %arg11[%c104_115, %c128_116], %157 {strides = array<i32>} : memref<200x512xf32, #tpu.memory_space<vmem>>, vector<8x35xf32>,
      %159 = vector.extract_strided_slice %64 {offsets = [0, 4], sizes = [8, 35], strides = [1, 1]} : vector<8x128xf32> to vector<8x35xf32>
      %c112_117 = arith.constant 112 : index
      %c128_118 = arith.constant 128 : index
      %160 = vector.load %arg11[%c112_117, %c128_118] : memref<200x512xf32, #tpu.memory_space<vmem>>, vector<8x35xf32>
      tpu.vector_store %arg11[%c112_117, %c128_118], %159 {strides = array<i32>} : memref<200x512xf32, #tpu.memory_space<vmem>>, vector<8x35xf32>,
      %161 = vector.extract_strided_slice %68 {offsets = [0, 0], sizes = [8, 35], strides = [1, 1]} : vector<8x128xf32> to vector<8x35xf32>
      %c120_119 = arith.constant 120 : index
      %c128_120 = arith.constant 128 : index
      %162 = vector.load %arg11[%c120_119, %c128_120] : memref<200x512xf32, #tpu.memory_space<vmem>>, vector<8x35xf32>
      tpu.vector_store %arg11[%c120_119, %c128_120], %161 {strides = array<i32>} : memref<200x512xf32, #tpu.memory_space<vmem>>, vector<8x35xf32>,
      %163 = vector.extract_strided_slice %68 {offsets = [0, 1], sizes = [8, 35], strides = [1, 1]} : vector<8x128xf32> to vector<8x35xf32>
      %c128_121 = arith.constant 128 : index
      %c128_122 = arith.constant 128 : index
      %164 = vector.load %arg11[%c128_121, %c128_122] : memref<200x512xf32, #tpu.memory_space<vmem>>, vector<8x35xf32>
      tpu.vector_store %arg11[%c128_121, %c128_122], %163 {strides = array<i32>} : memref<200x512xf32, #tpu.memory_space<vmem>>, vector<8x35xf32>,
      %165 = vector.extract_strided_slice %68 {offsets = [0, 2], sizes = [8, 35], strides = [1, 1]} : vector<8x128xf32> to vector<8x35xf32>
      %c136_123 = arith.constant 136 : index
      %c128_124 = arith.constant 128 : index
      %166 = vector.load %arg11[%c136_123, %c128_124] : memref<200x512xf32, #tpu.memory_space<vmem>>, vector<8x35xf32>
      tpu.vector_store %arg11[%c136_123, %c128_124], %165 {strides = array<i32>} : memref<200x512xf32, #tpu.memory_space<vmem>>, vector<8x35xf32>,
      %167 = vector.extract_strided_slice %68 {offsets = [0, 3], sizes = [8, 35], strides = [1, 1]} : vector<8x128xf32> to vector<8x35xf32>
      %c144_125 = arith.constant 144 : index
      %c128_126 = arith.constant 128 : index
      %168 = vector.load %arg11[%c144_125, %c128_126] : memref<200x512xf32, #tpu.memory_space<vmem>>, vector<8x35xf32>
      tpu.vector_store %arg11[%c144_125, %c128_126], %167 {strides = array<i32>} : memref<200x512xf32, #tpu.memory_space<vmem>>, vector<8x35xf32>,
      %169 = vector.extract_strided_slice %68 {offsets = [0, 4], sizes = [8, 35], strides = [1, 1]} : vector<8x128xf32> to vector<8x35xf32>
      %c152_127 = arith.constant 152 : index
      %c128_128 = arith.constant 128 : index
      %170 = vector.load %arg11[%c152_127, %c128_128] : memref<200x512xf32, #tpu.memory_space<vmem>>, vector<8x35xf32>
      tpu.vector_store %arg11[%c152_127, %c128_128], %169 {strides = array<i32>} : memref<200x512xf32, #tpu.memory_space<vmem>>, vector<8x35xf32>,
      %171 = vector.extract_strided_slice %72 {offsets = [0, 0], sizes = [8, 35], strides = [1, 1]} : vector<8x128xf32> to vector<8x35xf32>
      %c160_129 = arith.constant 160 : index
      %c128_130 = arith.constant 128 : index
      %172 = vector.load %arg11[%c160_129, %c128_130] : memref<200x512xf32, #tpu.memory_space<vmem>>, vector<8x35xf32>
      tpu.vector_store %arg11[%c160_129, %c128_130], %171 {strides = array<i32>} : memref<200x512xf32, #tpu.memory_space<vmem>>, vector<8x35xf32>,
      %173 = vector.extract_strided_slice %72 {offsets = [0, 1], sizes = [8, 35], strides = [1, 1]} : vector<8x128xf32> to vector<8x35xf32>
      %c168_131 = arith.constant 168 : index
      %c128_132 = arith.constant 128 : index
      %174 = vector.load %arg11[%c168_131, %c128_132] : memref<200x512xf32, #tpu.memory_space<vmem>>, vector<8x35xf32>
      tpu.vector_store %arg11[%c168_131, %c128_132], %173 {strides = array<i32>} : memref<200x512xf32, #tpu.memory_space<vmem>>, vector<8x35xf32>,
      %175 = vector.extract_strided_slice %72 {offsets = [0, 2], sizes = [8, 35], strides = [1, 1]} : vector<8x128xf32> to vector<8x35xf32>
      %c176_133 = arith.constant 176 : index
      %c128_134 = arith.constant 128 : index
      %176 = vector.load %arg11[%c176_133, %c128_134] : memref<200x512xf32, #tpu.memory_space<vmem>>, vector<8x35xf32>
      tpu.vector_store %arg11[%c176_133, %c128_134], %175 {strides = array<i32>} : memref<200x512xf32, #tpu.memory_space<vmem>>, vector<8x35xf32>,
      %177 = vector.extract_strided_slice %72 {offsets = [0, 3], sizes = [8, 35], strides = [1, 1]} : vector<8x128xf32> to vector<8x35xf32>
      %c184_135 = arith.constant 184 : index
      %c128_136 = arith.constant 128 : index
      %178 = vector.load %arg11[%c184_135, %c128_136] : memref<200x512xf32, #tpu.memory_space<vmem>>, vector<8x35xf32>
      tpu.vector_store %arg11[%c184_135, %c128_136], %177 {strides = array<i32>} : memref<200x512xf32, #tpu.memory_space<vmem>>, vector<8x35xf32>,
      %179 = vector.extract_strided_slice %72 {offsets = [0, 4], sizes = [8, 35], strides = [1, 1]} : vector<8x128xf32> to vector<8x35xf32>
      %c192_137 = arith.constant 192 : index
      %c128_138 = arith.constant 128 : index
      %180 = vector.load %arg11[%c192_137, %c128_138] : memref<200x512xf32, #tpu.memory_space<vmem>>, vector<8x35xf32>
      tpu.vector_store %arg11[%c192_137, %c128_138], %179 {strides = array<i32>} : memref<200x512xf32, #tpu.memory_space<vmem>>, vector<8x35xf32>,
      %181 = vector.extract_strided_slice %60 {offsets = [0, 0], sizes = [8, 35], strides = [1, 1]} : vector<8x128xf32> to vector<8x35xf32>
      %c0_139 = arith.constant 0 : index
      %c256 = arith.constant 256 : index
      %182 = vector.load %arg11[%c0_139, %c256] : memref<200x512xf32, #tpu.memory_space<vmem>>, vector<8x35xf32>
      tpu.vector_store %arg11[%c0_139, %c256], %181 {strides = array<i32>} : memref<200x512xf32, #tpu.memory_space<vmem>>, vector<8x35xf32>,
      %183 = vector.extract_strided_slice %60 {offsets = [0, 1], sizes = [8, 35], strides = [1, 1]} : vector<8x128xf32> to vector<8x35xf32>
      %c8_140 = arith.constant 8 : index
      %c256_141 = arith.constant 256 : index
      %184 = vector.load %arg11[%c8_140, %c256_141] : memref<200x512xf32, #tpu.memory_space<vmem>>, vector<8x35xf32>
      tpu.vector_store %arg11[%c8_140, %c256_141], %183 {strides = array<i32>} : memref<200x512xf32, #tpu.memory_space<vmem>>, vector<8x35xf32>,
      %185 = vector.extract_strided_slice %60 {offsets = [0, 2], sizes = [8, 35], strides = [1, 1]} : vector<8x128xf32> to vector<8x35xf32>
      %c16_142 = arith.constant 16 : index
      %c256_143 = arith.constant 256 : index
      %186 = vector.load %arg11[%c16_142, %c256_143] : memref<200x512xf32, #tpu.memory_space<vmem>>, vector<8x35xf32>
      tpu.vector_store %arg11[%c16_142, %c256_143], %185 {strides = array<i32>} : memref<200x512xf32, #tpu.memory_space<vmem>>, vector<8x35xf32>,
      %187 = vector.extract_strided_slice %60 {offsets = [0, 3], sizes = [8, 35], strides = [1, 1]} : vector<8x128xf32> to vector<8x35xf32>
      %c24_144 = arith.constant 24 : index
      %c256_145 = arith.constant 256 : index
      %188 = vector.load %arg11[%c24_144, %c256_145] : memref<200x512xf32, #tpu.memory_space<vmem>>, vector<8x35xf32>
      tpu.vector_store %arg11[%c24_144, %c256_145], %187 {strides = array<i32>} : memref<200x512xf32, #tpu.memory_space<vmem>>, vector<8x35xf32>,
      %189 = vector.extract_strided_slice %60 {offsets = [0, 4], sizes = [8, 35], strides = [1, 1]} : vector<8x128xf32> to vector<8x35xf32>
      %c32_146 = arith.constant 32 : index
      %c256_147 = arith.constant 256 : index
      %190 = vector.load %arg11[%c32_146, %c256_147] : memref<200x512xf32, #tpu.memory_space<vmem>>, vector<8x35xf32>
      tpu.vector_store %arg11[%c32_146, %c256_147], %189 {strides = array<i32>} : memref<200x512xf32, #tpu.memory_space<vmem>>, vector<8x35xf32>,
      %191 = vector.extract_strided_slice %64 {offsets = [0, 0], sizes = [8, 35], strides = [1, 1]} : vector<8x128xf32> to vector<8x35xf32>
      %c40_148 = arith.constant 40 : index
      %c256_149 = arith.constant 256 : index
      %192 = vector.load %arg11[%c40_148, %c256_149] : memref<200x512xf32, #tpu.memory_space<vmem>>, vector<8x35xf32>
      tpu.vector_store %arg11[%c40_148, %c256_149], %191 {strides = array<i32>} : memref<200x512xf32, #tpu.memory_space<vmem>>, vector<8x35xf32>,
      %193 = vector.extract_strided_slice %64 {offsets = [0, 1], sizes = [8, 35], strides = [1, 1]} : vector<8x128xf32> to vector<8x35xf32>
      %c48_150 = arith.constant 48 : index
      %c256_151 = arith.constant 256 : index
      %194 = vector.load %arg11[%c48_150, %c256_151] : memref<200x512xf32, #tpu.memory_space<vmem>>, vector<8x35xf32>
      tpu.vector_store %arg11[%c48_150, %c256_151], %193 {strides = array<i32>} : memref<200x512xf32, #tpu.memory_space<vmem>>, vector<8x35xf32>,
      %195 = vector.extract_strided_slice %64 {offsets = [0, 2], sizes = [8, 35], strides = [1, 1]} : vector<8x128xf32> to vector<8x35xf32>
      %c56_152 = arith.constant 56 : index
      %c256_153 = arith.constant 256 : index
      %196 = vector.load %arg11[%c56_152, %c256_153] : memref<200x512xf32, #tpu.memory_space<vmem>>, vector<8x35xf32>
      tpu.vector_store %arg11[%c56_152, %c256_153], %195 {strides = array<i32>} : memref<200x512xf32, #tpu.memory_space<vmem>>, vector<8x35xf32>,
      %197 = vector.extract_strided_slice %64 {offsets = [0, 3], sizes = [8, 35], strides = [1, 1]} : vector<8x128xf32> to vector<8x35xf32>
      %c64_154 = arith.constant 64 : index
      %c256_155 = arith.constant 256 : index
      %198 = vector.load %arg11[%c64_154, %c256_155] : memref<200x512xf32, #tpu.memory_space<vmem>>, vector<8x35xf32>
      tpu.vector_store %arg11[%c64_154, %c256_155], %197 {strides = array<i32>} : memref<200x512xf32, #tpu.memory_space<vmem>>, vector<8x35xf32>,
      %199 = vector.extract_strided_slice %64 {offsets = [0, 4], sizes = [8, 35], strides = [1, 1]} : vector<8x128xf32> to vector<8x35xf32>
      %c72_156 = arith.constant 72 : index
      %c256_157 = arith.constant 256 : index
      %200 = vector.load %arg11[%c72_156, %c256_157] : memref<200x512xf32, #tpu.memory_space<vmem>>, vector<8x35xf32>
      tpu.vector_store %arg11[%c72_156, %c256_157], %199 {strides = array<i32>} : memref<200x512xf32, #tpu.memory_space<vmem>>, vector<8x35xf32>,
      %201 = vector.extract_strided_slice %68 {offsets = [0, 0], sizes = [8, 35], strides = [1, 1]} : vector<8x128xf32> to vector<8x35xf32>
      %c80_158 = arith.constant 80 : index
      %c256_159 = arith.constant 256 : index
      %202 = vector.load %arg11[%c80_158, %c256_159] : memref<200x512xf32, #tpu.memory_space<vmem>>, vector<8x35xf32>
      tpu.vector_store %arg11[%c80_158, %c256_159], %201 {strides = array<i32>} : memref<200x512xf32, #tpu.memory_space<vmem>>, vector<8x35xf32>,
      %203 = vector.extract_strided_slice %68 {offsets = [0, 1], sizes = [8, 35], strides = [1, 1]} : vector<8x128xf32> to vector<8x35xf32>
      %c88_160 = arith.constant 88 : index
      %c256_161 = arith.constant 256 : index
      %204 = vector.load %arg11[%c88_160, %c256_161] : memref<200x512xf32, #tpu.memory_space<vmem>>, vector<8x35xf32>
      tpu.vector_store %arg11[%c88_160, %c256_161], %203 {strides = array<i32>} : memref<200x512xf32, #tpu.memory_space<vmem>>, vector<8x35xf32>,
      %205 = vector.extract_strided_slice %68 {offsets = [0, 2], sizes = [8, 35], strides = [1, 1]} : vector<8x128xf32> to vector<8x35xf32>
      %c96_162 = arith.constant 96 : index
      %c256_163 = arith.constant 256 : index
      %206 = vector.load %arg11[%c96_162, %c256_163] : memref<200x512xf32, #tpu.memory_space<vmem>>, vector<8x35xf32>
      tpu.vector_store %arg11[%c96_162, %c256_163], %205 {strides = array<i32>} : memref<200x512xf32, #tpu.memory_space<vmem>>, vector<8x35xf32>,
      %207 = vector.extract_strided_slice %68 {offsets = [0, 3], sizes = [8, 35], strides = [1, 1]} : vector<8x128xf32> to vector<8x35xf32>
      %c104_164 = arith.constant 104 : index
      %c256_165 = arith.constant 256 : index
      %208 = vector.load %arg11[%c104_164, %c256_165] : memref<200x512xf32, #tpu.memory_space<vmem>>, vector<8x35xf32>
      tpu.vector_store %arg11[%c104_164, %c256_165], %207 {strides = array<i32>} : memref<200x512xf32, #tpu.memory_space<vmem>>, vector<8x35xf32>,
      %209 = vector.extract_strided_slice %68 {offsets = [0, 4], sizes = [8, 35], strides = [1, 1]} : vector<8x128xf32> to vector<8x35xf32>
      %c112_166 = arith.constant 112 : index
      %c256_167 = arith.constant 256 : index
      %210 = vector.load %arg11[%c112_166, %c256_167] : memref<200x512xf32, #tpu.memory_space<vmem>>, vector<8x35xf32>
      tpu.vector_store %arg11[%c112_166, %c256_167], %209 {strides = array<i32>} : memref<200x512xf32, #tpu.memory_space<vmem>>, vector<8x35xf32>,
      %211 = vector.extract_strided_slice %72 {offsets = [0, 0], sizes = [8, 35], strides = [1, 1]} : vector<8x128xf32> to vector<8x35xf32>
      %c120_168 = arith.constant 120 : index
      %c256_169 = arith.constant 256 : index
      %212 = vector.load %arg11[%c120_168, %c256_169] : memref<200x512xf32, #tpu.memory_space<vmem>>, vector<8x35xf32>
      tpu.vector_store %arg11[%c120_168, %c256_169], %211 {strides = array<i32>} : memref<200x512xf32, #tpu.memory_space<vmem>>, vector<8x35xf32>,
      %213 = vector.extract_strided_slice %72 {offsets = [0, 1], sizes = [8, 35], strides = [1, 1]} : vector<8x128xf32> to vector<8x35xf32>
      %c128_170 = arith.constant 128 : index
      %c256_171 = arith.constant 256 : index
      %214 = vector.load %arg11[%c128_170, %c256_171] : memref<200x512xf32, #tpu.memory_space<vmem>>, vector<8x35xf32>
      tpu.vector_store %arg11[%c128_170, %c256_171], %213 {strides = array<i32>} : memref<200x512xf32, #tpu.memory_space<vmem>>, vector<8x35xf32>,
      %215 = vector.extract_strided_slice %72 {offsets = [0, 2], sizes = [8, 35], strides = [1, 1]} : vector<8x128xf32> to vector<8x35xf32>
      %c136_172 = arith.constant 136 : index
      %c256_173 = arith.constant 256 : index
      %216 = vector.load %arg11[%c136_172, %c256_173] : memref<200x512xf32, #tpu.memory_space<vmem>>, vector<8x35xf32>
      tpu.vector_store %arg11[%c136_172, %c256_173], %215 {strides = array<i32>} : memref<200x512xf32, #tpu.memory_space<vmem>>, vector<8x35xf32>,
      %217 = vector.extract_strided_slice %72 {offsets = [0, 3], sizes = [8, 35], strides = [1, 1]} : vector<8x128xf32> to vector<8x35xf32>
      %c144_174 = arith.constant 144 : index
      %c256_175 = arith.constant 256 : index
      %218 = vector.load %arg11[%c144_174, %c256_175] : memref<200x512xf32, #tpu.memory_space<vmem>>, vector<8x35xf32>
      tpu.vector_store %arg11[%c144_174, %c256_175], %217 {strides = array<i32>} : memref<200x512xf32, #tpu.memory_space<vmem>>, vector<8x35xf32>,
      %219 = vector.extract_strided_slice %72 {offsets = [0, 4], sizes = [8, 35], strides = [1, 1]} : vector<8x128xf32> to vector<8x35xf32>
      %c152_176 = arith.constant 152 : index
      %c256_177 = arith.constant 256 : index
      %220 = vector.load %arg11[%c152_176, %c256_177] : memref<200x512xf32, #tpu.memory_space<vmem>>, vector<8x35xf32>
      tpu.vector_store %arg11[%c152_176, %c256_177], %219 {strides = array<i32>} : memref<200x512xf32, #tpu.memory_space<vmem>>, vector<8x35xf32>,
      %221 = vector.extract_strided_slice %76 {offsets = [0, 0], sizes = [8, 35], strides = [1, 1]} : vector<8x128xf32> to vector<8x35xf32>
      %c160_178 = arith.constant 160 : index
      %c256_179 = arith.constant 256 : index
      %222 = vector.load %arg11[%c160_178, %c256_179] : memref<200x512xf32, #tpu.memory_space<vmem>>, vector<8x35xf32>
      tpu.vector_store %arg11[%c160_178, %c256_179], %221 {strides = array<i32>} : memref<200x512xf32, #tpu.memory_space<vmem>>, vector<8x35xf32>,
      %223 = vector.extract_strided_slice %76 {offsets = [0, 1], sizes = [8, 35], strides = [1, 1]} : vector<8x128xf32> to vector<8x35xf32>
      %c168_180 = arith.constant 168 : index
      %c256_181 = arith.constant 256 : index
      %224 = vector.load %arg11[%c168_180, %c256_181] : memref<200x512xf32, #tpu.memory_space<vmem>>, vector<8x35xf32>
      tpu.vector_store %arg11[%c168_180, %c256_181], %223 {strides = array<i32>} : memref<200x512xf32, #tpu.memory_space<vmem>>, vector<8x35xf32>,
      %225 = vector.extract_strided_slice %76 {offsets = [0, 2], sizes = [8, 35], strides = [1, 1]} : vector<8x128xf32> to vector<8x35xf32>
      %c176_182 = arith.constant 176 : index
      %c256_183 = arith.constant 256 : index
      %226 = vector.load %arg11[%c176_182, %c256_183] : memref<200x512xf32, #tpu.memory_space<vmem>>, vector<8x35xf32>
      tpu.vector_store %arg11[%c176_182, %c256_183], %225 {strides = array<i32>} : memref<200x512xf32, #tpu.memory_space<vmem>>, vector<8x35xf32>,
      %227 = vector.extract_strided_slice %76 {offsets = [0, 3], sizes = [8, 35], strides = [1, 1]} : vector<8x128xf32> to vector<8x35xf32>
      %c184_184 = arith.constant 184 : index
      %c256_185 = arith.constant 256 : index
      %228 = vector.load %arg11[%c184_184, %c256_185] : memref<200x512xf32, #tpu.memory_space<vmem>>, vector<8x35xf32>
      tpu.vector_store %arg11[%c184_184, %c256_185], %227 {strides = array<i32>} : memref<200x512xf32, #tpu.memory_space<vmem>>, vector<8x35xf32>,
      %229 = vector.extract_strided_slice %76 {offsets = [0, 4], sizes = [8, 35], strides = [1, 1]} : vector<8x128xf32> to vector<8x35xf32>
      %c192_186 = arith.constant 192 : index
      %c256_187 = arith.constant 256 : index
      %230 = vector.load %arg11[%c192_186, %c256_187] : memref<200x512xf32, #tpu.memory_space<vmem>>, vector<8x35xf32>
      tpu.vector_store %arg11[%c192_186, %c256_187], %229 {strides = array<i32>} : memref<200x512xf32, #tpu.memory_space<vmem>>, vector<8x35xf32>,
      %231 = vector.extract_strided_slice %64 {offsets = [0, 0], sizes = [8, 35], strides = [1, 1]} : vector<8x128xf32> to vector<8x35xf32>
      %c0_188 = arith.constant 0 : index
      %c384 = arith.constant 384 : index
      %232 = vector.load %arg11[%c0_188, %c384] : memref<200x512xf32, #tpu.memory_space<vmem>>, vector<8x35xf32>
      tpu.vector_store %arg11[%c0_188, %c384], %231 {strides = array<i32>} : memref<200x512xf32, #tpu.memory_space<vmem>>, vector<8x35xf32>,
      %233 = vector.extract_strided_slice %64 {offsets = [0, 1], sizes = [8, 35], strides = [1, 1]} : vector<8x128xf32> to vector<8x35xf32>
      %c8_189 = arith.constant 8 : index
      %c384_190 = arith.constant 384 : index
      %234 = vector.load %arg11[%c8_189, %c384_190] : memref<200x512xf32, #tpu.memory_space<vmem>>, vector<8x35xf32>
      tpu.vector_store %arg11[%c8_189, %c384_190], %233 {strides = array<i32>} : memref<200x512xf32, #tpu.memory_space<vmem>>, vector<8x35xf32>,
      %235 = vector.extract_strided_slice %64 {offsets = [0, 2], sizes = [8, 35], strides = [1, 1]} : vector<8x128xf32> to vector<8x35xf32>
      %c16_191 = arith.constant 16 : index
      %c384_192 = arith.constant 384 : index
      %236 = vector.load %arg11[%c16_191, %c384_192] : memref<200x512xf32, #tpu.memory_space<vmem>>, vector<8x35xf32>
      tpu.vector_store %arg11[%c16_191, %c384_192], %235 {strides = array<i32>} : memref<200x512xf32, #tpu.memory_space<vmem>>, vector<8x35xf32>,
      %237 = vector.extract_strided_slice %64 {offsets = [0, 3], sizes = [8, 35], strides = [1, 1]} : vector<8x128xf32> to vector<8x35xf32>
      %c24_193 = arith.constant 24 : index
      %c384_194 = arith.constant 384 : index
      %238 = vector.load %arg11[%c24_193, %c384_194] : memref<200x512xf32, #tpu.memory_space<vmem>>, vector<8x35xf32>
      tpu.vector_store %arg11[%c24_193, %c384_194], %237 {strides = array<i32>} : memref<200x512xf32, #tpu.memory_space<vmem>>, vector<8x35xf32>,
      %239 = vector.extract_strided_slice %64 {offsets = [0, 4], sizes = [8, 35], strides = [1, 1]} : vector<8x128xf32> to vector<8x35xf32>
      %c32_195 = arith.constant 32 : index
      %c384_196 = arith.constant 384 : index
      %240 = vector.load %arg11[%c32_195, %c384_196] : memref<200x512xf32, #tpu.memory_space<vmem>>, vector<8x35xf32>
      tpu.vector_store %arg11[%c32_195, %c384_196], %239 {strides = array<i32>} : memref<200x512xf32, #tpu.memory_space<vmem>>, vector<8x35xf32>,
      %241 = vector.extract_strided_slice %68 {offsets = [0, 0], sizes = [8, 35], strides = [1, 1]} : vector<8x128xf32> to vector<8x35xf32>
      %c40_197 = arith.constant 40 : index
      %c384_198 = arith.constant 384 : index
      %242 = vector.load %arg11[%c40_197, %c384_198] : memref<200x512xf32, #tpu.memory_space<vmem>>, vector<8x35xf32>
      tpu.vector_store %arg11[%c40_197, %c384_198], %241 {strides = array<i32>} : memref<200x512xf32, #tpu.memory_space<vmem>>, vector<8x35xf32>,
      %243 = vector.extract_strided_slice %68 {offsets = [0, 1], sizes = [8, 35], strides = [1, 1]} : vector<8x128xf32> to vector<8x35xf32>
      %c48_199 = arith.constant 48 : index
      %c384_200 = arith.constant 384 : index
      %244 = vector.load %arg11[%c48_199, %c384_200] : memref<200x512xf32, #tpu.memory_space<vmem>>, vector<8x35xf32>
      tpu.vector_store %arg11[%c48_199, %c384_200], %243 {strides = array<i32>} : memref<200x512xf32, #tpu.memory_space<vmem>>, vector<8x35xf32>,
      %245 = vector.extract_strided_slice %68 {offsets = [0, 2], sizes = [8, 35], strides = [1, 1]} : vector<8x128xf32> to vector<8x35xf32>
      %c56_201 = arith.constant 56 : index
      %c384_202 = arith.constant 384 : index
      %246 = vector.load %arg11[%c56_201, %c384_202] : memref<200x512xf32, #tpu.memory_space<vmem>>, vector<8x35xf32>
      tpu.vector_store %arg11[%c56_201, %c384_202], %245 {strides = array<i32>} : memref<200x512xf32, #tpu.memory_space<vmem>>, vector<8x35xf32>,
      %247 = vector.extract_strided_slice %68 {offsets = [0, 3], sizes = [8, 35], strides = [1, 1]} : vector<8x128xf32> to vector<8x35xf32>
      %c64_203 = arith.constant 64 : index
      %c384_204 = arith.constant 384 : index
      %248 = vector.load %arg11[%c64_203, %c384_204] : memref<200x512xf32, #tpu.memory_space<vmem>>, vector<8x35xf32>
      tpu.vector_store %arg11[%c64_203, %c384_204], %247 {strides = array<i32>} : memref<200x512xf32, #tpu.memory_space<vmem>>, vector<8x35xf32>,
      %249 = vector.extract_strided_slice %68 {offsets = [0, 4], sizes = [8, 35], strides = [1, 1]} : vector<8x128xf32> to vector<8x35xf32>
      %c72_205 = arith.constant 72 : index
      %c384_206 = arith.constant 384 : index
      %250 = vector.load %arg11[%c72_205, %c384_206] : memref<200x512xf32, #tpu.memory_space<vmem>>, vector<8x35xf32>
      tpu.vector_store %arg11[%c72_205, %c384_206], %249 {strides = array<i32>} : memref<200x512xf32, #tpu.memory_space<vmem>>, vector<8x35xf32>,
      %251 = vector.extract_strided_slice %72 {offsets = [0, 0], sizes = [8, 35], strides = [1, 1]} : vector<8x128xf32> to vector<8x35xf32>
      %c80_207 = arith.constant 80 : index
      %c384_208 = arith.constant 384 : index
      %252 = vector.load %arg11[%c80_207, %c384_208] : memref<200x512xf32, #tpu.memory_space<vmem>>, vector<8x35xf32>
      tpu.vector_store %arg11[%c80_207, %c384_208], %251 {strides = array<i32>} : memref<200x512xf32, #tpu.memory_space<vmem>>, vector<8x35xf32>,
      %253 = vector.extract_strided_slice %72 {offsets = [0, 1], sizes = [8, 35], strides = [1, 1]} : vector<8x128xf32> to vector<8x35xf32>
      %c88_209 = arith.constant 88 : index
      %c384_210 = arith.constant 384 : index
      %254 = vector.load %arg11[%c88_209, %c384_210] : memref<200x512xf32, #tpu.memory_space<vmem>>, vector<8x35xf32>
      tpu.vector_store %arg11[%c88_209, %c384_210], %253 {strides = array<i32>} : memref<200x512xf32, #tpu.memory_space<vmem>>, vector<8x35xf32>,
      %255 = vector.extract_strided_slice %72 {offsets = [0, 2], sizes = [8, 35], strides = [1, 1]} : vector<8x128xf32> to vector<8x35xf32>
      %c96_211 = arith.constant 96 : index
      %c384_212 = arith.constant 384 : index
      %256 = vector.load %arg11[%c96_211, %c384_212] : memref<200x512xf32, #tpu.memory_space<vmem>>, vector<8x35xf32>
      tpu.vector_store %arg11[%c96_211, %c384_212], %255 {strides = array<i32>} : memref<200x512xf32, #tpu.memory_space<vmem>>, vector<8x35xf32>,
      %257 = vector.extract_strided_slice %72 {offsets = [0, 3], sizes = [8, 35], strides = [1, 1]} : vector<8x128xf32> to vector<8x35xf32>
      %c104_213 = arith.constant 104 : index
      %c384_214 = arith.constant 384 : index
      %258 = vector.load %arg11[%c104_213, %c384_214] : memref<200x512xf32, #tpu.memory_space<vmem>>, vector<8x35xf32>
      tpu.vector_store %arg11[%c104_213, %c384_214], %257 {strides = array<i32>} : memref<200x512xf32, #tpu.memory_space<vmem>>, vector<8x35xf32>,
      %259 = vector.extract_strided_slice %72 {offsets = [0, 4], sizes = [8, 35], strides = [1, 1]} : vector<8x128xf32> to vector<8x35xf32>
      %c112_215 = arith.constant 112 : index
      %c384_216 = arith.constant 384 : index
      %260 = vector.load %arg11[%c112_215, %c384_216] : memref<200x512xf32, #tpu.memory_space<vmem>>, vector<8x35xf32>
      tpu.vector_store %arg11[%c112_215, %c384_216], %259 {strides = array<i32>} : memref<200x512xf32, #tpu.memory_space<vmem>>, vector<8x35xf32>,
      %261 = vector.extract_strided_slice %76 {offsets = [0, 0], sizes = [8, 35], strides = [1, 1]} : vector<8x128xf32> to vector<8x35xf32>
      %c120_217 = arith.constant 120 : index
      %c384_218 = arith.constant 384 : index
      %262 = vector.load %arg11[%c120_217, %c384_218] : memref<200x512xf32, #tpu.memory_space<vmem>>, vector<8x35xf32>
      tpu.vector_store %arg11[%c120_217, %c384_218], %261 {strides = array<i32>} : memref<200x512xf32, #tpu.memory_space<vmem>>, vector<8x35xf32>,
      %263 = vector.extract_strided_slice %76 {offsets = [0, 1], sizes = [8, 35], strides = [1, 1]} : vector<8x128xf32> to vector<8x35xf32>
      %c128_219 = arith.constant 128 : index
      %c384_220 = arith.constant 384 : index
      %264 = vector.load %arg11[%c128_219, %c384_220] : memref<200x512xf32, #tpu.memory_space<vmem>>, vector<8x35xf32>
      tpu.vector_store %arg11[%c128_219, %c384_220], %263 {strides = array<i32>} : memref<200x512xf32, #tpu.memory_space<vmem>>, vector<8x35xf32>,
      %265 = vector.extract_strided_slice %76 {offsets = [0, 2], sizes = [8, 35], strides = [1, 1]} : vector<8x128xf32> to vector<8x35xf32>
      %c136_221 = arith.constant 136 : index
      %c384_222 = arith.constant 384 : index
      %266 = vector.load %arg11[%c136_221, %c384_222] : memref<200x512xf32, #tpu.memory_space<vmem>>, vector<8x35xf32>
      tpu.vector_store %arg11[%c136_221, %c384_222], %265 {strides = array<i32>} : memref<200x512xf32, #tpu.memory_space<vmem>>, vector<8x35xf32>,
      %267 = vector.extract_strided_slice %76 {offsets = [0, 3], sizes = [8, 35], strides = [1, 1]} : vector<8x128xf32> to vector<8x35xf32>
      %c144_223 = arith.constant 144 : index
      %c384_224 = arith.constant 384 : index
      %268 = vector.load %arg11[%c144_223, %c384_224] : memref<200x512xf32, #tpu.memory_space<vmem>>, vector<8x35xf32>
      tpu.vector_store %arg11[%c144_223, %c384_224], %267 {strides = array<i32>} : memref<200x512xf32, #tpu.memory_space<vmem>>, vector<8x35xf32>,
      %269 = vector.extract_strided_slice %76 {offsets = [0, 4], sizes = [8, 35], strides = [1, 1]} : vector<8x128xf32> to vector<8x35xf32>
      %c152_225 = arith.constant 152 : index
      %c384_226 = arith.constant 384 : index
      %270 = vector.load %arg11[%c152_225, %c384_226] : memref<200x512xf32, #tpu.memory_space<vmem>>, vector<8x35xf32>
      tpu.vector_store %arg11[%c152_225, %c384_226], %269 {strides = array<i32>} : memref<200x512xf32, #tpu.memory_space<vmem>>, vector<8x35xf32>,
      %271 = vector.extract_strided_slice %80 {offsets = [0, 0], sizes = [8, 35], strides = [1, 1]} : vector<8x128xf32> to vector<8x35xf32>
      %c160_227 = arith.constant 160 : index
      %c384_228 = arith.constant 384 : index
      %272 = vector.load %arg11[%c160_227, %c384_228] : memref<200x512xf32, #tpu.memory_space<vmem>>, vector<8x35xf32>
      tpu.vector_store %arg11[%c160_227, %c384_228], %271 {strides = array<i32>} : memref<200x512xf32, #tpu.memory_space<vmem>>, vector<8x35xf32>,
      %273 = vector.extract_strided_slice %80 {offsets = [0, 1], sizes = [8, 35], strides = [1, 1]} : vector<8x128xf32> to vector<8x35xf32>
      %c168_229 = arith.constant 168 : index
      %c384_230 = arith.constant 384 : index
      %274 = vector.load %arg11[%c168_229, %c384_230] : memref<200x512xf32, #tpu.memory_space<vmem>>, vector<8x35xf32>
      tpu.vector_store %arg11[%c168_229, %c384_230], %273 {strides = array<i32>} : memref<200x512xf32, #tpu.memory_space<vmem>>, vector<8x35xf32>,
      %275 = vector.extract_strided_slice %80 {offsets = [0, 2], sizes = [8, 35], strides = [1, 1]} : vector<8x128xf32> to vector<8x35xf32>
      %c176_231 = arith.constant 176 : index
      %c384_232 = arith.constant 384 : index
      %276 = vector.load %arg11[%c176_231, %c384_232] : memref<200x512xf32, #tpu.memory_space<vmem>>, vector<8x35xf32>
      tpu.vector_store %arg11[%c176_231, %c384_232], %275 {strides = array<i32>} : memref<200x512xf32, #tpu.memory_space<vmem>>, vector<8x35xf32>,
      %277 = vector.extract_strided_slice %80 {offsets = [0, 3], sizes = [8, 35], strides = [1, 1]} : vector<8x128xf32> to vector<8x35xf32>
      %c184_233 = arith.constant 184 : index
      %c384_234 = arith.constant 384 : index
      %278 = vector.load %arg11[%c184_233, %c384_234] : memref<200x512xf32, #tpu.memory_space<vmem>>, vector<8x35xf32>
      tpu.vector_store %arg11[%c184_233, %c384_234], %277 {strides = array<i32>} : memref<200x512xf32, #tpu.memory_space<vmem>>, vector<8x35xf32>,
      %279 = vector.extract_strided_slice %80 {offsets = [0, 4], sizes = [8, 35], strides = [1, 1]} : vector<8x128xf32> to vector<8x35xf32>
      %c192_235 = arith.constant 192 : index
      %c384_236 = arith.constant 384 : index
      %280 = vector.load %arg11[%c192_235, %c384_236] : memref<200x512xf32, #tpu.memory_space<vmem>>, vector<8x35xf32>
      tpu.vector_store %arg11[%c192_235, %c384_236], %279 {strides = array<i32>} : memref<200x512xf32, #tpu.memory_space<vmem>>, vector<8x35xf32>,
      %c0_237 = arith.constant 0 : index
      %c0_238 = arith.constant 0 : index
      %281 = vector.load %arg11[%c0_237, %c0_238] : memref<200x512xf32, #tpu.memory_space<vmem>>, vector<200x512xf32>
      %cst_239 = arith.constant dense<0.000000e+00> : vector<8x512xf32>
      %282 = tpu.matmul %32, %281, %cst_239 {dimension_numbers = #tpu.dot_dimension_numbers<[1], [0], [0], [1], [0, 0, 1, 1], [], []>} : vector<8x200xf32>, vector<200x512xf32>, vector<8x512xf32> -> vector<8x512xf32>
      %283 = arith.addf %282, %35 : vector<8x512xf32>
      %cst_240 = arith.constant 0.000000e+00 : f32
      %284 = vector.broadcast %cst_240 : f32 to vector<8x512xf32>
      %285 = arith.cmpf oge, %283, %284 : vector<8x512xf32>
      %cst_241 = arith.constant 0.00999999977 : f32
      %286 = vector.broadcast %cst_241 : f32 to vector<8x512xf32>
      %287 = arith.mulf %286, %283 : vector<8x512xf32>
      %288 = arith.select %285, %283, %287 : vector<8x512xi1>, vector<8x512xf32>
      %c0_i32_242 = arith.constant 0 : i32
      %289 = arith.addi %48, %c0_i32_242 : i32
      %290 = vector.extract_strided_slice %288 {offsets = [0, 0], sizes = [8, 128], strides = [1, 1]} : vector<8x512xf32> to vector<8x128xf32>
      %cst_243 = arith.constant dense<0.000000e+00> : vector<8x128xf32>
      %291 = tpu.matmul %290, %18, %cst_243 {dimension_numbers = #tpu.dot_dimension_numbers<[1], [0], [0], [1], [0, 0, 1, 1], [], []>} : vector<8x128xf32>, vector<128x128xf32>, vector<8x128xf32> -> vector<8x128xf32>
      %c2_i32_244 = arith.constant 2 : i32
      %292 = arith.muli %c2_i32_244, %289 : i32
      %c3_i32_245 = arith.constant 3 : i32
      %293 = arith.addi %c3_i32_245, %292 : i32
      %294 = arith.index_cast %293 : i32 to index
      %c0_246 = arith.constant 0 : index
      %c0_247 = arith.constant 0 : index
      %295 = vector.load %arg9[%294, %c0_246, %c0_247] : memref<75x8x128xf32, #tpu.memory_space<vmem>>, vector<1x8x128xf32>
      %296 = vector.shape_cast %295 : vector<1x8x128xf32> to vector<8x128xf32>
      %297 = vector.shape_cast %291 : vector<8x128xf32> to vector<1x8x128xf32>
      tpu.vector_store %arg9[%294, %c0_246, %c0_247], %297 {strides = array<i32>} : memref<75x8x128xf32, #tpu.memory_space<vmem>>, vector<1x8x128xf32>,
      %c1_i32_248 = arith.constant 1 : i32
      %298 = arith.addi %48, %c1_i32_248 : i32
      %299 = vector.extract_strided_slice %288 {offsets = [0, 128], sizes = [8, 128], strides = [1, 1]} : vector<8x512xf32> to vector<8x128xf32>
      %cst_249 = arith.constant dense<0.000000e+00> : vector<8x128xf32>
      %300 = tpu.matmul %299, %18, %cst_249 {dimension_numbers = #tpu.dot_dimension_numbers<[1], [0], [0], [1], [0, 0, 1, 1], [], []>} : vector<8x128xf32>, vector<128x128xf32>, vector<8x128xf32> -> vector<8x128xf32>
      %c2_i32_250 = arith.constant 2 : i32
      %301 = arith.muli %c2_i32_250, %298 : i32
      %c3_i32_251 = arith.constant 3 : i32
      %302 = arith.addi %c3_i32_251, %301 : i32
      %303 = arith.index_cast %302 : i32 to index
      %c0_252 = arith.constant 0 : index
      %c0_253 = arith.constant 0 : index
      %304 = vector.load %arg9[%303, %c0_252, %c0_253] : memref<75x8x128xf32, #tpu.memory_space<vmem>>, vector<1x8x128xf32>
      %305 = vector.shape_cast %304 : vector<1x8x128xf32> to vector<8x128xf32>
      %306 = vector.shape_cast %300 : vector<8x128xf32> to vector<1x8x128xf32>
      tpu.vector_store %arg9[%303, %c0_252, %c0_253], %306 {strides = array<i32>} : memref<75x8x128xf32, #tpu.memory_space<vmem>>, vector<1x8x128xf32>,
      %c2_i32_254 = arith.constant 2 : i32
      %307 = arith.addi %48, %c2_i32_254 : i32
      %308 = vector.extract_strided_slice %288 {offsets = [0, 256], sizes = [8, 128], strides = [1, 1]} : vector<8x512xf32> to vector<8x128xf32>
      %cst_255 = arith.constant dense<0.000000e+00> : vector<8x128xf32>
      %309 = tpu.matmul %308, %18, %cst_255 {dimension_numbers = #tpu.dot_dimension_numbers<[1], [0], [0], [1], [0, 0, 1, 1], [], []>} : vector<8x128xf32>, vector<128x128xf32>, vector<8x128xf32> -> vector<8x128xf32>
      %c2_i32_256 = arith.constant 2 : i32
      %310 = arith.muli %c2_i32_256, %307 : i32
      %c3_i32_257 = arith.constant 3 : i32
      %311 = arith.addi %c3_i32_257, %310 : i32
      %312 = arith.index_cast %311 : i32 to index
      %c0_258 = arith.constant 0 : index
      %c0_259 = arith.constant 0 : index
      %313 = vector.load %arg9[%312, %c0_258, %c0_259] : memref<75x8x128xf32, #tpu.memory_space<vmem>>, vector<1x8x128xf32>
      %314 = vector.shape_cast %313 : vector<1x8x128xf32> to vector<8x128xf32>
      %315 = vector.shape_cast %309 : vector<8x128xf32> to vector<1x8x128xf32>
      tpu.vector_store %arg9[%312, %c0_258, %c0_259], %315 {strides = array<i32>} : memref<75x8x128xf32, #tpu.memory_space<vmem>>, vector<1x8x128xf32>,
      %c3_i32_260 = arith.constant 3 : i32
      %316 = arith.addi %48, %c3_i32_260 : i32
      %317 = vector.extract_strided_slice %288 {offsets = [0, 384], sizes = [8, 128], strides = [1, 1]} : vector<8x512xf32> to vector<8x128xf32>
      %cst_261 = arith.constant dense<0.000000e+00> : vector<8x128xf32>
      %318 = tpu.matmul %317, %18, %cst_261 {dimension_numbers = #tpu.dot_dimension_numbers<[1], [0], [0], [1], [0, 0, 1, 1], [], []>} : vector<8x128xf32>, vector<128x128xf32>, vector<8x128xf32> -> vector<8x128xf32>
      %c2_i32_262 = arith.constant 2 : i32
      %319 = arith.muli %c2_i32_262, %316 : i32
      %c3_i32_263 = arith.constant 3 : i32
      %320 = arith.addi %c3_i32_263, %319 : i32
      %321 = arith.index_cast %320 : i32 to index
      %c0_264 = arith.constant 0 : index
      %c0_265 = arith.constant 0 : index
      %322 = vector.load %arg9[%321, %c0_264, %c0_265] : memref<75x8x128xf32, #tpu.memory_space<vmem>>, vector<1x8x128xf32>
      %323 = vector.shape_cast %322 : vector<1x8x128xf32> to vector<8x128xf32>
      %324 = vector.shape_cast %318 : vector<8x128xf32> to vector<1x8x128xf32>
      tpu.vector_store %arg9[%321, %c0_264, %c0_265], %324 {strides = array<i32>} : memref<75x8x128xf32, #tpu.memory_space<vmem>>, vector<1x8x128xf32>,
    }
    %c9_i32_19 = arith.constant 9 : i32
    %c0_20 = arith.constant 0 : index
    %c0_21 = arith.constant 0 : index
    %37 = vector.load %arg4[%c0_20, %c0_21] : memref<16x200xf32, #tpu.memory_space<vmem>>, vector<16x200xf32>
    %c0_22 = arith.constant 0 : index
    %c0_23 = arith.constant 0 : index
    %38 = vector.load %arg5[%c0_22, %c0_23] : memref<16x1xf32, #tpu.memory_space<vmem>>, vector<16x1xf32>
    %39 = vector.shape_cast %38 : vector<16x1xf32> to vector<16x1xf32>
    %40 = vector.broadcast %39 : vector<16x1xf32> to vector<16x512xf32>
    %c0_i32_24 = arith.constant 0 : i32
    %c18_i32 = arith.constant 18 : i32
    %41 = arith.addi %c0_i32_24, %c18_i32 : i32
    %c1_i32_25 = arith.constant 1 : i32
    scf.for %arg12 = %c0_i32_24 to %41 step %c1_i32_25  : i32 {
      %c4_i32 = arith.constant 4 : i32
      %47 = arith.muli %arg12, %c4_i32 : i32
      %c67_i32 = arith.constant 67 : i32
      %48 = arith.minsi %47, %c67_i32 : i32
      %c0_i32_34 = arith.constant 0 : i32
      %49 = arith.addi %48, %c0_i32_34 : i32
      %50 = arith.index_cast %49 : i32 to index
      %c0_35 = arith.constant 0 : index
      %c0_36 = arith.constant 0 : index
      %51 = vector.load %arg9[%50, %c0_35, %c0_36] : memref<75x8x128xf32, #tpu.memory_space<vmem>>, vector<1x8x128xf32>
      %52 = vector.shape_cast %51 : vector<1x8x128xf32> to vector<8x128xf32>
      %c1_i32_37 = arith.constant 1 : i32
      %53 = arith.addi %48, %c1_i32_37 : i32
      %54 = arith.index_cast %53 : i32 to index
      %c0_38 = arith.constant 0 : index
      %c0_39 = arith.constant 0 : index
      %55 = vector.load %arg9[%54, %c0_38, %c0_39] : memref<75x8x128xf32, #tpu.memory_space<vmem>>, vector<1x8x128xf32>
      %56 = vector.shape_cast %55 : vector<1x8x128xf32> to vector<8x128xf32>
      %c2_i32_40 = arith.constant 2 : i32
      %57 = arith.addi %48, %c2_i32_40 : i32
      %58 = arith.index_cast %57 : i32 to index
      %c0_41 = arith.constant 0 : index
      %c0_42 = arith.constant 0 : index
      %59 = vector.load %arg9[%58, %c0_41, %c0_42] : memref<75x8x128xf32, #tpu.memory_space<vmem>>, vector<1x8x128xf32>
      %60 = vector.shape_cast %59 : vector<1x8x128xf32> to vector<8x128xf32>
      %c3_i32_43 = arith.constant 3 : i32
      %61 = arith.addi %48, %c3_i32_43 : i32
      %62 = arith.index_cast %61 : i32 to index
      %c0_44 = arith.constant 0 : index
      %c0_45 = arith.constant 0 : index
      %63 = vector.load %arg9[%62, %c0_44, %c0_45] : memref<75x8x128xf32, #tpu.memory_space<vmem>>, vector<1x8x128xf32>
      %64 = vector.shape_cast %63 : vector<1x8x128xf32> to vector<8x128xf32>
      %c4_i32_46 = arith.constant 4 : i32
      %65 = arith.addi %48, %c4_i32_46 : i32
      %66 = arith.index_cast %65 : i32 to index
      %c0_47 = arith.constant 0 : index
      %c0_48 = arith.constant 0 : index
      %67 = vector.load %arg9[%66, %c0_47, %c0_48] : memref<75x8x128xf32, #tpu.memory_space<vmem>>, vector<1x8x128xf32>
      %68 = vector.shape_cast %67 : vector<1x8x128xf32> to vector<8x128xf32>
      %c5_i32 = arith.constant 5 : i32
      %69 = arith.addi %48, %c5_i32 : i32
      %70 = arith.index_cast %69 : i32 to index
      %c0_49 = arith.constant 0 : index
      %c0_50 = arith.constant 0 : index
      %71 = vector.load %arg9[%70, %c0_49, %c0_50] : memref<75x8x128xf32, #tpu.memory_space<vmem>>, vector<1x8x128xf32>
      %72 = vector.shape_cast %71 : vector<1x8x128xf32> to vector<8x128xf32>
      %c6_i32 = arith.constant 6 : i32
      %73 = arith.addi %48, %c6_i32 : i32
      %74 = arith.index_cast %73 : i32 to index
      %c0_51 = arith.constant 0 : index
      %c0_52 = arith.constant 0 : index
      %75 = vector.load %arg9[%74, %c0_51, %c0_52] : memref<75x8x128xf32, #tpu.memory_space<vmem>>, vector<1x8x128xf32>
      %76 = vector.shape_cast %75 : vector<1x8x128xf32> to vector<8x128xf32>
      %c7_i32 = arith.constant 7 : i32
      %77 = arith.addi %48, %c7_i32 : i32
      %78 = arith.index_cast %77 : i32 to index
      %c0_53 = arith.constant 0 : index
      %c0_54 = arith.constant 0 : index
      %79 = vector.load %arg9[%78, %c0_53, %c0_54] : memref<75x8x128xf32, #tpu.memory_space<vmem>>, vector<1x8x128xf32>
      %80 = vector.shape_cast %79 : vector<1x8x128xf32> to vector<8x128xf32>
      %81 = vector.extract_strided_slice %52 {offsets = [0, 0], sizes = [8, 71], strides = [1, 1]} : vector<8x128xf32> to vector<8x71xf32>
      %c0_55 = arith.constant 0 : index
      %c0_56 = arith.constant 0 : index
      %82 = vector.load %arg11[%c0_55, %c0_56] : memref<200x512xf32, #tpu.memory_space<vmem>>, vector<8x71xf32>
      tpu.vector_store %arg11[%c0_55, %c0_56], %81 {strides = array<i32>} : memref<200x512xf32, #tpu.memory_space<vmem>>, vector<8x71xf32>,
      %83 = vector.extract_strided_slice %52 {offsets = [0, 1], sizes = [8, 71], strides = [1, 1]} : vector<8x128xf32> to vector<8x71xf32>
      %c8 = arith.constant 8 : index
      %c0_57 = arith.constant 0 : index
      %84 = vector.load %arg11[%c8, %c0_57] : memref<200x512xf32, #tpu.memory_space<vmem>>, vector<8x71xf32>
      tpu.vector_store %arg11[%c8, %c0_57], %83 {strides = array<i32>} : memref<200x512xf32, #tpu.memory_space<vmem>>, vector<8x71xf32>,
      %85 = vector.extract_strided_slice %52 {offsets = [0, 2], sizes = [8, 71], strides = [1, 1]} : vector<8x128xf32> to vector<8x71xf32>
      %c16 = arith.constant 16 : index
      %c0_58 = arith.constant 0 : index
      %86 = vector.load %arg11[%c16, %c0_58] : memref<200x512xf32, #tpu.memory_space<vmem>>, vector<8x71xf32>
      tpu.vector_store %arg11[%c16, %c0_58], %85 {strides = array<i32>} : memref<200x512xf32, #tpu.memory_space<vmem>>, vector<8x71xf32>,
      %87 = vector.extract_strided_slice %52 {offsets = [0, 3], sizes = [8, 71], strides = [1, 1]} : vector<8x128xf32> to vector<8x71xf32>
      %c24 = arith.constant 24 : index
      %c0_59 = arith.constant 0 : index
      %88 = vector.load %arg11[%c24, %c0_59] : memref<200x512xf32, #tpu.memory_space<vmem>>, vector<8x71xf32>
      tpu.vector_store %arg11[%c24, %c0_59], %87 {strides = array<i32>} : memref<200x512xf32, #tpu.memory_space<vmem>>, vector<8x71xf32>,
      %89 = vector.extract_strided_slice %52 {offsets = [0, 4], sizes = [8, 71], strides = [1, 1]} : vector<8x128xf32> to vector<8x71xf32>
      %c32 = arith.constant 32 : index
      %c0_60 = arith.constant 0 : index
      %90 = vector.load %arg11[%c32, %c0_60] : memref<200x512xf32, #tpu.memory_space<vmem>>, vector<8x71xf32>
      tpu.vector_store %arg11[%c32, %c0_60], %89 {strides = array<i32>} : memref<200x512xf32, #tpu.memory_space<vmem>>, vector<8x71xf32>,
      %91 = vector.extract_strided_slice %56 {offsets = [0, 0], sizes = [8, 71], strides = [1, 1]} : vector<8x128xf32> to vector<8x71xf32>
      %c40 = arith.constant 40 : index
      %c0_61 = arith.constant 0 : index
      %92 = vector.load %arg11[%c40, %c0_61] : memref<200x512xf32, #tpu.memory_space<vmem>>, vector<8x71xf32>
      tpu.vector_store %arg11[%c40, %c0_61], %91 {strides = array<i32>} : memref<200x512xf32, #tpu.memory_space<vmem>>, vector<8x71xf32>,
      %93 = vector.extract_strided_slice %56 {offsets = [0, 1], sizes = [8, 71], strides = [1, 1]} : vector<8x128xf32> to vector<8x71xf32>
      %c48 = arith.constant 48 : index
      %c0_62 = arith.constant 0 : index
      %94 = vector.load %arg11[%c48, %c0_62] : memref<200x512xf32, #tpu.memory_space<vmem>>, vector<8x71xf32>
      tpu.vector_store %arg11[%c48, %c0_62], %93 {strides = array<i32>} : memref<200x512xf32, #tpu.memory_space<vmem>>, vector<8x71xf32>,
      %95 = vector.extract_strided_slice %56 {offsets = [0, 2], sizes = [8, 71], strides = [1, 1]} : vector<8x128xf32> to vector<8x71xf32>
      %c56 = arith.constant 56 : index
      %c0_63 = arith.constant 0 : index
      %96 = vector.load %arg11[%c56, %c0_63] : memref<200x512xf32, #tpu.memory_space<vmem>>, vector<8x71xf32>
      tpu.vector_store %arg11[%c56, %c0_63], %95 {strides = array<i32>} : memref<200x512xf32, #tpu.memory_space<vmem>>, vector<8x71xf32>,
      %97 = vector.extract_strided_slice %56 {offsets = [0, 3], sizes = [8, 71], strides = [1, 1]} : vector<8x128xf32> to vector<8x71xf32>
      %c64 = arith.constant 64 : index
      %c0_64 = arith.constant 0 : index
      %98 = vector.load %arg11[%c64, %c0_64] : memref<200x512xf32, #tpu.memory_space<vmem>>, vector<8x71xf32>
      tpu.vector_store %arg11[%c64, %c0_64], %97 {strides = array<i32>} : memref<200x512xf32, #tpu.memory_space<vmem>>, vector<8x71xf32>,
      %99 = vector.extract_strided_slice %56 {offsets = [0, 4], sizes = [8, 71], strides = [1, 1]} : vector<8x128xf32> to vector<8x71xf32>
      %c72 = arith.constant 72 : index
      %c0_65 = arith.constant 0 : index
      %100 = vector.load %arg11[%c72, %c0_65] : memref<200x512xf32, #tpu.memory_space<vmem>>, vector<8x71xf32>
      tpu.vector_store %arg11[%c72, %c0_65], %99 {strides = array<i32>} : memref<200x512xf32, #tpu.memory_space<vmem>>, vector<8x71xf32>,
      %101 = vector.extract_strided_slice %60 {offsets = [0, 0], sizes = [8, 71], strides = [1, 1]} : vector<8x128xf32> to vector<8x71xf32>
      %c80 = arith.constant 80 : index
      %c0_66 = arith.constant 0 : index
      %102 = vector.load %arg11[%c80, %c0_66] : memref<200x512xf32, #tpu.memory_space<vmem>>, vector<8x71xf32>
      tpu.vector_store %arg11[%c80, %c0_66], %101 {strides = array<i32>} : memref<200x512xf32, #tpu.memory_space<vmem>>, vector<8x71xf32>,
      %103 = vector.extract_strided_slice %60 {offsets = [0, 1], sizes = [8, 71], strides = [1, 1]} : vector<8x128xf32> to vector<8x71xf32>
      %c88 = arith.constant 88 : index
      %c0_67 = arith.constant 0 : index
      %104 = vector.load %arg11[%c88, %c0_67] : memref<200x512xf32, #tpu.memory_space<vmem>>, vector<8x71xf32>
      tpu.vector_store %arg11[%c88, %c0_67], %103 {strides = array<i32>} : memref<200x512xf32, #tpu.memory_space<vmem>>, vector<8x71xf32>,
      %105 = vector.extract_strided_slice %60 {offsets = [0, 2], sizes = [8, 71], strides = [1, 1]} : vector<8x128xf32> to vector<8x71xf32>
      %c96 = arith.constant 96 : index
      %c0_68 = arith.constant 0 : index
      %106 = vector.load %arg11[%c96, %c0_68] : memref<200x512xf32, #tpu.memory_space<vmem>>, vector<8x71xf32>
      tpu.vector_store %arg11[%c96, %c0_68], %105 {strides = array<i32>} : memref<200x512xf32, #tpu.memory_space<vmem>>, vector<8x71xf32>,
      %107 = vector.extract_strided_slice %60 {offsets = [0, 3], sizes = [8, 71], strides = [1, 1]} : vector<8x128xf32> to vector<8x71xf32>
      %c104 = arith.constant 104 : index
      %c0_69 = arith.constant 0 : index
      %108 = vector.load %arg11[%c104, %c0_69] : memref<200x512xf32, #tpu.memory_space<vmem>>, vector<8x71xf32>
      tpu.vector_store %arg11[%c104, %c0_69], %107 {strides = array<i32>} : memref<200x512xf32, #tpu.memory_space<vmem>>, vector<8x71xf32>,
      %109 = vector.extract_strided_slice %60 {offsets = [0, 4], sizes = [8, 71], strides = [1, 1]} : vector<8x128xf32> to vector<8x71xf32>
      %c112 = arith.constant 112 : index
      %c0_70 = arith.constant 0 : index
      %110 = vector.load %arg11[%c112, %c0_70] : memref<200x512xf32, #tpu.memory_space<vmem>>, vector<8x71xf32>
      tpu.vector_store %arg11[%c112, %c0_70], %109 {strides = array<i32>} : memref<200x512xf32, #tpu.memory_space<vmem>>, vector<8x71xf32>,
      %111 = vector.extract_strided_slice %64 {offsets = [0, 0], sizes = [8, 71], strides = [1, 1]} : vector<8x128xf32> to vector<8x71xf32>
      %c120 = arith.constant 120 : index
      %c0_71 = arith.constant 0 : index
      %112 = vector.load %arg11[%c120, %c0_71] : memref<200x512xf32, #tpu.memory_space<vmem>>, vector<8x71xf32>
      tpu.vector_store %arg11[%c120, %c0_71], %111 {strides = array<i32>} : memref<200x512xf32, #tpu.memory_space<vmem>>, vector<8x71xf32>,
      %113 = vector.extract_strided_slice %64 {offsets = [0, 1], sizes = [8, 71], strides = [1, 1]} : vector<8x128xf32> to vector<8x71xf32>
      %c128 = arith.constant 128 : index
      %c0_72 = arith.constant 0 : index
      %114 = vector.load %arg11[%c128, %c0_72] : memref<200x512xf32, #tpu.memory_space<vmem>>, vector<8x71xf32>
      tpu.vector_store %arg11[%c128, %c0_72], %113 {strides = array<i32>} : memref<200x512xf32, #tpu.memory_space<vmem>>, vector<8x71xf32>,
      %115 = vector.extract_strided_slice %64 {offsets = [0, 2], sizes = [8, 71], strides = [1, 1]} : vector<8x128xf32> to vector<8x71xf32>
      %c136 = arith.constant 136 : index
      %c0_73 = arith.constant 0 : index
      %116 = vector.load %arg11[%c136, %c0_73] : memref<200x512xf32, #tpu.memory_space<vmem>>, vector<8x71xf32>
      tpu.vector_store %arg11[%c136, %c0_73], %115 {strides = array<i32>} : memref<200x512xf32, #tpu.memory_space<vmem>>, vector<8x71xf32>,
      %117 = vector.extract_strided_slice %64 {offsets = [0, 3], sizes = [8, 71], strides = [1, 1]} : vector<8x128xf32> to vector<8x71xf32>
      %c144 = arith.constant 144 : index
      %c0_74 = arith.constant 0 : index
      %118 = vector.load %arg11[%c144, %c0_74] : memref<200x512xf32, #tpu.memory_space<vmem>>, vector<8x71xf32>
      tpu.vector_store %arg11[%c144, %c0_74], %117 {strides = array<i32>} : memref<200x512xf32, #tpu.memory_space<vmem>>, vector<8x71xf32>,
      %119 = vector.extract_strided_slice %64 {offsets = [0, 4], sizes = [8, 71], strides = [1, 1]} : vector<8x128xf32> to vector<8x71xf32>
      %c152 = arith.constant 152 : index
      %c0_75 = arith.constant 0 : index
      %120 = vector.load %arg11[%c152, %c0_75] : memref<200x512xf32, #tpu.memory_space<vmem>>, vector<8x71xf32>
      tpu.vector_store %arg11[%c152, %c0_75], %119 {strides = array<i32>} : memref<200x512xf32, #tpu.memory_space<vmem>>, vector<8x71xf32>,
      %121 = vector.extract_strided_slice %68 {offsets = [0, 0], sizes = [8, 71], strides = [1, 1]} : vector<8x128xf32> to vector<8x71xf32>
      %c160 = arith.constant 160 : index
      %c0_76 = arith.constant 0 : index
      %122 = vector.load %arg11[%c160, %c0_76] : memref<200x512xf32, #tpu.memory_space<vmem>>, vector<8x71xf32>
      tpu.vector_store %arg11[%c160, %c0_76], %121 {strides = array<i32>} : memref<200x512xf32, #tpu.memory_space<vmem>>, vector<8x71xf32>,
      %123 = vector.extract_strided_slice %68 {offsets = [0, 1], sizes = [8, 71], strides = [1, 1]} : vector<8x128xf32> to vector<8x71xf32>
      %c168 = arith.constant 168 : index
      %c0_77 = arith.constant 0 : index
      %124 = vector.load %arg11[%c168, %c0_77] : memref<200x512xf32, #tpu.memory_space<vmem>>, vector<8x71xf32>
      tpu.vector_store %arg11[%c168, %c0_77], %123 {strides = array<i32>} : memref<200x512xf32, #tpu.memory_space<vmem>>, vector<8x71xf32>,
      %125 = vector.extract_strided_slice %68 {offsets = [0, 2], sizes = [8, 71], strides = [1, 1]} : vector<8x128xf32> to vector<8x71xf32>
      %c176 = arith.constant 176 : index
      %c0_78 = arith.constant 0 : index
      %126 = vector.load %arg11[%c176, %c0_78] : memref<200x512xf32, #tpu.memory_space<vmem>>, vector<8x71xf32>
      tpu.vector_store %arg11[%c176, %c0_78], %125 {strides = array<i32>} : memref<200x512xf32, #tpu.memory_space<vmem>>, vector<8x71xf32>,
      %127 = vector.extract_strided_slice %68 {offsets = [0, 3], sizes = [8, 71], strides = [1, 1]} : vector<8x128xf32> to vector<8x71xf32>
      %c184 = arith.constant 184 : index
      %c0_79 = arith.constant 0 : index
      %128 = vector.load %arg11[%c184, %c0_79] : memref<200x512xf32, #tpu.memory_space<vmem>>, vector<8x71xf32>
      tpu.vector_store %arg11[%c184, %c0_79], %127 {strides = array<i32>} : memref<200x512xf32, #tpu.memory_space<vmem>>, vector<8x71xf32>,
      %129 = vector.extract_strided_slice %68 {offsets = [0, 4], sizes = [8, 71], strides = [1, 1]} : vector<8x128xf32> to vector<8x71xf32>
      %c192 = arith.constant 192 : index
      %c0_80 = arith.constant 0 : index
      %130 = vector.load %arg11[%c192, %c0_80] : memref<200x512xf32, #tpu.memory_space<vmem>>, vector<8x71xf32>
      tpu.vector_store %arg11[%c192, %c0_80], %129 {strides = array<i32>} : memref<200x512xf32, #tpu.memory_space<vmem>>, vector<8x71xf32>,
      %131 = vector.extract_strided_slice %56 {offsets = [0, 0], sizes = [8, 71], strides = [1, 1]} : vector<8x128xf32> to vector<8x71xf32>
      %c0_81 = arith.constant 0 : index
      %c128_82 = arith.constant 128 : index
      %132 = vector.load %arg11[%c0_81, %c128_82] : memref<200x512xf32, #tpu.memory_space<vmem>>, vector<8x71xf32>
      tpu.vector_store %arg11[%c0_81, %c128_82], %131 {strides = array<i32>} : memref<200x512xf32, #tpu.memory_space<vmem>>, vector<8x71xf32>,
      %133 = vector.extract_strided_slice %56 {offsets = [0, 1], sizes = [8, 71], strides = [1, 1]} : vector<8x128xf32> to vector<8x71xf32>
      %c8_83 = arith.constant 8 : index
      %c128_84 = arith.constant 128 : index
      %134 = vector.load %arg11[%c8_83, %c128_84] : memref<200x512xf32, #tpu.memory_space<vmem>>, vector<8x71xf32>
      tpu.vector_store %arg11[%c8_83, %c128_84], %133 {strides = array<i32>} : memref<200x512xf32, #tpu.memory_space<vmem>>, vector<8x71xf32>,
      %135 = vector.extract_strided_slice %56 {offsets = [0, 2], sizes = [8, 71], strides = [1, 1]} : vector<8x128xf32> to vector<8x71xf32>
      %c16_85 = arith.constant 16 : index
      %c128_86 = arith.constant 128 : index
      %136 = vector.load %arg11[%c16_85, %c128_86] : memref<200x512xf32, #tpu.memory_space<vmem>>, vector<8x71xf32>
      tpu.vector_store %arg11[%c16_85, %c128_86], %135 {strides = array<i32>} : memref<200x512xf32, #tpu.memory_space<vmem>>, vector<8x71xf32>,
      %137 = vector.extract_strided_slice %56 {offsets = [0, 3], sizes = [8, 71], strides = [1, 1]} : vector<8x128xf32> to vector<8x71xf32>
      %c24_87 = arith.constant 24 : index
      %c128_88 = arith.constant 128 : index
      %138 = vector.load %arg11[%c24_87, %c128_88] : memref<200x512xf32, #tpu.memory_space<vmem>>, vector<8x71xf32>
      tpu.vector_store %arg11[%c24_87, %c128_88], %137 {strides = array<i32>} : memref<200x512xf32, #tpu.memory_space<vmem>>, vector<8x71xf32>,
      %139 = vector.extract_strided_slice %56 {offsets = [0, 4], sizes = [8, 71], strides = [1, 1]} : vector<8x128xf32> to vector<8x71xf32>
      %c32_89 = arith.constant 32 : index
      %c128_90 = arith.constant 128 : index
      %140 = vector.load %arg11[%c32_89, %c128_90] : memref<200x512xf32, #tpu.memory_space<vmem>>, vector<8x71xf32>
      tpu.vector_store %arg11[%c32_89, %c128_90], %139 {strides = array<i32>} : memref<200x512xf32, #tpu.memory_space<vmem>>, vector<8x71xf32>,
      %141 = vector.extract_strided_slice %60 {offsets = [0, 0], sizes = [8, 71], strides = [1, 1]} : vector<8x128xf32> to vector<8x71xf32>
      %c40_91 = arith.constant 40 : index
      %c128_92 = arith.constant 128 : index
      %142 = vector.load %arg11[%c40_91, %c128_92] : memref<200x512xf32, #tpu.memory_space<vmem>>, vector<8x71xf32>
      tpu.vector_store %arg11[%c40_91, %c128_92], %141 {strides = array<i32>} : memref<200x512xf32, #tpu.memory_space<vmem>>, vector<8x71xf32>,
      %143 = vector.extract_strided_slice %60 {offsets = [0, 1], sizes = [8, 71], strides = [1, 1]} : vector<8x128xf32> to vector<8x71xf32>
      %c48_93 = arith.constant 48 : index
      %c128_94 = arith.constant 128 : index
      %144 = vector.load %arg11[%c48_93, %c128_94] : memref<200x512xf32, #tpu.memory_space<vmem>>, vector<8x71xf32>
      tpu.vector_store %arg11[%c48_93, %c128_94], %143 {strides = array<i32>} : memref<200x512xf32, #tpu.memory_space<vmem>>, vector<8x71xf32>,
      %145 = vector.extract_strided_slice %60 {offsets = [0, 2], sizes = [8, 71], strides = [1, 1]} : vector<8x128xf32> to vector<8x71xf32>
      %c56_95 = arith.constant 56 : index
      %c128_96 = arith.constant 128 : index
      %146 = vector.load %arg11[%c56_95, %c128_96] : memref<200x512xf32, #tpu.memory_space<vmem>>, vector<8x71xf32>
      tpu.vector_store %arg11[%c56_95, %c128_96], %145 {strides = array<i32>} : memref<200x512xf32, #tpu.memory_space<vmem>>, vector<8x71xf32>,
      %147 = vector.extract_strided_slice %60 {offsets = [0, 3], sizes = [8, 71], strides = [1, 1]} : vector<8x128xf32> to vector<8x71xf32>
      %c64_97 = arith.constant 64 : index
      %c128_98 = arith.constant 128 : index
      %148 = vector.load %arg11[%c64_97, %c128_98] : memref<200x512xf32, #tpu.memory_space<vmem>>, vector<8x71xf32>
      tpu.vector_store %arg11[%c64_97, %c128_98], %147 {strides = array<i32>} : memref<200x512xf32, #tpu.memory_space<vmem>>, vector<8x71xf32>,
      %149 = vector.extract_strided_slice %60 {offsets = [0, 4], sizes = [8, 71], strides = [1, 1]} : vector<8x128xf32> to vector<8x71xf32>
      %c72_99 = arith.constant 72 : index
      %c128_100 = arith.constant 128 : index
      %150 = vector.load %arg11[%c72_99, %c128_100] : memref<200x512xf32, #tpu.memory_space<vmem>>, vector<8x71xf32>
      tpu.vector_store %arg11[%c72_99, %c128_100], %149 {strides = array<i32>} : memref<200x512xf32, #tpu.memory_space<vmem>>, vector<8x71xf32>,
      %151 = vector.extract_strided_slice %64 {offsets = [0, 0], sizes = [8, 71], strides = [1, 1]} : vector<8x128xf32> to vector<8x71xf32>
      %c80_101 = arith.constant 80 : index
      %c128_102 = arith.constant 128 : index
      %152 = vector.load %arg11[%c80_101, %c128_102] : memref<200x512xf32, #tpu.memory_space<vmem>>, vector<8x71xf32>
      tpu.vector_store %arg11[%c80_101, %c128_102], %151 {strides = array<i32>} : memref<200x512xf32, #tpu.memory_space<vmem>>, vector<8x71xf32>,
      %153 = vector.extract_strided_slice %64 {offsets = [0, 1], sizes = [8, 71], strides = [1, 1]} : vector<8x128xf32> to vector<8x71xf32>
      %c88_103 = arith.constant 88 : index
      %c128_104 = arith.constant 128 : index
      %154 = vector.load %arg11[%c88_103, %c128_104] : memref<200x512xf32, #tpu.memory_space<vmem>>, vector<8x71xf32>
      tpu.vector_store %arg11[%c88_103, %c128_104], %153 {strides = array<i32>} : memref<200x512xf32, #tpu.memory_space<vmem>>, vector<8x71xf32>,
      %155 = vector.extract_strided_slice %64 {offsets = [0, 2], sizes = [8, 71], strides = [1, 1]} : vector<8x128xf32> to vector<8x71xf32>
      %c96_105 = arith.constant 96 : index
      %c128_106 = arith.constant 128 : index
      %156 = vector.load %arg11[%c96_105, %c128_106] : memref<200x512xf32, #tpu.memory_space<vmem>>, vector<8x71xf32>
      tpu.vector_store %arg11[%c96_105, %c128_106], %155 {strides = array<i32>} : memref<200x512xf32, #tpu.memory_space<vmem>>, vector<8x71xf32>,
      %157 = vector.extract_strided_slice %64 {offsets = [0, 3], sizes = [8, 71], strides = [1, 1]} : vector<8x128xf32> to vector<8x71xf32>
      %c104_107 = arith.constant 104 : index
      %c128_108 = arith.constant 128 : index
      %158 = vector.load %arg11[%c104_107, %c128_108] : memref<200x512xf32, #tpu.memory_space<vmem>>, vector<8x71xf32>
      tpu.vector_store %arg11[%c104_107, %c128_108], %157 {strides = array<i32>} : memref<200x512xf32, #tpu.memory_space<vmem>>, vector<8x71xf32>,
      %159 = vector.extract_strided_slice %64 {offsets = [0, 4], sizes = [8, 71], strides = [1, 1]} : vector<8x128xf32> to vector<8x71xf32>
      %c112_109 = arith.constant 112 : index
      %c128_110 = arith.constant 128 : index
      %160 = vector.load %arg11[%c112_109, %c128_110] : memref<200x512xf32, #tpu.memory_space<vmem>>, vector<8x71xf32>
      tpu.vector_store %arg11[%c112_109, %c128_110], %159 {strides = array<i32>} : memref<200x512xf32, #tpu.memory_space<vmem>>, vector<8x71xf32>,
      %161 = vector.extract_strided_slice %68 {offsets = [0, 0], sizes = [8, 71], strides = [1, 1]} : vector<8x128xf32> to vector<8x71xf32>
      %c120_111 = arith.constant 120 : index
      %c128_112 = arith.constant 128 : index
      %162 = vector.load %arg11[%c120_111, %c128_112] : memref<200x512xf32, #tpu.memory_space<vmem>>, vector<8x71xf32>
      tpu.vector_store %arg11[%c120_111, %c128_112], %161 {strides = array<i32>} : memref<200x512xf32, #tpu.memory_space<vmem>>, vector<8x71xf32>,
      %163 = vector.extract_strided_slice %68 {offsets = [0, 1], sizes = [8, 71], strides = [1, 1]} : vector<8x128xf32> to vector<8x71xf32>
      %c128_113 = arith.constant 128 : index
      %c128_114 = arith.constant 128 : index
      %164 = vector.load %arg11[%c128_113, %c128_114] : memref<200x512xf32, #tpu.memory_space<vmem>>, vector<8x71xf32>
      tpu.vector_store %arg11[%c128_113, %c128_114], %163 {strides = array<i32>} : memref<200x512xf32, #tpu.memory_space<vmem>>, vector<8x71xf32>,
      %165 = vector.extract_strided_slice %68 {offsets = [0, 2], sizes = [8, 71], strides = [1, 1]} : vector<8x128xf32> to vector<8x71xf32>
      %c136_115 = arith.constant 136 : index
      %c128_116 = arith.constant 128 : index
      %166 = vector.load %arg11[%c136_115, %c128_116] : memref<200x512xf32, #tpu.memory_space<vmem>>, vector<8x71xf32>
      tpu.vector_store %arg11[%c136_115, %c128_116], %165 {strides = array<i32>} : memref<200x512xf32, #tpu.memory_space<vmem>>, vector<8x71xf32>,
      %167 = vector.extract_strided_slice %68 {offsets = [0, 3], sizes = [8, 71], strides = [1, 1]} : vector<8x128xf32> to vector<8x71xf32>
      %c144_117 = arith.constant 144 : index
      %c128_118 = arith.constant 128 : index
      %168 = vector.load %arg11[%c144_117, %c128_118] : memref<200x512xf32, #tpu.memory_space<vmem>>, vector<8x71xf32>
      tpu.vector_store %arg11[%c144_117, %c128_118], %167 {strides = array<i32>} : memref<200x512xf32, #tpu.memory_space<vmem>>, vector<8x71xf32>,
      %169 = vector.extract_strided_slice %68 {offsets = [0, 4], sizes = [8, 71], strides = [1, 1]} : vector<8x128xf32> to vector<8x71xf32>
      %c152_119 = arith.constant 152 : index
      %c128_120 = arith.constant 128 : index
      %170 = vector.load %arg11[%c152_119, %c128_120] : memref<200x512xf32, #tpu.memory_space<vmem>>, vector<8x71xf32>
      tpu.vector_store %arg11[%c152_119, %c128_120], %169 {strides = array<i32>} : memref<200x512xf32, #tpu.memory_space<vmem>>, vector<8x71xf32>,
      %171 = vector.extract_strided_slice %72 {offsets = [0, 0], sizes = [8, 71], strides = [1, 1]} : vector<8x128xf32> to vector<8x71xf32>
      %c160_121 = arith.constant 160 : index
      %c128_122 = arith.constant 128 : index
      %172 = vector.load %arg11[%c160_121, %c128_122] : memref<200x512xf32, #tpu.memory_space<vmem>>, vector<8x71xf32>
      tpu.vector_store %arg11[%c160_121, %c128_122], %171 {strides = array<i32>} : memref<200x512xf32, #tpu.memory_space<vmem>>, vector<8x71xf32>,
      %173 = vector.extract_strided_slice %72 {offsets = [0, 1], sizes = [8, 71], strides = [1, 1]} : vector<8x128xf32> to vector<8x71xf32>
      %c168_123 = arith.constant 168 : index
      %c128_124 = arith.constant 128 : index
      %174 = vector.load %arg11[%c168_123, %c128_124] : memref<200x512xf32, #tpu.memory_space<vmem>>, vector<8x71xf32>
      tpu.vector_store %arg11[%c168_123, %c128_124], %173 {strides = array<i32>} : memref<200x512xf32, #tpu.memory_space<vmem>>, vector<8x71xf32>,
      %175 = vector.extract_strided_slice %72 {offsets = [0, 2], sizes = [8, 71], strides = [1, 1]} : vector<8x128xf32> to vector<8x71xf32>
      %c176_125 = arith.constant 176 : index
      %c128_126 = arith.constant 128 : index
      %176 = vector.load %arg11[%c176_125, %c128_126] : memref<200x512xf32, #tpu.memory_space<vmem>>, vector<8x71xf32>
      tpu.vector_store %arg11[%c176_125, %c128_126], %175 {strides = array<i32>} : memref<200x512xf32, #tpu.memory_space<vmem>>, vector<8x71xf32>,
      %177 = vector.extract_strided_slice %72 {offsets = [0, 3], sizes = [8, 71], strides = [1, 1]} : vector<8x128xf32> to vector<8x71xf32>
      %c184_127 = arith.constant 184 : index
      %c128_128 = arith.constant 128 : index
      %178 = vector.load %arg11[%c184_127, %c128_128] : memref<200x512xf32, #tpu.memory_space<vmem>>, vector<8x71xf32>
      tpu.vector_store %arg11[%c184_127, %c128_128], %177 {strides = array<i32>} : memref<200x512xf32, #tpu.memory_space<vmem>>, vector<8x71xf32>,
      %179 = vector.extract_strided_slice %72 {offsets = [0, 4], sizes = [8, 71], strides = [1, 1]} : vector<8x128xf32> to vector<8x71xf32>
      %c192_129 = arith.constant 192 : index
      %c128_130 = arith.constant 128 : index
      %180 = vector.load %arg11[%c192_129, %c128_130] : memref<200x512xf32, #tpu.memory_space<vmem>>, vector<8x71xf32>
      tpu.vector_store %arg11[%c192_129, %c128_130], %179 {strides = array<i32>} : memref<200x512xf32, #tpu.memory_space<vmem>>, vector<8x71xf32>,
      %181 = vector.extract_strided_slice %60 {offsets = [0, 0], sizes = [8, 71], strides = [1, 1]} : vector<8x128xf32> to vector<8x71xf32>
      %c0_131 = arith.constant 0 : index
      %c256 = arith.constant 256 : index
      %182 = vector.load %arg11[%c0_131, %c256] : memref<200x512xf32, #tpu.memory_space<vmem>>, vector<8x71xf32>
      tpu.vector_store %arg11[%c0_131, %c256], %181 {strides = array<i32>} : memref<200x512xf32, #tpu.memory_space<vmem>>, vector<8x71xf32>,
      %183 = vector.extract_strided_slice %60 {offsets = [0, 1], sizes = [8, 71], strides = [1, 1]} : vector<8x128xf32> to vector<8x71xf32>
      %c8_132 = arith.constant 8 : index
      %c256_133 = arith.constant 256 : index
      %184 = vector.load %arg11[%c8_132, %c256_133] : memref<200x512xf32, #tpu.memory_space<vmem>>, vector<8x71xf32>
      tpu.vector_store %arg11[%c8_132, %c256_133], %183 {strides = array<i32>} : memref<200x512xf32, #tpu.memory_space<vmem>>, vector<8x71xf32>,
      %185 = vector.extract_strided_slice %60 {offsets = [0, 2], sizes = [8, 71], strides = [1, 1]} : vector<8x128xf32> to vector<8x71xf32>
      %c16_134 = arith.constant 16 : index
      %c256_135 = arith.constant 256 : index
      %186 = vector.load %arg11[%c16_134, %c256_135] : memref<200x512xf32, #tpu.memory_space<vmem>>, vector<8x71xf32>
      tpu.vector_store %arg11[%c16_134, %c256_135], %185 {strides = array<i32>} : memref<200x512xf32, #tpu.memory_space<vmem>>, vector<8x71xf32>,
      %187 = vector.extract_strided_slice %60 {offsets = [0, 3], sizes = [8, 71], strides = [1, 1]} : vector<8x128xf32> to vector<8x71xf32>
      %c24_136 = arith.constant 24 : index
      %c256_137 = arith.constant 256 : index
      %188 = vector.load %arg11[%c24_136, %c256_137] : memref<200x512xf32, #tpu.memory_space<vmem>>, vector<8x71xf32>
      tpu.vector_store %arg11[%c24_136, %c256_137], %187 {strides = array<i32>} : memref<200x512xf32, #tpu.memory_space<vmem>>, vector<8x71xf32>,
      %189 = vector.extract_strided_slice %60 {offsets = [0, 4], sizes = [8, 71], strides = [1, 1]} : vector<8x128xf32> to vector<8x71xf32>
      %c32_138 = arith.constant 32 : index
      %c256_139 = arith.constant 256 : index
      %190 = vector.load %arg11[%c32_138, %c256_139] : memref<200x512xf32, #tpu.memory_space<vmem>>, vector<8x71xf32>
      tpu.vector_store %arg11[%c32_138, %c256_139], %189 {strides = array<i32>} : memref<200x512xf32, #tpu.memory_space<vmem>>, vector<8x71xf32>,
      %191 = vector.extract_strided_slice %64 {offsets = [0, 0], sizes = [8, 71], strides = [1, 1]} : vector<8x128xf32> to vector<8x71xf32>
      %c40_140 = arith.constant 40 : index
      %c256_141 = arith.constant 256 : index
      %192 = vector.load %arg11[%c40_140, %c256_141] : memref<200x512xf32, #tpu.memory_space<vmem>>, vector<8x71xf32>
      tpu.vector_store %arg11[%c40_140, %c256_141], %191 {strides = array<i32>} : memref<200x512xf32, #tpu.memory_space<vmem>>, vector<8x71xf32>,
      %193 = vector.extract_strided_slice %64 {offsets = [0, 1], sizes = [8, 71], strides = [1, 1]} : vector<8x128xf32> to vector<8x71xf32>
      %c48_142 = arith.constant 48 : index
      %c256_143 = arith.constant 256 : index
      %194 = vector.load %arg11[%c48_142, %c256_143] : memref<200x512xf32, #tpu.memory_space<vmem>>, vector<8x71xf32>
      tpu.vector_store %arg11[%c48_142, %c256_143], %193 {strides = array<i32>} : memref<200x512xf32, #tpu.memory_space<vmem>>, vector<8x71xf32>,
      %195 = vector.extract_strided_slice %64 {offsets = [0, 2], sizes = [8, 71], strides = [1, 1]} : vector<8x128xf32> to vector<8x71xf32>
      %c56_144 = arith.constant 56 : index
      %c256_145 = arith.constant 256 : index
      %196 = vector.load %arg11[%c56_144, %c256_145] : memref<200x512xf32, #tpu.memory_space<vmem>>, vector<8x71xf32>
      tpu.vector_store %arg11[%c56_144, %c256_145], %195 {strides = array<i32>} : memref<200x512xf32, #tpu.memory_space<vmem>>, vector<8x71xf32>,
      %197 = vector.extract_strided_slice %64 {offsets = [0, 3], sizes = [8, 71], strides = [1, 1]} : vector<8x128xf32> to vector<8x71xf32>
      %c64_146 = arith.constant 64 : index
      %c256_147 = arith.constant 256 : index
      %198 = vector.load %arg11[%c64_146, %c256_147] : memref<200x512xf32, #tpu.memory_space<vmem>>, vector<8x71xf32>
      tpu.vector_store %arg11[%c64_146, %c256_147], %197 {strides = array<i32>} : memref<200x512xf32, #tpu.memory_space<vmem>>, vector<8x71xf32>,
      %199 = vector.extract_strided_slice %64 {offsets = [0, 4], sizes = [8, 71], strides = [1, 1]} : vector<8x128xf32> to vector<8x71xf32>
      %c72_148 = arith.constant 72 : index
      %c256_149 = arith.constant 256 : index
      %200 = vector.load %arg11[%c72_148, %c256_149] : memref<200x512xf32, #tpu.memory_space<vmem>>, vector<8x71xf32>
      tpu.vector_store %arg11[%c72_148, %c256_149], %199 {strides = array<i32>} : memref<200x512xf32, #tpu.memory_space<vmem>>, vector<8x71xf32>,
      %201 = vector.extract_strided_slice %68 {offsets = [0, 0], sizes = [8, 71], strides = [1, 1]} : vector<8x128xf32> to vector<8x71xf32>
      %c80_150 = arith.constant 80 : index
      %c256_151 = arith.constant 256 : index
      %202 = vector.load %arg11[%c80_150, %c256_151] : memref<200x512xf32, #tpu.memory_space<vmem>>, vector<8x71xf32>
      tpu.vector_store %arg11[%c80_150, %c256_151], %201 {strides = array<i32>} : memref<200x512xf32, #tpu.memory_space<vmem>>, vector<8x71xf32>,
      %203 = vector.extract_strided_slice %68 {offsets = [0, 1], sizes = [8, 71], strides = [1, 1]} : vector<8x128xf32> to vector<8x71xf32>
      %c88_152 = arith.constant 88 : index
      %c256_153 = arith.constant 256 : index
      %204 = vector.load %arg11[%c88_152, %c256_153] : memref<200x512xf32, #tpu.memory_space<vmem>>, vector<8x71xf32>
      tpu.vector_store %arg11[%c88_152, %c256_153], %203 {strides = array<i32>} : memref<200x512xf32, #tpu.memory_space<vmem>>, vector<8x71xf32>,
      %205 = vector.extract_strided_slice %68 {offsets = [0, 2], sizes = [8, 71], strides = [1, 1]} : vector<8x128xf32> to vector<8x71xf32>
      %c96_154 = arith.constant 96 : index
      %c256_155 = arith.constant 256 : index
      %206 = vector.load %arg11[%c96_154, %c256_155] : memref<200x512xf32, #tpu.memory_space<vmem>>, vector<8x71xf32>
      tpu.vector_store %arg11[%c96_154, %c256_155], %205 {strides = array<i32>} : memref<200x512xf32, #tpu.memory_space<vmem>>, vector<8x71xf32>,
      %207 = vector.extract_strided_slice %68 {offsets = [0, 3], sizes = [8, 71], strides = [1, 1]} : vector<8x128xf32> to vector<8x71xf32>
      %c104_156 = arith.constant 104 : index
      %c256_157 = arith.constant 256 : index
      %208 = vector.load %arg11[%c104_156, %c256_157] : memref<200x512xf32, #tpu.memory_space<vmem>>, vector<8x71xf32>
      tpu.vector_store %arg11[%c104_156, %c256_157], %207 {strides = array<i32>} : memref<200x512xf32, #tpu.memory_space<vmem>>, vector<8x71xf32>,
      %209 = vector.extract_strided_slice %68 {offsets = [0, 4], sizes = [8, 71], strides = [1, 1]} : vector<8x128xf32> to vector<8x71xf32>
      %c112_158 = arith.constant 112 : index
      %c256_159 = arith.constant 256 : index
      %210 = vector.load %arg11[%c112_158, %c256_159] : memref<200x512xf32, #tpu.memory_space<vmem>>, vector<8x71xf32>
      tpu.vector_store %arg11[%c112_158, %c256_159], %209 {strides = array<i32>} : memref<200x512xf32, #tpu.memory_space<vmem>>, vector<8x71xf32>,
      %211 = vector.extract_strided_slice %72 {offsets = [0, 0], sizes = [8, 71], strides = [1, 1]} : vector<8x128xf32> to vector<8x71xf32>
      %c120_160 = arith.constant 120 : index
      %c256_161 = arith.constant 256 : index
      %212 = vector.load %arg11[%c120_160, %c256_161] : memref<200x512xf32, #tpu.memory_space<vmem>>, vector<8x71xf32>
      tpu.vector_store %arg11[%c120_160, %c256_161], %211 {strides = array<i32>} : memref<200x512xf32, #tpu.memory_space<vmem>>, vector<8x71xf32>,
      %213 = vector.extract_strided_slice %72 {offsets = [0, 1], sizes = [8, 71], strides = [1, 1]} : vector<8x128xf32> to vector<8x71xf32>
      %c128_162 = arith.constant 128 : index
      %c256_163 = arith.constant 256 : index
      %214 = vector.load %arg11[%c128_162, %c256_163] : memref<200x512xf32, #tpu.memory_space<vmem>>, vector<8x71xf32>
      tpu.vector_store %arg11[%c128_162, %c256_163], %213 {strides = array<i32>} : memref<200x512xf32, #tpu.memory_space<vmem>>, vector<8x71xf32>,
      %215 = vector.extract_strided_slice %72 {offsets = [0, 2], sizes = [8, 71], strides = [1, 1]} : vector<8x128xf32> to vector<8x71xf32>
      %c136_164 = arith.constant 136 : index
      %c256_165 = arith.constant 256 : index
      %216 = vector.load %arg11[%c136_164, %c256_165] : memref<200x512xf32, #tpu.memory_space<vmem>>, vector<8x71xf32>
      tpu.vector_store %arg11[%c136_164, %c256_165], %215 {strides = array<i32>} : memref<200x512xf32, #tpu.memory_space<vmem>>, vector<8x71xf32>,
      %217 = vector.extract_strided_slice %72 {offsets = [0, 3], sizes = [8, 71], strides = [1, 1]} : vector<8x128xf32> to vector<8x71xf32>
      %c144_166 = arith.constant 144 : index
      %c256_167 = arith.constant 256 : index
      %218 = vector.load %arg11[%c144_166, %c256_167] : memref<200x512xf32, #tpu.memory_space<vmem>>, vector<8x71xf32>
      tpu.vector_store %arg11[%c144_166, %c256_167], %217 {strides = array<i32>} : memref<200x512xf32, #tpu.memory_space<vmem>>, vector<8x71xf32>,
      %219 = vector.extract_strided_slice %72 {offsets = [0, 4], sizes = [8, 71], strides = [1, 1]} : vector<8x128xf32> to vector<8x71xf32>
      %c152_168 = arith.constant 152 : index
      %c256_169 = arith.constant 256 : index
      %220 = vector.load %arg11[%c152_168, %c256_169] : memref<200x512xf32, #tpu.memory_space<vmem>>, vector<8x71xf32>
      tpu.vector_store %arg11[%c152_168, %c256_169], %219 {strides = array<i32>} : memref<200x512xf32, #tpu.memory_space<vmem>>, vector<8x71xf32>,
      %221 = vector.extract_strided_slice %76 {offsets = [0, 0], sizes = [8, 71], strides = [1, 1]} : vector<8x128xf32> to vector<8x71xf32>
      %c160_170 = arith.constant 160 : index
      %c256_171 = arith.constant 256 : index
      %222 = vector.load %arg11[%c160_170, %c256_171] : memref<200x512xf32, #tpu.memory_space<vmem>>, vector<8x71xf32>
      tpu.vector_store %arg11[%c160_170, %c256_171], %221 {strides = array<i32>} : memref<200x512xf32, #tpu.memory_space<vmem>>, vector<8x71xf32>,
      %223 = vector.extract_strided_slice %76 {offsets = [0, 1], sizes = [8, 71], strides = [1, 1]} : vector<8x128xf32> to vector<8x71xf32>
      %c168_172 = arith.constant 168 : index
      %c256_173 = arith.constant 256 : index
      %224 = vector.load %arg11[%c168_172, %c256_173] : memref<200x512xf32, #tpu.memory_space<vmem>>, vector<8x71xf32>
      tpu.vector_store %arg11[%c168_172, %c256_173], %223 {strides = array<i32>} : memref<200x512xf32, #tpu.memory_space<vmem>>, vector<8x71xf32>,
      %225 = vector.extract_strided_slice %76 {offsets = [0, 2], sizes = [8, 71], strides = [1, 1]} : vector<8x128xf32> to vector<8x71xf32>
      %c176_174 = arith.constant 176 : index
      %c256_175 = arith.constant 256 : index
      %226 = vector.load %arg11[%c176_174, %c256_175] : memref<200x512xf32, #tpu.memory_space<vmem>>, vector<8x71xf32>
      tpu.vector_store %arg11[%c176_174, %c256_175], %225 {strides = array<i32>} : memref<200x512xf32, #tpu.memory_space<vmem>>, vector<8x71xf32>,
      %227 = vector.extract_strided_slice %76 {offsets = [0, 3], sizes = [8, 71], strides = [1, 1]} : vector<8x128xf32> to vector<8x71xf32>
      %c184_176 = arith.constant 184 : index
      %c256_177 = arith.constant 256 : index
      %228 = vector.load %arg11[%c184_176, %c256_177] : memref<200x512xf32, #tpu.memory_space<vmem>>, vector<8x71xf32>
      tpu.vector_store %arg11[%c184_176, %c256_177], %227 {strides = array<i32>} : memref<200x512xf32, #tpu.memory_space<vmem>>, vector<8x71xf32>,
      %229 = vector.extract_strided_slice %76 {offsets = [0, 4], sizes = [8, 71], strides = [1, 1]} : vector<8x128xf32> to vector<8x71xf32>
      %c192_178 = arith.constant 192 : index
      %c256_179 = arith.constant 256 : index
      %230 = vector.load %arg11[%c192_178, %c256_179] : memref<200x512xf32, #tpu.memory_space<vmem>>, vector<8x71xf32>
      tpu.vector_store %arg11[%c192_178, %c256_179], %229 {strides = array<i32>} : memref<200x512xf32, #tpu.memory_space<vmem>>, vector<8x71xf32>,
      %231 = vector.extract_strided_slice %64 {offsets = [0, 0], sizes = [8, 71], strides = [1, 1]} : vector<8x128xf32> to vector<8x71xf32>
      %c0_180 = arith.constant 0 : index
      %c384 = arith.constant 384 : index
      %232 = vector.load %arg11[%c0_180, %c384] : memref<200x512xf32, #tpu.memory_space<vmem>>, vector<8x71xf32>
      tpu.vector_store %arg11[%c0_180, %c384], %231 {strides = array<i32>} : memref<200x512xf32, #tpu.memory_space<vmem>>, vector<8x71xf32>,
      %233 = vector.extract_strided_slice %64 {offsets = [0, 1], sizes = [8, 71], strides = [1, 1]} : vector<8x128xf32> to vector<8x71xf32>
      %c8_181 = arith.constant 8 : index
      %c384_182 = arith.constant 384 : index
      %234 = vector.load %arg11[%c8_181, %c384_182] : memref<200x512xf32, #tpu.memory_space<vmem>>, vector<8x71xf32>
      tpu.vector_store %arg11[%c8_181, %c384_182], %233 {strides = array<i32>} : memref<200x512xf32, #tpu.memory_space<vmem>>, vector<8x71xf32>,
      %235 = vector.extract_strided_slice %64 {offsets = [0, 2], sizes = [8, 71], strides = [1, 1]} : vector<8x128xf32> to vector<8x71xf32>
      %c16_183 = arith.constant 16 : index
      %c384_184 = arith.constant 384 : index
      %236 = vector.load %arg11[%c16_183, %c384_184] : memref<200x512xf32, #tpu.memory_space<vmem>>, vector<8x71xf32>
      tpu.vector_store %arg11[%c16_183, %c384_184], %235 {strides = array<i32>} : memref<200x512xf32, #tpu.memory_space<vmem>>, vector<8x71xf32>,
      %237 = vector.extract_strided_slice %64 {offsets = [0, 3], sizes = [8, 71], strides = [1, 1]} : vector<8x128xf32> to vector<8x71xf32>
      %c24_185 = arith.constant 24 : index
      %c384_186 = arith.constant 384 : index
      %238 = vector.load %arg11[%c24_185, %c384_186] : memref<200x512xf32, #tpu.memory_space<vmem>>, vector<8x71xf32>
      tpu.vector_store %arg11[%c24_185, %c384_186], %237 {strides = array<i32>} : memref<200x512xf32, #tpu.memory_space<vmem>>, vector<8x71xf32>,
      %239 = vector.extract_strided_slice %64 {offsets = [0, 4], sizes = [8, 71], strides = [1, 1]} : vector<8x128xf32> to vector<8x71xf32>
      %c32_187 = arith.constant 32 : index
      %c384_188 = arith.constant 384 : index
      %240 = vector.load %arg11[%c32_187, %c384_188] : memref<200x512xf32, #tpu.memory_space<vmem>>, vector<8x71xf32>
      tpu.vector_store %arg11[%c32_187, %c384_188], %239 {strides = array<i32>} : memref<200x512xf32, #tpu.memory_space<vmem>>, vector<8x71xf32>,
      %241 = vector.extract_strided_slice %68 {offsets = [0, 0], sizes = [8, 71], strides = [1, 1]} : vector<8x128xf32> to vector<8x71xf32>
      %c40_189 = arith.constant 40 : index
      %c384_190 = arith.constant 384 : index
      %242 = vector.load %arg11[%c40_189, %c384_190] : memref<200x512xf32, #tpu.memory_space<vmem>>, vector<8x71xf32>
      tpu.vector_store %arg11[%c40_189, %c384_190], %241 {strides = array<i32>} : memref<200x512xf32, #tpu.memory_space<vmem>>, vector<8x71xf32>,
      %243 = vector.extract_strided_slice %68 {offsets = [0, 1], sizes = [8, 71], strides = [1, 1]} : vector<8x128xf32> to vector<8x71xf32>
      %c48_191 = arith.constant 48 : index
      %c384_192 = arith.constant 384 : index
      %244 = vector.load %arg11[%c48_191, %c384_192] : memref<200x512xf32, #tpu.memory_space<vmem>>, vector<8x71xf32>
      tpu.vector_store %arg11[%c48_191, %c384_192], %243 {strides = array<i32>} : memref<200x512xf32, #tpu.memory_space<vmem>>, vector<8x71xf32>,
      %245 = vector.extract_strided_slice %68 {offsets = [0, 2], sizes = [8, 71], strides = [1, 1]} : vector<8x128xf32> to vector<8x71xf32>
      %c56_193 = arith.constant 56 : index
      %c384_194 = arith.constant 384 : index
      %246 = vector.load %arg11[%c56_193, %c384_194] : memref<200x512xf32, #tpu.memory_space<vmem>>, vector<8x71xf32>
      tpu.vector_store %arg11[%c56_193, %c384_194], %245 {strides = array<i32>} : memref<200x512xf32, #tpu.memory_space<vmem>>, vector<8x71xf32>,
      %247 = vector.extract_strided_slice %68 {offsets = [0, 3], sizes = [8, 71], strides = [1, 1]} : vector<8x128xf32> to vector<8x71xf32>
      %c64_195 = arith.constant 64 : index
      %c384_196 = arith.constant 384 : index
      %248 = vector.load %arg11[%c64_195, %c384_196] : memref<200x512xf32, #tpu.memory_space<vmem>>, vector<8x71xf32>
      tpu.vector_store %arg11[%c64_195, %c384_196], %247 {strides = array<i32>} : memref<200x512xf32, #tpu.memory_space<vmem>>, vector<8x71xf32>,
      %249 = vector.extract_strided_slice %68 {offsets = [0, 4], sizes = [8, 71], strides = [1, 1]} : vector<8x128xf32> to vector<8x71xf32>
      %c72_197 = arith.constant 72 : index
      %c384_198 = arith.constant 384 : index
      %250 = vector.load %arg11[%c72_197, %c384_198] : memref<200x512xf32, #tpu.memory_space<vmem>>, vector<8x71xf32>
      tpu.vector_store %arg11[%c72_197, %c384_198], %249 {strides = array<i32>} : memref<200x512xf32, #tpu.memory_space<vmem>>, vector<8x71xf32>,
      %251 = vector.extract_strided_slice %72 {offsets = [0, 0], sizes = [8, 71], strides = [1, 1]} : vector<8x128xf32> to vector<8x71xf32>
      %c80_199 = arith.constant 80 : index
      %c384_200 = arith.constant 384 : index
      %252 = vector.load %arg11[%c80_199, %c384_200] : memref<200x512xf32, #tpu.memory_space<vmem>>, vector<8x71xf32>
      tpu.vector_store %arg11[%c80_199, %c384_200], %251 {strides = array<i32>} : memref<200x512xf32, #tpu.memory_space<vmem>>, vector<8x71xf32>,
      %253 = vector.extract_strided_slice %72 {offsets = [0, 1], sizes = [8, 71], strides = [1, 1]} : vector<8x128xf32> to vector<8x71xf32>
      %c88_201 = arith.constant 88 : index
      %c384_202 = arith.constant 384 : index
      %254 = vector.load %arg11[%c88_201, %c384_202] : memref<200x512xf32, #tpu.memory_space<vmem>>, vector<8x71xf32>
      tpu.vector_store %arg11[%c88_201, %c384_202], %253 {strides = array<i32>} : memref<200x512xf32, #tpu.memory_space<vmem>>, vector<8x71xf32>,
      %255 = vector.extract_strided_slice %72 {offsets = [0, 2], sizes = [8, 71], strides = [1, 1]} : vector<8x128xf32> to vector<8x71xf32>
      %c96_203 = arith.constant 96 : index
      %c384_204 = arith.constant 384 : index
      %256 = vector.load %arg11[%c96_203, %c384_204] : memref<200x512xf32, #tpu.memory_space<vmem>>, vector<8x71xf32>
      tpu.vector_store %arg11[%c96_203, %c384_204], %255 {strides = array<i32>} : memref<200x512xf32, #tpu.memory_space<vmem>>, vector<8x71xf32>,
      %257 = vector.extract_strided_slice %72 {offsets = [0, 3], sizes = [8, 71], strides = [1, 1]} : vector<8x128xf32> to vector<8x71xf32>
      %c104_205 = arith.constant 104 : index
      %c384_206 = arith.constant 384 : index
      %258 = vector.load %arg11[%c104_205, %c384_206] : memref<200x512xf32, #tpu.memory_space<vmem>>, vector<8x71xf32>
      tpu.vector_store %arg11[%c104_205, %c384_206], %257 {strides = array<i32>} : memref<200x512xf32, #tpu.memory_space<vmem>>, vector<8x71xf32>,
      %259 = vector.extract_strided_slice %72 {offsets = [0, 4], sizes = [8, 71], strides = [1, 1]} : vector<8x128xf32> to vector<8x71xf32>
      %c112_207 = arith.constant 112 : index
      %c384_208 = arith.constant 384 : index
      %260 = vector.load %arg11[%c112_207, %c384_208] : memref<200x512xf32, #tpu.memory_space<vmem>>, vector<8x71xf32>
      tpu.vector_store %arg11[%c112_207, %c384_208], %259 {strides = array<i32>} : memref<200x512xf32, #tpu.memory_space<vmem>>, vector<8x71xf32>,
      %261 = vector.extract_strided_slice %76 {offsets = [0, 0], sizes = [8, 71], strides = [1, 1]} : vector<8x128xf32> to vector<8x71xf32>
      %c120_209 = arith.constant 120 : index
      %c384_210 = arith.constant 384 : index
      %262 = vector.load %arg11[%c120_209, %c384_210] : memref<200x512xf32, #tpu.memory_space<vmem>>, vector<8x71xf32>
      tpu.vector_store %arg11[%c120_209, %c384_210], %261 {strides = array<i32>} : memref<200x512xf32, #tpu.memory_space<vmem>>, vector<8x71xf32>,
      %263 = vector.extract_strided_slice %76 {offsets = [0, 1], sizes = [8, 71], strides = [1, 1]} : vector<8x128xf32> to vector<8x71xf32>
      %c128_211 = arith.constant 128 : index
      %c384_212 = arith.constant 384 : index
      %264 = vector.load %arg11[%c128_211, %c384_212] : memref<200x512xf32, #tpu.memory_space<vmem>>, vector<8x71xf32>
      tpu.vector_store %arg11[%c128_211, %c384_212], %263 {strides = array<i32>} : memref<200x512xf32, #tpu.memory_space<vmem>>, vector<8x71xf32>,
      %265 = vector.extract_strided_slice %76 {offsets = [0, 2], sizes = [8, 71], strides = [1, 1]} : vector<8x128xf32> to vector<8x71xf32>
      %c136_213 = arith.constant 136 : index
      %c384_214 = arith.constant 384 : index
      %266 = vector.load %arg11[%c136_213, %c384_214] : memref<200x512xf32, #tpu.memory_space<vmem>>, vector<8x71xf32>
      tpu.vector_store %arg11[%c136_213, %c384_214], %265 {strides = array<i32>} : memref<200x512xf32, #tpu.memory_space<vmem>>, vector<8x71xf32>,
      %267 = vector.extract_strided_slice %76 {offsets = [0, 3], sizes = [8, 71], strides = [1, 1]} : vector<8x128xf32> to vector<8x71xf32>
      %c144_215 = arith.constant 144 : index
      %c384_216 = arith.constant 384 : index
      %268 = vector.load %arg11[%c144_215, %c384_216] : memref<200x512xf32, #tpu.memory_space<vmem>>, vector<8x71xf32>
      tpu.vector_store %arg11[%c144_215, %c384_216], %267 {strides = array<i32>} : memref<200x512xf32, #tpu.memory_space<vmem>>, vector<8x71xf32>,
      %269 = vector.extract_strided_slice %76 {offsets = [0, 4], sizes = [8, 71], strides = [1, 1]} : vector<8x128xf32> to vector<8x71xf32>
      %c152_217 = arith.constant 152 : index
      %c384_218 = arith.constant 384 : index
      %270 = vector.load %arg11[%c152_217, %c384_218] : memref<200x512xf32, #tpu.memory_space<vmem>>, vector<8x71xf32>
      tpu.vector_store %arg11[%c152_217, %c384_218], %269 {strides = array<i32>} : memref<200x512xf32, #tpu.memory_space<vmem>>, vector<8x71xf32>,
      %271 = vector.extract_strided_slice %80 {offsets = [0, 0], sizes = [8, 71], strides = [1, 1]} : vector<8x128xf32> to vector<8x71xf32>
      %c160_219 = arith.constant 160 : index
      %c384_220 = arith.constant 384 : index
      %272 = vector.load %arg11[%c160_219, %c384_220] : memref<200x512xf32, #tpu.memory_space<vmem>>, vector<8x71xf32>
      tpu.vector_store %arg11[%c160_219, %c384_220], %271 {strides = array<i32>} : memref<200x512xf32, #tpu.memory_space<vmem>>, vector<8x71xf32>,
      %273 = vector.extract_strided_slice %80 {offsets = [0, 1], sizes = [8, 71], strides = [1, 1]} : vector<8x128xf32> to vector<8x71xf32>
      %c168_221 = arith.constant 168 : index
      %c384_222 = arith.constant 384 : index
      %274 = vector.load %arg11[%c168_221, %c384_222] : memref<200x512xf32, #tpu.memory_space<vmem>>, vector<8x71xf32>
      tpu.vector_store %arg11[%c168_221, %c384_222], %273 {strides = array<i32>} : memref<200x512xf32, #tpu.memory_space<vmem>>, vector<8x71xf32>,
      %275 = vector.extract_strided_slice %80 {offsets = [0, 2], sizes = [8, 71], strides = [1, 1]} : vector<8x128xf32> to vector<8x71xf32>
      %c176_223 = arith.constant 176 : index
      %c384_224 = arith.constant 384 : index
      %276 = vector.load %arg11[%c176_223, %c384_224] : memref<200x512xf32, #tpu.memory_space<vmem>>, vector<8x71xf32>
      tpu.vector_store %arg11[%c176_223, %c384_224], %275 {strides = array<i32>} : memref<200x512xf32, #tpu.memory_space<vmem>>, vector<8x71xf32>,
      %277 = vector.extract_strided_slice %80 {offsets = [0, 3], sizes = [8, 71], strides = [1, 1]} : vector<8x128xf32> to vector<8x71xf32>
      %c184_225 = arith.constant 184 : index
      %c384_226 = arith.constant 384 : index
      %278 = vector.load %arg11[%c184_225, %c384_226] : memref<200x512xf32, #tpu.memory_space<vmem>>, vector<8x71xf32>
      tpu.vector_store %arg11[%c184_225, %c384_226], %277 {strides = array<i32>} : memref<200x512xf32, #tpu.memory_space<vmem>>, vector<8x71xf32>,
      %279 = vector.extract_strided_slice %80 {offsets = [0, 4], sizes = [8, 71], strides = [1, 1]} : vector<8x128xf32> to vector<8x71xf32>
      %c192_227 = arith.constant 192 : index
      %c384_228 = arith.constant 384 : index
      %280 = vector.load %arg11[%c192_227, %c384_228] : memref<200x512xf32, #tpu.memory_space<vmem>>, vector<8x71xf32>
      tpu.vector_store %arg11[%c192_227, %c384_228], %279 {strides = array<i32>} : memref<200x512xf32, #tpu.memory_space<vmem>>, vector<8x71xf32>,
      %c0_229 = arith.constant 0 : index
      %c0_230 = arith.constant 0 : index
      %281 = vector.load %arg11[%c0_229, %c0_230] : memref<200x512xf32, #tpu.memory_space<vmem>>, vector<200x512xf32>
      %cst_231 = arith.constant dense<0.000000e+00> : vector<16x512xf32>
      %282 = tpu.matmul %37, %281, %cst_231 {dimension_numbers = #tpu.dot_dimension_numbers<[1], [0], [0], [1], [0, 0, 1, 1], [], []>} : vector<16x200xf32>, vector<200x512xf32>, vector<16x512xf32> -> vector<16x512xf32>
      %283 = arith.addf %282, %40 : vector<16x512xf32>
      %cst_232 = arith.constant 0.000000e+00 : f32
      %284 = vector.broadcast %cst_232 : f32 to vector<16x512xf32>
      %285 = arith.cmpf oge, %283, %284 : vector<16x512xf32>
      %cst_233 = arith.constant 0.00999999977 : f32
      %286 = vector.broadcast %cst_233 : f32 to vector<16x512xf32>
      %287 = arith.mulf %286, %283 : vector<16x512xf32>
      %288 = arith.select %285, %283, %287 : vector<16x512xi1>, vector<16x512xf32>
      %c0_i32_234 = arith.constant 0 : i32
      %289 = arith.addi %48, %c0_i32_234 : i32
      %290 = vector.extract_strided_slice %288 {offsets = [0, 0], sizes = [16, 128], strides = [1, 1]} : vector<16x512xf32> to vector<16x128xf32>
      %cst_235 = arith.constant dense<0.000000e+00> : vector<16x128xf32>
      %291 = tpu.matmul %290, %31, %cst_235 {dimension_numbers = #tpu.dot_dimension_numbers<[1], [0], [0], [1], [0, 0, 1, 1], [], []>} : vector<16x128xf32>, vector<128x128xf32>, vector<16x128xf32> -> vector<16x128xf32>
      %c1_i32_236 = arith.constant 1 : i32
      %292 = arith.muli %c1_i32_236, %289 : i32
      %c2_i32_237 = arith.constant 2 : i32
      %293 = arith.addi %c2_i32_237, %292 : i32
      %294 = arith.index_cast %293 : i32 to index
      %c0_238 = arith.constant 0 : index
      %c0_239 = arith.constant 0 : index
      %295 = vector.load %arg10[%294, %c0_238, %c0_239] : memref<75x16x128xf32, #tpu.memory_space<vmem>>, vector<1x16x128xf32>
      %296 = vector.shape_cast %295 : vector<1x16x128xf32> to vector<16x128xf32>
      %297 = vector.shape_cast %291 : vector<16x128xf32> to vector<1x16x128xf32>
      tpu.vector_store %arg10[%294, %c0_238, %c0_239], %297 {strides = array<i32>} : memref<75x16x128xf32, #tpu.memory_space<vmem>>, vector<1x16x128xf32>,
      %c1_i32_240 = arith.constant 1 : i32
      %298 = arith.addi %48, %c1_i32_240 : i32
      %299 = vector.extract_strided_slice %288 {offsets = [0, 128], sizes = [16, 128], strides = [1, 1]} : vector<16x512xf32> to vector<16x128xf32>
      %cst_241 = arith.constant dense<0.000000e+00> : vector<16x128xf32>
      %300 = tpu.matmul %299, %31, %cst_241 {dimension_numbers = #tpu.dot_dimension_numbers<[1], [0], [0], [1], [0, 0, 1, 1], [], []>} : vector<16x128xf32>, vector<128x128xf32>, vector<16x128xf32> -> vector<16x128xf32>
      %c1_i32_242 = arith.constant 1 : i32
      %301 = arith.muli %c1_i32_242, %298 : i32
      %c2_i32_243 = arith.constant 2 : i32
      %302 = arith.addi %c2_i32_243, %301 : i32
      %303 = arith.index_cast %302 : i32 to index
      %c0_244 = arith.constant 0 : index
      %c0_245 = arith.constant 0 : index
      %304 = vector.load %arg10[%303, %c0_244, %c0_245] : memref<75x16x128xf32, #tpu.memory_space<vmem>>, vector<1x16x128xf32>
      %305 = vector.shape_cast %304 : vector<1x16x128xf32> to vector<16x128xf32>
      %306 = vector.shape_cast %300 : vector<16x128xf32> to vector<1x16x128xf32>
      tpu.vector_store %arg10[%303, %c0_244, %c0_245], %306 {strides = array<i32>} : memref<75x16x128xf32, #tpu.memory_space<vmem>>, vector<1x16x128xf32>,
      %c2_i32_246 = arith.constant 2 : i32
      %307 = arith.addi %48, %c2_i32_246 : i32
      %308 = vector.extract_strided_slice %288 {offsets = [0, 256], sizes = [16, 128], strides = [1, 1]} : vector<16x512xf32> to vector<16x128xf32>
      %cst_247 = arith.constant dense<0.000000e+00> : vector<16x128xf32>
      %309 = tpu.matmul %308, %31, %cst_247 {dimension_numbers = #tpu.dot_dimension_numbers<[1], [0], [0], [1], [0, 0, 1, 1], [], []>} : vector<16x128xf32>, vector<128x128xf32>, vector<16x128xf32> -> vector<16x128xf32>
      %c1_i32_248 = arith.constant 1 : i32
      %310 = arith.muli %c1_i32_248, %307 : i32
      %c2_i32_249 = arith.constant 2 : i32
      %311 = arith.addi %c2_i32_249, %310 : i32
      %312 = arith.index_cast %311 : i32 to index
      %c0_250 = arith.constant 0 : index
      %c0_251 = arith.constant 0 : index
      %313 = vector.load %arg10[%312, %c0_250, %c0_251] : memref<75x16x128xf32, #tpu.memory_space<vmem>>, vector<1x16x128xf32>
      %314 = vector.shape_cast %313 : vector<1x16x128xf32> to vector<16x128xf32>
      %315 = vector.shape_cast %309 : vector<16x128xf32> to vector<1x16x128xf32>
      tpu.vector_store %arg10[%312, %c0_250, %c0_251], %315 {strides = array<i32>} : memref<75x16x128xf32, #tpu.memory_space<vmem>>, vector<1x16x128xf32>,
      %c3_i32_252 = arith.constant 3 : i32
      %316 = arith.addi %48, %c3_i32_252 : i32
      %317 = vector.extract_strided_slice %288 {offsets = [0, 384], sizes = [16, 128], strides = [1, 1]} : vector<16x512xf32> to vector<16x128xf32>
      %cst_253 = arith.constant dense<0.000000e+00> : vector<16x128xf32>
      %318 = tpu.matmul %317, %31, %cst_253 {dimension_numbers = #tpu.dot_dimension_numbers<[1], [0], [0], [1], [0, 0, 1, 1], [], []>} : vector<16x128xf32>, vector<128x128xf32>, vector<16x128xf32> -> vector<16x128xf32>
      %c1_i32_254 = arith.constant 1 : i32
      %319 = arith.muli %c1_i32_254, %316 : i32
      %c2_i32_255 = arith.constant 2 : i32
      %320 = arith.addi %c2_i32_255, %319 : i32
      %321 = arith.index_cast %320 : i32 to index
      %c0_256 = arith.constant 0 : index
      %c0_257 = arith.constant 0 : index
      %322 = vector.load %arg10[%321, %c0_256, %c0_257] : memref<75x16x128xf32, #tpu.memory_space<vmem>>, vector<1x16x128xf32>
      %323 = vector.shape_cast %322 : vector<1x16x128xf32> to vector<16x128xf32>
      %324 = vector.shape_cast %318 : vector<16x128xf32> to vector<1x16x128xf32>
      tpu.vector_store %arg10[%321, %c0_256, %c0_257], %324 {strides = array<i32>} : memref<75x16x128xf32, #tpu.memory_space<vmem>>, vector<1x16x128xf32>,
    }
    %c18_i32_26 = arith.constant 18 : i32
    %c0_27 = arith.constant 0 : index
    %c0_28 = arith.constant 0 : index
    %42 = vector.load %arg6[%c0_27, %c0_28] : memref<16x144xf32, #tpu.memory_space<vmem>>, vector<16x144xf32>
    %c0_29 = arith.constant 0 : index
    %c0_30 = arith.constant 0 : index
    %43 = vector.load %arg7[%c0_29, %c0_30] : memref<16x1xf32, #tpu.memory_space<vmem>>, vector<16x1xf32>
    %44 = vector.shape_cast %43 : vector<16x1xf32> to vector<16x1xf32>
    %45 = vector.broadcast %44 : vector<16x1xf32> to vector<16x512xf32>
    %c0_i32_31 = arith.constant 0 : i32
    %c19_i32 = arith.constant 19 : i32
    %46 = arith.addi %c0_i32_31, %c19_i32 : i32
    %c1_i32_32 = arith.constant 1 : i32
    scf.for %arg12 = %c0_i32_31 to %46 step %c1_i32_32  : i32 {
      %c4_i32 = arith.constant 4 : i32
      %47 = arith.muli %arg12, %c4_i32 : i32
      %c69_i32 = arith.constant 69 : i32
      %48 = arith.minsi %47, %c69_i32 : i32
      %c0_i32_34 = arith.constant 0 : i32
      %49 = arith.addi %48, %c0_i32_34 : i32
      %50 = arith.index_cast %49 : i32 to index
      %c0_35 = arith.constant 0 : index
      %c0_36 = arith.constant 0 : index
      %51 = vector.load %arg10[%50, %c0_35, %c0_36] : memref<75x16x128xf32, #tpu.memory_space<vmem>>, vector<1x16x128xf32>
      %52 = vector.shape_cast %51 : vector<1x16x128xf32> to vector<16x128xf32>
      %c1_i32_37 = arith.constant 1 : i32
      %53 = arith.addi %48, %c1_i32_37 : i32
      %54 = arith.index_cast %53 : i32 to index
      %c0_38 = arith.constant 0 : index
      %c0_39 = arith.constant 0 : index
      %55 = vector.load %arg10[%54, %c0_38, %c0_39] : memref<75x16x128xf32, #tpu.memory_space<vmem>>, vector<1x16x128xf32>
      %56 = vector.shape_cast %55 : vector<1x16x128xf32> to vector<16x128xf32>
      %c2_i32_40 = arith.constant 2 : i32
      %57 = arith.addi %48, %c2_i32_40 : i32
      %58 = arith.index_cast %57 : i32 to index
      %c0_41 = arith.constant 0 : index
      %c0_42 = arith.constant 0 : index
      %59 = vector.load %arg10[%58, %c0_41, %c0_42] : memref<75x16x128xf32, #tpu.memory_space<vmem>>, vector<1x16x128xf32>
      %60 = vector.shape_cast %59 : vector<1x16x128xf32> to vector<16x128xf32>
      %c3_i32_43 = arith.constant 3 : i32
      %61 = arith.addi %48, %c3_i32_43 : i32
      %62 = arith.index_cast %61 : i32 to index
      %c0_44 = arith.constant 0 : index
      %c0_45 = arith.constant 0 : index
      %63 = vector.load %arg10[%62, %c0_44, %c0_45] : memref<75x16x128xf32, #tpu.memory_space<vmem>>, vector<1x16x128xf32>
      %64 = vector.shape_cast %63 : vector<1x16x128xf32> to vector<16x128xf32>
      %c4_i32_46 = arith.constant 4 : i32
      %65 = arith.addi %48, %c4_i32_46 : i32
      %66 = arith.index_cast %65 : i32 to index
      %c0_47 = arith.constant 0 : index
      %c0_48 = arith.constant 0 : index
      %67 = vector.load %arg10[%66, %c0_47, %c0_48] : memref<75x16x128xf32, #tpu.memory_space<vmem>>, vector<1x16x128xf32>
      %68 = vector.shape_cast %67 : vector<1x16x128xf32> to vector<16x128xf32>
      %c5_i32 = arith.constant 5 : i32
      %69 = arith.addi %48, %c5_i32 : i32
      %70 = arith.index_cast %69 : i32 to index
      %c0_49 = arith.constant 0 : index
      %c0_50 = arith.constant 0 : index
      %71 = vector.load %arg10[%70, %c0_49, %c0_50] : memref<75x16x128xf32, #tpu.memory_space<vmem>>, vector<1x16x128xf32>
      %72 = vector.shape_cast %71 : vector<1x16x128xf32> to vector<16x128xf32>
      %73 = vector.extract_strided_slice %52 {offsets = [0, 0], sizes = [16, 73], strides = [1, 1]} : vector<16x128xf32> to vector<16x73xf32>
      %c0_51 = arith.constant 0 : index
      %c0_52 = arith.constant 0 : index
      %74 = vector.load %arg11[%c0_51, %c0_52] : memref<200x512xf32, #tpu.memory_space<vmem>>, vector<16x73xf32>
      tpu.vector_store %arg11[%c0_51, %c0_52], %73 {strides = array<i32>} : memref<200x512xf32, #tpu.memory_space<vmem>>, vector<16x73xf32>,
      %75 = vector.extract_strided_slice %52 {offsets = [0, 1], sizes = [16, 73], strides = [1, 1]} : vector<16x128xf32> to vector<16x73xf32>
      %c16 = arith.constant 16 : index
      %c0_53 = arith.constant 0 : index
      %76 = vector.load %arg11[%c16, %c0_53] : memref<200x512xf32, #tpu.memory_space<vmem>>, vector<16x73xf32>
      tpu.vector_store %arg11[%c16, %c0_53], %75 {strides = array<i32>} : memref<200x512xf32, #tpu.memory_space<vmem>>, vector<16x73xf32>,
      %77 = vector.extract_strided_slice %52 {offsets = [0, 2], sizes = [16, 73], strides = [1, 1]} : vector<16x128xf32> to vector<16x73xf32>
      %c32 = arith.constant 32 : index
      %c0_54 = arith.constant 0 : index
      %78 = vector.load %arg11[%c32, %c0_54] : memref<200x512xf32, #tpu.memory_space<vmem>>, vector<16x73xf32>
      tpu.vector_store %arg11[%c32, %c0_54], %77 {strides = array<i32>} : memref<200x512xf32, #tpu.memory_space<vmem>>, vector<16x73xf32>,
      %79 = vector.extract_strided_slice %56 {offsets = [0, 0], sizes = [16, 73], strides = [1, 1]} : vector<16x128xf32> to vector<16x73xf32>
      %c48 = arith.constant 48 : index
      %c0_55 = arith.constant 0 : index
      %80 = vector.load %arg11[%c48, %c0_55] : memref<200x512xf32, #tpu.memory_space<vmem>>, vector<16x73xf32>
      tpu.vector_store %arg11[%c48, %c0_55], %79 {strides = array<i32>} : memref<200x512xf32, #tpu.memory_space<vmem>>, vector<16x73xf32>,
      %81 = vector.extract_strided_slice %56 {offsets = [0, 1], sizes = [16, 73], strides = [1, 1]} : vector<16x128xf32> to vector<16x73xf32>
      %c64 = arith.constant 64 : index
      %c0_56 = arith.constant 0 : index
      %82 = vector.load %arg11[%c64, %c0_56] : memref<200x512xf32, #tpu.memory_space<vmem>>, vector<16x73xf32>
      tpu.vector_store %arg11[%c64, %c0_56], %81 {strides = array<i32>} : memref<200x512xf32, #tpu.memory_space<vmem>>, vector<16x73xf32>,
      %83 = vector.extract_strided_slice %56 {offsets = [0, 2], sizes = [16, 73], strides = [1, 1]} : vector<16x128xf32> to vector<16x73xf32>
      %c80 = arith.constant 80 : index
      %c0_57 = arith.constant 0 : index
      %84 = vector.load %arg11[%c80, %c0_57] : memref<200x512xf32, #tpu.memory_space<vmem>>, vector<16x73xf32>
      tpu.vector_store %arg11[%c80, %c0_57], %83 {strides = array<i32>} : memref<200x512xf32, #tpu.memory_space<vmem>>, vector<16x73xf32>,
      %85 = vector.extract_strided_slice %60 {offsets = [0, 0], sizes = [16, 73], strides = [1, 1]} : vector<16x128xf32> to vector<16x73xf32>
      %c96 = arith.constant 96 : index
      %c0_58 = arith.constant 0 : index
      %86 = vector.load %arg11[%c96, %c0_58] : memref<200x512xf32, #tpu.memory_space<vmem>>, vector<16x73xf32>
      tpu.vector_store %arg11[%c96, %c0_58], %85 {strides = array<i32>} : memref<200x512xf32, #tpu.memory_space<vmem>>, vector<16x73xf32>,
      %87 = vector.extract_strided_slice %60 {offsets = [0, 1], sizes = [16, 73], strides = [1, 1]} : vector<16x128xf32> to vector<16x73xf32>
      %c112 = arith.constant 112 : index
      %c0_59 = arith.constant 0 : index
      %88 = vector.load %arg11[%c112, %c0_59] : memref<200x512xf32, #tpu.memory_space<vmem>>, vector<16x73xf32>
      tpu.vector_store %arg11[%c112, %c0_59], %87 {strides = array<i32>} : memref<200x512xf32, #tpu.memory_space<vmem>>, vector<16x73xf32>,
      %89 = vector.extract_strided_slice %60 {offsets = [0, 2], sizes = [16, 73], strides = [1, 1]} : vector<16x128xf32> to vector<16x73xf32>
      %c128 = arith.constant 128 : index
      %c0_60 = arith.constant 0 : index
      %90 = vector.load %arg11[%c128, %c0_60] : memref<200x512xf32, #tpu.memory_space<vmem>>, vector<16x73xf32>
      tpu.vector_store %arg11[%c128, %c0_60], %89 {strides = array<i32>} : memref<200x512xf32, #tpu.memory_space<vmem>>, vector<16x73xf32>,
      %91 = vector.extract_strided_slice %56 {offsets = [0, 0], sizes = [16, 73], strides = [1, 1]} : vector<16x128xf32> to vector<16x73xf32>
      %c0_61 = arith.constant 0 : index
      %c128_62 = arith.constant 128 : index
      %92 = vector.load %arg11[%c0_61, %c128_62] : memref<200x512xf32, #tpu.memory_space<vmem>>, vector<16x73xf32>
      tpu.vector_store %arg11[%c0_61, %c128_62], %91 {strides = array<i32>} : memref<200x512xf32, #tpu.memory_space<vmem>>, vector<16x73xf32>,
      %93 = vector.extract_strided_slice %56 {offsets = [0, 1], sizes = [16, 73], strides = [1, 1]} : vector<16x128xf32> to vector<16x73xf32>
      %c16_63 = arith.constant 16 : index
      %c128_64 = arith.constant 128 : index
      %94 = vector.load %arg11[%c16_63, %c128_64] : memref<200x512xf32, #tpu.memory_space<vmem>>, vector<16x73xf32>
      tpu.vector_store %arg11[%c16_63, %c128_64], %93 {strides = array<i32>} : memref<200x512xf32, #tpu.memory_space<vmem>>, vector<16x73xf32>,
      %95 = vector.extract_strided_slice %56 {offsets = [0, 2], sizes = [16, 73], strides = [1, 1]} : vector<16x128xf32> to vector<16x73xf32>
      %c32_65 = arith.constant 32 : index
      %c128_66 = arith.constant 128 : index
      %96 = vector.load %arg11[%c32_65, %c128_66] : memref<200x512xf32, #tpu.memory_space<vmem>>, vector<16x73xf32>
      tpu.vector_store %arg11[%c32_65, %c128_66], %95 {strides = array<i32>} : memref<200x512xf32, #tpu.memory_space<vmem>>, vector<16x73xf32>,
      %97 = vector.extract_strided_slice %60 {offsets = [0, 0], sizes = [16, 73], strides = [1, 1]} : vector<16x128xf32> to vector<16x73xf32>
      %c48_67 = arith.constant 48 : index
      %c128_68 = arith.constant 128 : index
      %98 = vector.load %arg11[%c48_67, %c128_68] : memref<200x512xf32, #tpu.memory_space<vmem>>, vector<16x73xf32>
      tpu.vector_store %arg11[%c48_67, %c128_68], %97 {strides = array<i32>} : memref<200x512xf32, #tpu.memory_space<vmem>>, vector<16x73xf32>,
      %99 = vector.extract_strided_slice %60 {offsets = [0, 1], sizes = [16, 73], strides = [1, 1]} : vector<16x128xf32> to vector<16x73xf32>
      %c64_69 = arith.constant 64 : index
      %c128_70 = arith.constant 128 : index
      %100 = vector.load %arg11[%c64_69, %c128_70] : memref<200x512xf32, #tpu.memory_space<vmem>>, vector<16x73xf32>
      tpu.vector_store %arg11[%c64_69, %c128_70], %99 {strides = array<i32>} : memref<200x512xf32, #tpu.memory_space<vmem>>, vector<16x73xf32>,
      %101 = vector.extract_strided_slice %60 {offsets = [0, 2], sizes = [16, 73], strides = [1, 1]} : vector<16x128xf32> to vector<16x73xf32>
      %c80_71 = arith.constant 80 : index
      %c128_72 = arith.constant 128 : index
      %102 = vector.load %arg11[%c80_71, %c128_72] : memref<200x512xf32, #tpu.memory_space<vmem>>, vector<16x73xf32>
      tpu.vector_store %arg11[%c80_71, %c128_72], %101 {strides = array<i32>} : memref<200x512xf32, #tpu.memory_space<vmem>>, vector<16x73xf32>,
      %103 = vector.extract_strided_slice %64 {offsets = [0, 0], sizes = [16, 73], strides = [1, 1]} : vector<16x128xf32> to vector<16x73xf32>
      %c96_73 = arith.constant 96 : index
      %c128_74 = arith.constant 128 : index
      %104 = vector.load %arg11[%c96_73, %c128_74] : memref<200x512xf32, #tpu.memory_space<vmem>>, vector<16x73xf32>
      tpu.vector_store %arg11[%c96_73, %c128_74], %103 {strides = array<i32>} : memref<200x512xf32, #tpu.memory_space<vmem>>, vector<16x73xf32>,
      %105 = vector.extract_strided_slice %64 {offsets = [0, 1], sizes = [16, 73], strides = [1, 1]} : vector<16x128xf32> to vector<16x73xf32>
      %c112_75 = arith.constant 112 : index
      %c128_76 = arith.constant 128 : index
      %106 = vector.load %arg11[%c112_75, %c128_76] : memref<200x512xf32, #tpu.memory_space<vmem>>, vector<16x73xf32>
      tpu.vector_store %arg11[%c112_75, %c128_76], %105 {strides = array<i32>} : memref<200x512xf32, #tpu.memory_space<vmem>>, vector<16x73xf32>,
      %107 = vector.extract_strided_slice %64 {offsets = [0, 2], sizes = [16, 73], strides = [1, 1]} : vector<16x128xf32> to vector<16x73xf32>
      %c128_77 = arith.constant 128 : index
      %c128_78 = arith.constant 128 : index
      %108 = vector.load %arg11[%c128_77, %c128_78] : memref<200x512xf32, #tpu.memory_space<vmem>>, vector<16x73xf32>
      tpu.vector_store %arg11[%c128_77, %c128_78], %107 {strides = array<i32>} : memref<200x512xf32, #tpu.memory_space<vmem>>, vector<16x73xf32>,
      %109 = vector.extract_strided_slice %60 {offsets = [0, 0], sizes = [16, 73], strides = [1, 1]} : vector<16x128xf32> to vector<16x73xf32>
      %c0_79 = arith.constant 0 : index
      %c256 = arith.constant 256 : index
      %110 = vector.load %arg11[%c0_79, %c256] : memref<200x512xf32, #tpu.memory_space<vmem>>, vector<16x73xf32>
      tpu.vector_store %arg11[%c0_79, %c256], %109 {strides = array<i32>} : memref<200x512xf32, #tpu.memory_space<vmem>>, vector<16x73xf32>,
      %111 = vector.extract_strided_slice %60 {offsets = [0, 1], sizes = [16, 73], strides = [1, 1]} : vector<16x128xf32> to vector<16x73xf32>
      %c16_80 = arith.constant 16 : index
      %c256_81 = arith.constant 256 : index
      %112 = vector.load %arg11[%c16_80, %c256_81] : memref<200x512xf32, #tpu.memory_space<vmem>>, vector<16x73xf32>
      tpu.vector_store %arg11[%c16_80, %c256_81], %111 {strides = array<i32>} : memref<200x512xf32, #tpu.memory_space<vmem>>, vector<16x73xf32>,
      %113 = vector.extract_strided_slice %60 {offsets = [0, 2], sizes = [16, 73], strides = [1, 1]} : vector<16x128xf32> to vector<16x73xf32>
      %c32_82 = arith.constant 32 : index
      %c256_83 = arith.constant 256 : index
      %114 = vector.load %arg11[%c32_82, %c256_83] : memref<200x512xf32, #tpu.memory_space<vmem>>, vector<16x73xf32>
      tpu.vector_store %arg11[%c32_82, %c256_83], %113 {strides = array<i32>} : memref<200x512xf32, #tpu.memory_space<vmem>>, vector<16x73xf32>,
      %115 = vector.extract_strided_slice %64 {offsets = [0, 0], sizes = [16, 73], strides = [1, 1]} : vector<16x128xf32> to vector<16x73xf32>
      %c48_84 = arith.constant 48 : index
      %c256_85 = arith.constant 256 : index
      %116 = vector.load %arg11[%c48_84, %c256_85] : memref<200x512xf32, #tpu.memory_space<vmem>>, vector<16x73xf32>
      tpu.vector_store %arg11[%c48_84, %c256_85], %115 {strides = array<i32>} : memref<200x512xf32, #tpu.memory_space<vmem>>, vector<16x73xf32>,
      %117 = vector.extract_strided_slice %64 {offsets = [0, 1], sizes = [16, 73], strides = [1, 1]} : vector<16x128xf32> to vector<16x73xf32>
      %c64_86 = arith.constant 64 : index
      %c256_87 = arith.constant 256 : index
      %118 = vector.load %arg11[%c64_86, %c256_87] : memref<200x512xf32, #tpu.memory_space<vmem>>, vector<16x73xf32>
      tpu.vector_store %arg11[%c64_86, %c256_87], %117 {strides = array<i32>} : memref<200x512xf32, #tpu.memory_space<vmem>>, vector<16x73xf32>,
      %119 = vector.extract_strided_slice %64 {offsets = [0, 2], sizes = [16, 73], strides = [1, 1]} : vector<16x128xf32> to vector<16x73xf32>
      %c80_88 = arith.constant 80 : index
      %c256_89 = arith.constant 256 : index
      %120 = vector.load %arg11[%c80_88, %c256_89] : memref<200x512xf32, #tpu.memory_space<vmem>>, vector<16x73xf32>
      tpu.vector_store %arg11[%c80_88, %c256_89], %119 {strides = array<i32>} : memref<200x512xf32, #tpu.memory_space<vmem>>, vector<16x73xf32>,
      %121 = vector.extract_strided_slice %68 {offsets = [0, 0], sizes = [16, 73], strides = [1, 1]} : vector<16x128xf32> to vector<16x73xf32>
      %c96_90 = arith.constant 96 : index
      %c256_91 = arith.constant 256 : index
      %122 = vector.load %arg11[%c96_90, %c256_91] : memref<200x512xf32, #tpu.memory_space<vmem>>, vector<16x73xf32>
      tpu.vector_store %arg11[%c96_90, %c256_91], %121 {strides = array<i32>} : memref<200x512xf32, #tpu.memory_space<vmem>>, vector<16x73xf32>,
      %123 = vector.extract_strided_slice %68 {offsets = [0, 1], sizes = [16, 73], strides = [1, 1]} : vector<16x128xf32> to vector<16x73xf32>
      %c112_92 = arith.constant 112 : index
      %c256_93 = arith.constant 256 : index
      %124 = vector.load %arg11[%c112_92, %c256_93] : memref<200x512xf32, #tpu.memory_space<vmem>>, vector<16x73xf32>
      tpu.vector_store %arg11[%c112_92, %c256_93], %123 {strides = array<i32>} : memref<200x512xf32, #tpu.memory_space<vmem>>, vector<16x73xf32>,
      %125 = vector.extract_strided_slice %68 {offsets = [0, 2], sizes = [16, 73], strides = [1, 1]} : vector<16x128xf32> to vector<16x73xf32>
      %c128_94 = arith.constant 128 : index
      %c256_95 = arith.constant 256 : index
      %126 = vector.load %arg11[%c128_94, %c256_95] : memref<200x512xf32, #tpu.memory_space<vmem>>, vector<16x73xf32>
      tpu.vector_store %arg11[%c128_94, %c256_95], %125 {strides = array<i32>} : memref<200x512xf32, #tpu.memory_space<vmem>>, vector<16x73xf32>,
      %127 = vector.extract_strided_slice %64 {offsets = [0, 0], sizes = [16, 73], strides = [1, 1]} : vector<16x128xf32> to vector<16x73xf32>
      %c0_96 = arith.constant 0 : index
      %c384 = arith.constant 384 : index
      %128 = vector.load %arg11[%c0_96, %c384] : memref<200x512xf32, #tpu.memory_space<vmem>>, vector<16x73xf32>
      tpu.vector_store %arg11[%c0_96, %c384], %127 {strides = array<i32>} : memref<200x512xf32, #tpu.memory_space<vmem>>, vector<16x73xf32>,
      %129 = vector.extract_strided_slice %64 {offsets = [0, 1], sizes = [16, 73], strides = [1, 1]} : vector<16x128xf32> to vector<16x73xf32>
      %c16_97 = arith.constant 16 : index
      %c384_98 = arith.constant 384 : index
      %130 = vector.load %arg11[%c16_97, %c384_98] : memref<200x512xf32, #tpu.memory_space<vmem>>, vector<16x73xf32>
      tpu.vector_store %arg11[%c16_97, %c384_98], %129 {strides = array<i32>} : memref<200x512xf32, #tpu.memory_space<vmem>>, vector<16x73xf32>,
      %131 = vector.extract_strided_slice %64 {offsets = [0, 2], sizes = [16, 73], strides = [1, 1]} : vector<16x128xf32> to vector<16x73xf32>
      %c32_99 = arith.constant 32 : index
      %c384_100 = arith.constant 384 : index
      %132 = vector.load %arg11[%c32_99, %c384_100] : memref<200x512xf32, #tpu.memory_space<vmem>>, vector<16x73xf32>
      tpu.vector_store %arg11[%c32_99, %c384_100], %131 {strides = array<i32>} : memref<200x512xf32, #tpu.memory_space<vmem>>, vector<16x73xf32>,
      %133 = vector.extract_strided_slice %68 {offsets = [0, 0], sizes = [16, 73], strides = [1, 1]} : vector<16x128xf32> to vector<16x73xf32>
      %c48_101 = arith.constant 48 : index
      %c384_102 = arith.constant 384 : index
      %134 = vector.load %arg11[%c48_101, %c384_102] : memref<200x512xf32, #tpu.memory_space<vmem>>, vector<16x73xf32>
      tpu.vector_store %arg11[%c48_101, %c384_102], %133 {strides = array<i32>} : memref<200x512xf32, #tpu.memory_space<vmem>>, vector<16x73xf32>,
      %135 = vector.extract_strided_slice %68 {offsets = [0, 1], sizes = [16, 73], strides = [1, 1]} : vector<16x128xf32> to vector<16x73xf32>
      %c64_103 = arith.constant 64 : index
      %c384_104 = arith.constant 384 : index
      %136 = vector.load %arg11[%c64_103, %c384_104] : memref<200x512xf32, #tpu.memory_space<vmem>>, vector<16x73xf32>
      tpu.vector_store %arg11[%c64_103, %c384_104], %135 {strides = array<i32>} : memref<200x512xf32, #tpu.memory_space<vmem>>, vector<16x73xf32>,
      %137 = vector.extract_strided_slice %68 {offsets = [0, 2], sizes = [16, 73], strides = [1, 1]} : vector<16x128xf32> to vector<16x73xf32>
      %c80_105 = arith.constant 80 : index
      %c384_106 = arith.constant 384 : index
      %138 = vector.load %arg11[%c80_105, %c384_106] : memref<200x512xf32, #tpu.memory_space<vmem>>, vector<16x73xf32>
      tpu.vector_store %arg11[%c80_105, %c384_106], %137 {strides = array<i32>} : memref<200x512xf32, #tpu.memory_space<vmem>>, vector<16x73xf32>,
      %139 = vector.extract_strided_slice %72 {offsets = [0, 0], sizes = [16, 73], strides = [1, 1]} : vector<16x128xf32> to vector<16x73xf32>
      %c96_107 = arith.constant 96 : index
      %c384_108 = arith.constant 384 : index
      %140 = vector.load %arg11[%c96_107, %c384_108] : memref<200x512xf32, #tpu.memory_space<vmem>>, vector<16x73xf32>
      tpu.vector_store %arg11[%c96_107, %c384_108], %139 {strides = array<i32>} : memref<200x512xf32, #tpu.memory_space<vmem>>, vector<16x73xf32>,
      %141 = vector.extract_strided_slice %72 {offsets = [0, 1], sizes = [16, 73], strides = [1, 1]} : vector<16x128xf32> to vector<16x73xf32>
      %c112_109 = arith.constant 112 : index
      %c384_110 = arith.constant 384 : index
      %142 = vector.load %arg11[%c112_109, %c384_110] : memref<200x512xf32, #tpu.memory_space<vmem>>, vector<16x73xf32>
      tpu.vector_store %arg11[%c112_109, %c384_110], %141 {strides = array<i32>} : memref<200x512xf32, #tpu.memory_space<vmem>>, vector<16x73xf32>,
      %143 = vector.extract_strided_slice %72 {offsets = [0, 2], sizes = [16, 73], strides = [1, 1]} : vector<16x128xf32> to vector<16x73xf32>
      %c128_111 = arith.constant 128 : index
      %c384_112 = arith.constant 384 : index
      %144 = vector.load %arg11[%c128_111, %c384_112] : memref<200x512xf32, #tpu.memory_space<vmem>>, vector<16x73xf32>
      tpu.vector_store %arg11[%c128_111, %c384_112], %143 {strides = array<i32>} : memref<200x512xf32, #tpu.memory_space<vmem>>, vector<16x73xf32>,
      %c0_113 = arith.constant 0 : index
      %c0_114 = arith.constant 0 : index
      %145 = vector.load %arg11[%c0_113, %c0_114] : memref<200x512xf32, #tpu.memory_space<vmem>>, vector<144x512xf32>
      %cst_115 = arith.constant dense<0.000000e+00> : vector<16x512xf32>
      %146 = tpu.matmul %42, %145, %cst_115 {dimension_numbers = #tpu.dot_dimension_numbers<[1], [0], [0], [1], [0, 0, 1, 1], [], []>} : vector<16x144xf32>, vector<144x512xf32>, vector<16x512xf32> -> vector<16x512xf32>
      %147 = arith.addf %146, %45 : vector<16x512xf32>
      %c0_i32_116 = arith.constant 0 : i32
      %148 = arith.addi %48, %c0_i32_116 : i32
      %149 = vector.extract_strided_slice %147 {offsets = [0, 0], sizes = [16, 128], strides = [1, 1]} : vector<16x512xf32> to vector<16x128xf32>
      %c0_117 = arith.constant 0 : index
      %150 = arith.index_cast %148 : i32 to index
      %c0_118 = arith.constant 0 : index
      %c0_119 = arith.constant 0 : index
      %151 = vector.load %arg8[%c0_117, %150, %c0_118, %c0_119] : memref<1x73x16x128xf32, #tpu.memory_space<vmem>>, vector<1x1x16x128xf32>
      %152 = vector.shape_cast %151 : vector<1x1x16x128xf32> to vector<16x128xf32>
      %153 = vector.shape_cast %149 : vector<16x128xf32> to vector<1x1x16x128xf32>
      tpu.vector_store %arg8[%c0_117, %150, %c0_118, %c0_119], %153 {strides = array<i32>} : memref<1x73x16x128xf32, #tpu.memory_space<vmem>>, vector<1x1x16x128xf32>,
      %c1_i32_120 = arith.constant 1 : i32
      %154 = arith.addi %48, %c1_i32_120 : i32
      %155 = vector.extract_strided_slice %147 {offsets = [0, 128], sizes = [16, 128], strides = [1, 1]} : vector<16x512xf32> to vector<16x128xf32>
      %c0_121 = arith.constant 0 : index
      %156 = arith.index_cast %154 : i32 to index
      %c0_122 = arith.constant 0 : index
      %c0_123 = arith.constant 0 : index
      %157 = vector.load %arg8[%c0_121, %156, %c0_122, %c0_123] : memref<1x73x16x128xf32, #tpu.memory_space<vmem>>, vector<1x1x16x128xf32>
      %158 = vector.shape_cast %157 : vector<1x1x16x128xf32> to vector<16x128xf32>
      %159 = vector.shape_cast %155 : vector<16x128xf32> to vector<1x1x16x128xf32>
      tpu.vector_store %arg8[%c0_121, %156, %c0_122, %c0_123], %159 {strides = array<i32>} : memref<1x73x16x128xf32, #tpu.memory_space<vmem>>, vector<1x1x16x128xf32>,
      %c2_i32_124 = arith.constant 2 : i32
      %160 = arith.addi %48, %c2_i32_124 : i32
      %161 = vector.extract_strided_slice %147 {offsets = [0, 256], sizes = [16, 128], strides = [1, 1]} : vector<16x512xf32> to vector<16x128xf32>
      %c0_125 = arith.constant 0 : index
      %162 = arith.index_cast %160 : i32 to index
      %c0_126 = arith.constant 0 : index
      %c0_127 = arith.constant 0 : index
      %163 = vector.load %arg8[%c0_125, %162, %c0_126, %c0_127] : memref<1x73x16x128xf32, #tpu.memory_space<vmem>>, vector<1x1x16x128xf32>
      %164 = vector.shape_cast %163 : vector<1x1x16x128xf32> to vector<16x128xf32>
      %165 = vector.shape_cast %161 : vector<16x128xf32> to vector<1x1x16x128xf32>
      tpu.vector_store %arg8[%c0_125, %162, %c0_126, %c0_127], %165 {strides = array<i32>} : memref<1x73x16x128xf32, #tpu.memory_space<vmem>>, vector<1x1x16x128xf32>,
      %c3_i32_128 = arith.constant 3 : i32
      %166 = arith.addi %48, %c3_i32_128 : i32
      %167 = vector.extract_strided_slice %147 {offsets = [0, 384], sizes = [16, 128], strides = [1, 1]} : vector<16x512xf32> to vector<16x128xf32>
      %c0_129 = arith.constant 0 : index
      %168 = arith.index_cast %166 : i32 to index
      %c0_130 = arith.constant 0 : index
      %c0_131 = arith.constant 0 : index
      %169 = vector.load %arg8[%c0_129, %168, %c0_130, %c0_131] : memref<1x73x16x128xf32, #tpu.memory_space<vmem>>, vector<1x1x16x128xf32>
      %170 = vector.shape_cast %169 : vector<1x1x16x128xf32> to vector<16x128xf32>
      %171 = vector.shape_cast %167 : vector<16x128xf32> to vector<1x1x16x128xf32>
      tpu.vector_store %arg8[%c0_129, %168, %c0_130, %c0_131], %171 {strides = array<i32>} : memref<1x73x16x128xf32, #tpu.memory_space<vmem>>, vector<1x1x16x128xf32>,
    }
    %c19_i32_33 = arith.constant 19 : i32
    return
  }
  func.func @transform_0(%arg0: i32) -> (i32, i32, i32, i32) {
    %c0_i32 = arith.constant 0 : i32
    %c0_i32_0 = arith.constant 0 : i32
    %c0_i32_1 = arith.constant 0 : i32
    %c0_i32_2 = arith.constant 0 : i32
    return %arg0, %c0_i32, %c0_i32_0, %c0_i32_1 : i32, i32, i32, i32
  }
  func.func @transform_1(%arg0: i32) -> (i32, i32) {
    %c0_i32 = arith.constant 0 : i32
    %c0_i32_0 = arith.constant 0 : i32
    %c0_i32_1 = arith.constant 0 : i32
    return %c0_i32, %c0_i32_0 : i32, i32
  }
  func.func @transform_2(%arg0: i32) -> (i32, i32) {
    %c0_i32 = arith.constant 0 : i32
    %c0_i32_0 = arith.constant 0 : i32
    %c0_i32_1 = arith.constant 0 : i32
    return %c0_i32, %c0_i32_0 : i32, i32
  }
  func.func @transform_3(%arg0: i32) -> (i32, i32) {
    %c0_i32 = arith.constant 0 : i32
    %c0_i32_0 = arith.constant 0 : i32
    %c0_i32_1 = arith.constant 0 : i32
    return %c0_i32, %c0_i32_0 : i32, i32
  }
  func.func @transform_4(%arg0: i32) -> (i32, i32) {
    %c0_i32 = arith.constant 0 : i32
    %c0_i32_0 = arith.constant 0 : i32
    %c0_i32_1 = arith.constant 0 : i32
    return %c0_i32, %c0_i32_0 : i32, i32
  }
  func.func @transform_5(%arg0: i32) -> (i32, i32) {
    %c0_i32 = arith.constant 0 : i32
    %c0_i32_0 = arith.constant 0 : i32
    %c0_i32_1 = arith.constant 0 : i32
    return %c0_i32, %c0_i32_0 : i32, i32
  }
  func.func @transform_6(%arg0: i32) -> (i32, i32) {
    %c0_i32 = arith.constant 0 : i32
    %c0_i32_0 = arith.constant 0 : i32
    %c0_i32_1 = arith.constant 0 : i32
    return %c0_i32, %c0_i32_0 : i32, i32
  }
  func.func @transform_7(%arg0: i32) -> (i32, i32, i32, i32) {
    %c0_i32 = arith.constant 0 : i32
    %c0_i32_0 = arith.constant 0 : i32
    %c0_i32_1 = arith.constant 0 : i32
    %c0_i32_2 = arith.constant 0 : i32
    return %arg0, %c0_i32, %c0_i32_0, %c0_i32_1 : i32, i32, i32, i32
  }
}

</mosaic_0001>

<llo_original>
// kernel: hyper_decoder.1
$region0: #{hyper_decoder.1}
  #allocation0 [shape = 'u32[]', space=smem, size = 0x4, offset = 0x4, fixed_abs, tag = 'smem constant byte address 0x4 - core index']
  #allocation1 [shape = 'u32[72,128]{1,0:T(1,128)}', space=vmem, size = 0x9000, scoped, tag = 'internal scratch']
  #allocation2 [shape = 'f32[75,8,128]{2,1,0:T(8,128)}', space=vmem, size = 0x4b000, scoped, tag = 'scratch operand']
  #allocation3 [shape = 'f32[75,16,128]{2,1,0:T(8,128)}', space=vmem, size = 0x96000, scoped, tag = 'scratch operand']
  #allocation4 [shape = 'f32[200,512]{1,0:T(8,128)}', space=vmem, size = 0x64000, scoped, tag = 'scratch operand']
  %s0 = inlined_call_operand.vmem [shape: f32[2,39,8,128], index: 0, kind: input, shape index: {}]
  %s1 = inlined_call_operand.vmem [shape: f32[8,200], index: 1, kind: input, shape index: {}]
  %s2 = inlined_call_operand.vmem [shape: f32[8,1], index: 2, kind: input, shape index: {}]
  %s3 = inlined_call_operand.vmem [shape: f32[16,200], index: 3, kind: input, shape index: {}]
  %s4 = inlined_call_operand.vmem [shape: f32[16,1], index: 4, kind: input, shape index: {}]
  %s5 = inlined_call_operand.vmem [shape: f32[16,144], index: 5, kind: input, shape index: {}]
  %s6 = inlined_call_operand.vmem [shape: f32[16,1], index: 6, kind: input, shape index: {}]
  %s7 = inlined_call_operand.vmem [shape: f32[2,73,16,128], index: 7, kind: output, shape index: {}]
  %s8 = sld [smem:[#allocation0]]
  $region82: #{hyper_decoder.1} parent=0
    _
  %s10 = ssub.s32 1, %s8
  %s11 = scalar_select 0, %s10, %s8
  loop: start=0, step=1, limit=4
  $region2: #{hyper_decoder.1} parent=0 // loop_pre_header
    _
  $region3: #{hyper_decoder.1} parent=0 // loop_header
    %s13 = sphi 0, %s17
    %p14 = scmp.ge.s32.totalorder %s13, 4
    %s23 = sphi 0, %s25
    %s26 = sphi 0, %s23
    %s27 = sphi 0, %s26
    %s43 = sphi 0, %s27
    %s47 = sphi 0, %s47
    %s49 = sphi 0, %s47
    %s50 = sphi 0, %s49
    %s64 = sphi 0, %s50
    %s68 = sphi 0, %s68
    %s70 = sphi 0, %s68
    %s71 = sphi 0, %s70
    %s85 = sphi 0, %s71
    %s89 = sphi 0, %s89
    %s91 = sphi 0, %s89
    %s92 = sphi 0, %s91
    %s106 = sphi 0, %s92
    %s110 = sphi 0, %s110
    %s112 = sphi 0, %s110
    %s113 = sphi 0, %s112
    %s127 = sphi 0, %s113
    %s131 = sphi 0, %s131
    %s133 = sphi 0, %s131
    %s134 = sphi 0, %s133
    %s148 = sphi 0, %s134
    %s152 = sphi 0, %s152
    %s154 = sphi 0, %s152
    %s155 = sphi 0, %s154
    %s169 = sphi 0, %s155
    %s175 = sphi 0, %s177
    %s178 = sphi 0, %s175
    %s179 = sphi 0, %s178
    %s195 = sphi 0, %s179
  $region4: #{hyper_decoder.1} parent=0 // loop_header_branch
    %16 = sbr.rel (%p14) target = $region8
  $region5: #{hyper_decoder.1} parent=0 // loop_body
    %s18 = ssub.s32 %s13, 1
    %s19 = ssub.s32 %s13, 2
    %s20 = sadd.s32 %s13, 1
    %s21 = ssub.s32 %s13, %s20
    %p22 = scmp.eq.s32.totalorder %s21, 0
    %s24 = sadd.s32 %s23, 1
    %s25 = scalar_select %p22, %s23, %s24
    %p28 = pneg %p22
    %p29 = scmp.eq.s32.totalorder %s13, 1
    %p30 = por %p28, %p29
    %p31 = scmp.ne.s32.totalorder %s23, %s26
    %p32 = scmp.eq.s32.totalorder %s13, 0
    %p33 = por %p31, %p32
    %p34 = scmp.ne.s32.totalorder %s23, %s26
    %p35 = scmp.eq.s32.totalorder %s18, 1
    %p36 = por %p34, %p35
    %p37 = scmp.ne.s32.totalorder %s26, %s27
    %p38 = scmp.eq.s32.totalorder %s18, 0
    %p39 = por %p37, %p38
    %p40 = scmp.ne.s32.totalorder %s26, %s27
    %p41 = scmp.eq.s32.totalorder %s19, 1
    %p42 = por %p40, %p41
    %p44 = scmp.ne.s32.totalorder %s27, %s43
    %p45 = scmp.eq.s32.totalorder %s19, 0
    %p46 = por %p44, %p45
    %s48 = sadd.s32 %s47, 1
    %p51 = scmp.eq.s32.totalorder %s13, 1
    %p52 = scmp.ne.s32.totalorder %s47, %s49
    %p53 = scmp.eq.s32.totalorder %s13, 0
    %p54 = por %p52, %p53
    %p55 = scmp.ne.s32.totalorder %s47, %s49
    %p56 = scmp.eq.s32.totalorder %s18, 1
    %p57 = por %p55, %p56
    %p58 = scmp.ne.s32.totalorder %s49, %s50
    %p59 = scmp.eq.s32.totalorder %s18, 0
    %p60 = por %p58, %p59
    %p61 = scmp.ne.s32.totalorder %s49, %s50
    %p62 = scmp.eq.s32.totalorder %s19, 1
    %p63 = por %p61, %p62
    %p65 = scmp.ne.s32.totalorder %s50, %s64
    %p66 = scmp.eq.s32.totalorder %s19, 0
    %p67 = por %p65, %p66
    %s69 = sadd.s32 %s68, 1
    %p72 = scmp.eq.s32.totalorder %s13, 1
    %p73 = scmp.ne.s32.totalorder %s68, %s70
    %p74 = scmp.eq.s32.totalorder %s13, 0
    %p75 = por %p73, %p74
    %p76 = scmp.ne.s32.totalorder %s68, %s70
    %p77 = scmp.eq.s32.totalorder %s18, 1
    %p78 = por %p76, %p77
    %p79 = scmp.ne.s32.totalorder %s70, %s71
    %p80 = scmp.eq.s32.totalorder %s18, 0
    %p81 = por %p79, %p80
    %p82 = scmp.ne.s32.totalorder %s70, %s71
    %p83 = scmp.eq.s32.totalorder %s19, 1
    %p84 = por %p82, %p83
    %p86 = scmp.ne.s32.totalorder %s71, %s85
    %p87 = scmp.eq.s32.totalorder %s19, 0
    %p88 = por %p86, %p87
    %s90 = sadd.s32 %s89, 1
    %p93 = scmp.eq.s32.totalorder %s13, 1
    %p94 = scmp.ne.s32.totalorder %s89, %s91
    %p95 = scmp.eq.s32.totalorder %s13, 0
    %p96 = por %p94, %p95
    %p97 = scmp.ne.s32.totalorder %s89, %s91
    %p98 = scmp.eq.s32.totalorder %s18, 1
    %p99 = por %p97, %p98
    %p100 = scmp.ne.s32.totalorder %s91, %s92
    %p101 = scmp.eq.s32.totalorder %s18, 0
    %p102 = por %p100, %p101
    %p103 = scmp.ne.s32.totalorder %s91, %s92
    %p104 = scmp.eq.s32.totalorder %s19, 1
    %p105 = por %p103, %p104
    %p107 = scmp.ne.s32.totalorder %s92, %s106
    %p108 = scmp.eq.s32.totalorder %s19, 0
    %p109 = por %p107, %p108
    %s111 = sadd.s32 %s110, 1
    %p114 = scmp.eq.s32.totalorder %s13, 1
    %p115 = scmp.ne.s32.totalorder %s110, %s112
    %p116 = scmp.eq.s32.totalorder %s13, 0
    %p117 = por %p115, %p116
    %p118 = scmp.ne.s32.totalorder %s110, %s112
    %p119 = scmp.eq.s32.totalorder %s18, 1
    %p120 = por %p118, %p119
    %p121 = scmp.ne.s32.totalorder %s112, %s113
    %p122 = scmp.eq.s32.totalorder %s18, 0
    %p123 = por %p121, %p122
    %p124 = scmp.ne.s32.totalorder %s112, %s113
    %p125 = scmp.eq.s32.totalorder %s19, 1
    %p126 = por %p124, %p125
    %p128 = scmp.ne.s32.totalorder %s113, %s127
    %p129 = scmp.eq.s32.totalorder %s19, 0
    %p130 = por %p128, %p129
    %s132 = sadd.s32 %s131, 1
    %p135 = scmp.eq.s32.totalorder %s13, 1
    %p136 = scmp.ne.s32.totalorder %s131, %s133
    %p137 = scmp.eq.s32.totalorder %s13, 0
    %p138 = por %p136, %p137
    %p139 = scmp.ne.s32.totalorder %s131, %s133
    %p140 = scmp.eq.s32.totalorder %s18, 1
    %p141 = por %p139, %p140
    %p142 = scmp.ne.s32.totalorder %s133, %s134
    %p143 = scmp.eq.s32.totalorder %s18, 0
    %p144 = por %p142, %p143
    %p145 = scmp.ne.s32.totalorder %s133, %s134
    %p146 = scmp.eq.s32.totalorder %s19, 1
    %p147 = por %p145, %p146
    %p149 = scmp.ne.s32.totalorder %s134, %s148
    %p150 = scmp.eq.s32.totalorder %s19, 0
    %p151 = por %p149, %p150
    %s153 = sadd.s32 %s152, 1
    %p156 = scmp.eq.s32.totalorder %s13, 1
    %p157 = scmp.ne.s32.totalorder %s152, %s154
    %p158 = scmp.eq.s32.totalorder %s13, 0
    %p159 = por %p157, %p158
    %p160 = scmp.ne.s32.totalorder %s152, %s154
    %p161 = scmp.eq.s32.totalorder %s18, 1
    %p162 = por %p160, %p161
    %p163 = scmp.ne.s32.totalorder %s154, %s155
    %p164 = scmp.eq.s32.totalorder %s18, 0
    %p165 = por %p163, %p164
    %p166 = scmp.ne.s32.totalorder %s154, %s155
    %p167 = scmp.eq.s32.totalorder %s19, 1
    %p168 = por %p166, %p167
    %p170 = scmp.ne.s32.totalorder %s155, %s169
    %p171 = scmp.eq.s32.totalorder %s19, 0
    %p172 = por %p170, %p171
    %s173 = ssub.s32 %s13, %s20
    %p174 = scmp.eq.s32.totalorder %s173, 0
    %s176 = sadd.s32 %s175, 1
    %s177 = scalar_select %p174, %s175, %s176
    %p180 = pneg %p174
    %p181 = scmp.eq.s32.totalorder %s13, 1
    %p182 = por %p180, %p181
    %p183 = scmp.ne.s32.totalorder %s175, %s178
    %p184 = scmp.eq.s32.totalorder %s13, 0
    %p185 = por %p183, %p184
    %p186 = scmp.ne.s32.totalorder %s175, %s178
    %p187 = scmp.eq.s32.totalorder %s18, 1
    %p188 = por %p186, %p187
    %p189 = scmp.ne.s32.totalorder %s178, %s179
    %p190 = scmp.eq.s32.totalorder %s18, 0
    %p191 = por %p189, %p190
    %p192 = scmp.ne.s32.totalorder %s178, %s179
    %p193 = scmp.eq.s32.totalorder %s19, 1
    %p194 = por %p192, %p193
    %p196 = scmp.ne.s32.totalorder %s179, %s195
    %p197 = scmp.eq.s32.totalorder %s19, 0
    %p198 = por %p196, %p197
    %p199 = scmp.le.s32.totalorder 1, %s13
    %p200 = scmp.lt.s32.totalorder %s13, 3
    %p201 = pnand %p199, %p200
    %p202 = pneg %p201
    // Predicated region
    $region9: #{hyper_decoder.1} parent=5 // pred_check
      _
    $region10: #{hyper_decoder.1} parent=5 // pred_check_branch
      %204 = sbr.rel (%p201) target = $region12
    $region11: #{hyper_decoder.1} parent=5 // pred_region
      %s205 = ssub.s32 %s13, 1
      // Predicated region
      $region13: #{hyper_decoder.1} parent=11 // pred_check
        %p206 = pneg %p60
      $region14: #{hyper_decoder.1} parent=11 // pred_check_branch
        %208 = sbr.rel (%p206) target = $region16
      $region15: #{hyper_decoder.1} parent=11 // pred_region
        _
      $region16: #{hyper_decoder.1} parent=11 // pred_fallthru
        _
      // Predicated region
      $region17: #{hyper_decoder.1} parent=11 // pred_check
        %p209 = pneg %p81
      $region18: #{hyper_decoder.1} parent=11 // pred_check_branch
        %211 = sbr.rel (%p209) target = $region20
      $region19: #{hyper_decoder.1} parent=11 // pred_region
        _
      $region20: #{hyper_decoder.1} parent=11 // pred_fallthru
        _
      // Predicated region
      $region21: #{hyper_decoder.1} parent=11 // pred_check
        %p212 = pneg %p102
      $region22: #{hyper_decoder.1} parent=11 // pred_check_branch
        %214 = sbr.rel (%p212) target = $region24
      $region23: #{hyper_decoder.1} parent=11 // pred_region
        _
      $region24: #{hyper_decoder.1} parent=11 // pred_fallthru
        _
      // Predicated region
      $region25: #{hyper_decoder.1} parent=11 // pred_check
        %p215 = pneg %p123
      $region26: #{hyper_decoder.1} parent=11 // pred_check_branch
        %217 = sbr.rel (%p215) target = $region28
      $region27: #{hyper_decoder.1} parent=11 // pred_region
        _
      $region28: #{hyper_decoder.1} parent=11 // pred_fallthru
        _
      // Predicated region
      $region29: #{hyper_decoder.1} parent=11 // pred_check
        %p218 = pneg %p144
      $region30: #{hyper_decoder.1} parent=11 // pred_check_branch
        %220 = sbr.rel (%p218) target = $region32
      $region31: #{hyper_decoder.1} parent=11 // pred_region
        _
      $region32: #{hyper_decoder.1} parent=11 // pred_fallthru
        _
      // Predicated region
      $region33: #{hyper_decoder.1} parent=11 // pred_check
        %p221 = pneg %p165
      $region34: #{hyper_decoder.1} parent=11 // pred_check_branch
        %223 = sbr.rel (%p221) target = $region36
      $region35: #{hyper_decoder.1} parent=11 // pred_region
        _
      $region36: #{hyper_decoder.1} parent=11 // pred_fallthru
        _
    $region12: #{hyper_decoder.1} parent=5 // pred_fallthru
      _
    %p224 = scmp.lt.s32.totalorder %s13, 2
    // Predicated region
    $region37: #{hyper_decoder.1} parent=5 // pred_check
      %p225 = pneg %p224
    $region38: #{hyper_decoder.1} parent=5 // pred_check_branch
      %227 = sbr.rel (%p225) target = $region40
    $region39: #{hyper_decoder.1} parent=5 // pred_region
      // Predicated region
      $region41: #{hyper_decoder.1} parent=39 // pred_check
        %p228 = pneg %p33
      $region42: #{hyper_decoder.1} parent=39 // pred_check_branch
        %230 = sbr.rel (%p228) target = $region44
      $region43: #{hyper_decoder.1} parent=39 // pred_region
        %p231 = scmp.lt.s32.totalorder %s13, 1
        %s232 = scalar_select %p231, %s13, 1
        %s233 = smul.addr %s232, 39
        %s234 = smul.addr %s233, 8
        %s235 = scalar_lea.vmem %s0, %s234
      $region44: #{hyper_decoder.1} parent=39 // pred_fallthru
        _
    $region40: #{hyper_decoder.1} parent=5 // pred_fallthru
      _
    %p236 = scmp.le.s32.totalorder 1, %s13
    %p237 = scmp.lt.s32.totalorder %s13, 3
    %p238 = pnand %p236, %p237
    %p239 = pneg %p238
    // Predicated region
    $region45: #{hyper_decoder.1} parent=5 // pred_check
      _
    $region46: #{hyper_decoder.1} parent=5 // pred_check_branch
      %241 = sbr.rel (%p238) target = $region48
    $region47: #{hyper_decoder.1} parent=5 // pred_region
      %s242 = ssub.s32 %s13, 1
      %p243 = scmp.lt.s32.totalorder %s18, 1
      %s244 = scalar_select %p243, %s18, 1
      %s245 = smul.addr %s244, 39
      %s246 = smul.addr %s245, 8
      %s247 = scalar_lea.vmem %s0, %s246
      %p248 = pneg %p39
      %p249 = pneg %p36
      %p250 = pneg %p60
      %p251 = pneg %p57
      %p252 = pneg %p81
      %p253 = pneg %p78
      %p254 = pneg %p102
      %p255 = pneg %p99
      %p256 = pneg %p123
      %p257 = pneg %p120
      %p258 = pneg %p144
      %p259 = pneg %p141
      %p260 = pneg %p165
      %p261 = pneg %p162
      %p262 = pneg %p191
      %p263 = pneg %p188
      %p264 = scmp.lt.s32.totalorder %s18, 1
      %s265 = scalar_select %p264, %s18, 1
      %s266 = smul.addr %s265, 146
      %s267 = smul.addr %s266, 8
      %s268 = scalar_lea.vmem %s7, %s267
      %p269 = scmp.lt.s32.totalorder %s18, 1
      %s270 = scalar_select %p269, %s18, 1
      %s271 = smul.addr %s270, 39
      %s272 = smul.addr %s271, 8
      %s273 = scalar_lea.vmem %s0, %s272
      %p274 = scmp.lt.s32.totalorder %s18, 1
      %s275 = scalar_select %p274, %s18, 1
      %s276 = smul.addr %s275, 146
      %s277 = smul.addr %s276, 8
      %s278 = scalar_lea.vmem %s7, %s277
      %279 = vst [vmem:[#allocation2] sm:$0xff] 0.0
      %280 = vst [vmem:[#allocation2 + $0x8] sm:$0xff] 0.0
      %281 = vst [vmem:[#allocation2 + $0x10] sm:$0xff] 0.0
      %282 = vst [vmem:[#allocation2 + $0x18] sm:$0xff] 0.0
      %283 = vst [vmem:[#allocation2 + $0x20] sm:$0xff] 0.0
      %284 = vst [vmem:[#allocation2 + $0x28] sm:$0xff] 0.0
      %285 = vst [vmem:[#allocation2 + $0x30] sm:$0xff] 0.0
      %286 = vst [vmem:[#allocation2 + $0x38] sm:$0xff] 0.0
      %287 = vst [vmem:[#allocation2 + $0x40] sm:$0xff] 0.0
      %288 = vst [vmem:[#allocation2 + $0x48] sm:$0xff] 0.0
      %289 = vst [vmem:[#allocation2 + $0x50] sm:$0xff] 0.0
      %290 = vst [vmem:[#allocation2 + $0x58] sm:$0xff] 0.0
      %291 = vst [vmem:[#allocation2 + $0x60] sm:$0xff] 0.0
      %292 = vst [vmem:[#allocation2 + $0x68] sm:$0xff] 0.0
      %293 = vst [vmem:[#allocation2 + $0x70] sm:$0xff] 0.0
      %294 = vst [vmem:[#allocation2 + $0x78] sm:$0xff] 0.0
      %295 = vst [vmem:[#allocation2 + $0x80] sm:$0xff] 0.0
      %296 = vst [vmem:[#allocation2 + $0x88] sm:$0xff] 0.0
      %297 = vst [vmem:[#allocation2 + $0x90] sm:$0xff] 0.0
      %298 = vst [vmem:[#allocation2 + $0x98] sm:$0xff] 0.0
      %299 = vst [vmem:[#allocation2 + $0xa0] sm:$0xff] 0.0
      %300 = vst [vmem:[#allocation2 + $0xa8] sm:$0xff] 0.0
      %301 = vst [vmem:[#allocation2 + $0xb0] sm:$0xff] 0.0
      %302 = vst [vmem:[#allocation2 + $0xb8] sm:$0xff] 0.0
      %303 = vst [vmem:[#allocation2 + $0xc0] sm:$0xff] 0.0
      %304 = vst [vmem:[#allocation2 + $0xc8] sm:$0xff] 0.0
      %305 = vst [vmem:[#allocation2 + $0xd0] sm:$0xff] 0.0
      %306 = vst [vmem:[#allocation2 + $0xd8] sm:$0xff] 0.0
      %307 = vst [vmem:[#allocation2 + $0xe0] sm:$0xff] 0.0
      %308 = vst [vmem:[#allocation2 + $0xe8] sm:$0xff] 0.0
      %309 = vst [vmem:[#allocation2 + $0xf0] sm:$0xff] 0.0
      %310 = vst [vmem:[#allocation2 + $0xf8] sm:$0xff] 0.0
      %311 = vst [vmem:[#allocation2 + $0x100] sm:$0xff] 0.0
      %312 = vst [vmem:[#allocation2 + $0x108] sm:$0xff] 0.0
      %313 = vst [vmem:[#allocation2 + $0x110] sm:$0xff] 0.0
      %314 = vst [vmem:[#allocation2 + $0x118] sm:$0xff] 0.0
      %315 = vst [vmem:[#allocation2 + $0x120] sm:$0xff] 0.0
      %316 = vst [vmem:[#allocation2 + $0x128] sm:$0xff] 0.0
      %317 = vst [vmem:[#allocation2 + $0x130] sm:$0xff] 0.0
      %318 = vst [vmem:[#allocation2 + $0x138] sm:$0xff] 0.0
      %319 = vst [vmem:[#allocation2 + $0x140] sm:$0xff] 0.0
      %320 = vst [vmem:[#allocation2 + $0x148] sm:$0xff] 0.0
      %321 = vst [vmem:[#allocation2 + $0x150] sm:$0xff] 0.0
      %322 = vst [vmem:[#allocation2 + $0x158] sm:$0xff] 0.0
      %323 = vst [vmem:[#allocation2 + $0x160] sm:$0xff] 0.0
      %324 = vst [vmem:[#allocation2 + $0x168] sm:$0xff] 0.0
      %325 = vst [vmem:[#allocation2 + $0x170] sm:$0xff] 0.0
      %326 = vst [vmem:[#allocation2 + $0x178] sm:$0xff] 0.0
      %327 = vst [vmem:[#allocation2 + $0x180] sm:$0xff] 0.0
      %328 = vst [vmem:[#allocation2 + $0x188] sm:$0xff] 0.0
      %329 = vst [vmem:[#allocation2 + $0x190] sm:$0xff] 0.0
      %330 = vst [vmem:[#allocation2 + $0x198] sm:$0xff] 0.0
      %331 = vst [vmem:[#allocation2 + $0x1a0] sm:$0xff] 0.0
      %332 = vst [vmem:[#allocation2 + $0x1a8] sm:$0xff] 0.0
      %333 = vst [vmem:[#allocation2 + $0x1b0] sm:$0xff] 0.0
      %334 = vst [vmem:[#allocation2 + $0x1b8] sm:$0xff] 0.0
      %335 = vst [vmem:[#allocation2 + $0x1c0] sm:$0xff] 0.0
      %336 = vst [vmem:[#allocation2 + $0x1c8] sm:$0xff] 0.0
      %337 = vst [vmem:[#allocation2 + $0x1d0] sm:$0xff] 0.0
      %338 = vst [vmem:[#allocation2 + $0x1d8] sm:$0xff] 0.0
      %339 = vst [vmem:[#allocation2 + $0x1e0] sm:$0xff] 0.0
      %340 = vst [vmem:[#allocation2 + $0x1e8] sm:$0xff] 0.0
      %341 = vst [vmem:[#allocation2 + $0x1f0] sm:$0xff] 0.0
      %342 = vst [vmem:[#allocation2 + $0x1f8] sm:$0xff] 0.0
      %343 = vst [vmem:[#allocation2 + $0x200] sm:$0xff] 0.0
      %344 = vst [vmem:[#allocation2 + $0x208] sm:$0xff] 0.0
      %345 = vst [vmem:[#allocation2 + $0x210] sm:$0xff] 0.0
      %346 = vst [vmem:[#allocation2 + $0x218] sm:$0xff] 0.0
      %347 = vst [vmem:[#allocation2 + $0x220] sm:$0xff] 0.0
      %348 = vst [vmem:[#allocation2 + $0x228] sm:$0xff] 0.0
      %349 = vst [vmem:[#allocation2 + $0x230] sm:$0xff] 0.0
      %350 = vst [vmem:[#allocation2 + $0x238] sm:$0xff] 0.0
      %351 = vst [vmem:[#allocation2 + $0x240] sm:$0xff] 0.0
      %352 = vst [vmem:[#allocation2 + $0x248] sm:$0xff] 0.0
      %353 = vst [vmem:[#allocation2 + $0x250] sm:$0xff] 0.0
      %354 = vst [vmem:[#allocation3] sm:$0xff] 0.0
      %355 = vst [vmem:[#allocation3 + $0x8] sm:$0xff] 0.0
      %356 = vst [vmem:[#allocation3 + $0x10] sm:$0xff] 0.0
      %357 = vst [vmem:[#allocation3 + $0x18] sm:$0xff] 0.0
      %358 = vst [vmem:[#allocation3 + $0x20] sm:$0xff] 0.0
      %359 = vst [vmem:[#allocation3 + $0x28] sm:$0xff] 0.0
      %360 = vst [vmem:[#allocation3 + $0x30] sm:$0xff] 0.0
      %361 = vst [vmem:[#allocation3 + $0x38] sm:$0xff] 0.0
      %362 = vst [vmem:[#allocation3 + $0x40] sm:$0xff] 0.0
      %363 = vst [vmem:[#allocation3 + $0x48] sm:$0xff] 0.0
      %364 = vst [vmem:[#allocation3 + $0x50] sm:$0xff] 0.0
      %365 = vst [vmem:[#allocation3 + $0x58] sm:$0xff] 0.0
      %366 = vst [vmem:[#allocation3 + $0x60] sm:$0xff] 0.0
      %367 = vst [vmem:[#allocation3 + $0x68] sm:$0xff] 0.0
      %368 = vst [vmem:[#allocation3 + $0x70] sm:$0xff] 0.0
      %369 = vst [vmem:[#allocation3 + $0x78] sm:$0xff] 0.0
      %370 = vst [vmem:[#allocation3 + $0x80] sm:$0xff] 0.0
      %371 = vst [vmem:[#allocation3 + $0x88] sm:$0xff] 0.0
      %372 = vst [vmem:[#allocation3 + $0x90] sm:$0xff] 0.0
      %373 = vst [vmem:[#allocation3 + $0x98] sm:$0xff] 0.0
      %374 = vst [vmem:[#allocation3 + $0xa0] sm:$0xff] 0.0
      %375 = vst [vmem:[#allocation3 + $0xa8] sm:$0xff] 0.0
      %376 = vst [vmem:[#allocation3 + $0xb0] sm:$0xff] 0.0
      %377 = vst [vmem:[#allocation3 + $0xb8] sm:$0xff] 0.0
      %378 = vst [vmem:[#allocation3 + $0xc0] sm:$0xff] 0.0
      %379 = vst [vmem:[#allocation3 + $0xc8] sm:$0xff] 0.0
      %380 = vst [vmem:[#allocation3 + $0xd0] sm:$0xff] 0.0
      %381 = vst [vmem:[#allocation3 + $0xd8] sm:$0xff] 0.0
      %382 = vst [vmem:[#allocation3 + $0xe0] sm:$0xff] 0.0
      %383 = vst [vmem:[#allocation3 + $0xe8] sm:$0xff] 0.0
      %384 = vst [vmem:[#allocation3 + $0xf0] sm:$0xff] 0.0
      %385 = vst [vmem:[#allocation3 + $0xf8] sm:$0xff] 0.0
      %386 = vst [vmem:[#allocation3 + $0x100] sm:$0xff] 0.0
      %387 = vst [vmem:[#allocation3 + $0x108] sm:$0xff] 0.0
      %388 = vst [vmem:[#allocation3 + $0x110] sm:$0xff] 0.0
      %389 = vst [vmem:[#allocation3 + $0x118] sm:$0xff] 0.0
      %390 = vst [vmem:[#allocation3 + $0x120] sm:$0xff] 0.0
      %391 = vst [vmem:[#allocation3 + $0x128] sm:$0xff] 0.0
      %392 = vst [vmem:[#allocation3 + $0x130] sm:$0xff] 0.0
      %393 = vst [vmem:[#allocation3 + $0x138] sm:$0xff] 0.0
      %394 = vst [vmem:[#allocation3 + $0x140] sm:$0xff] 0.0
      %395 = vst [vmem:[#allocation3 + $0x148] sm:$0xff] 0.0
      %396 = vst [vmem:[#allocation3 + $0x150] sm:$0xff] 0.0
      %397 = vst [vmem:[#allocation3 + $0x158] sm:$0xff] 0.0
      %398 = vst [vmem:[#allocation3 + $0x160] sm:$0xff] 0.0
      %399 = vst [vmem:[#allocation3 + $0x168] sm:$0xff] 0.0
      %400 = vst [vmem:[#allocation3 + $0x170] sm:$0xff] 0.0
      %401 = vst [vmem:[#allocation3 + $0x178] sm:$0xff] 0.0
      %402 = vst [vmem:[#allocation3 + $0x180] sm:$0xff] 0.0
      %403 = vst [vmem:[#allocation3 + $0x188] sm:$0xff] 0.0
      %404 = vst [vmem:[#allocation3 + $0x190] sm:$0xff] 0.0
      %405 = vst [vmem:[#allocation3 + $0x198] sm:$0xff] 0.0
      %406 = vst [vmem:[#allocation3 + $0x1a0] sm:$0xff] 0.0
      %407 = vst [vmem:[#allocation3 + $0x1a8] sm:$0xff] 0.0
      %408 = vst [vmem:[#allocation3 + $0x1b0] sm:$0xff] 0.0
      %409 = vst [vmem:[#allocation3 + $0x1b8] sm:$0xff] 0.0
      %410 = vst [vmem:[#allocation3 + $0x1c0] sm:$0xff] 0.0
      %411 = vst [vmem:[#allocation3 + $0x1c8] sm:$0xff] 0.0
      %412 = vst [vmem:[#allocation3 + $0x1d0] sm:$0xff] 0.0
      %413 = vst [vmem:[#allocation3 + $0x1d8] sm:$0xff] 0.0
      %414 = vst [vmem:[#allocation3 + $0x1e0] sm:$0xff] 0.0
      %415 = vst [vmem:[#allocation3 + $0x1e8] sm:$0xff] 0.0
      %416 = vst [vmem:[#allocation3 + $0x1f0] sm:$0xff] 0.0
      %417 = vst [vmem:[#allocation3 + $0x1f8] sm:$0xff] 0.0
      %418 = vst [vmem:[#allocation3 + $0x200] sm:$0xff] 0.0
      %419 = vst [vmem:[#allocation3 + $0x208] sm:$0xff] 0.0
      %420 = vst [vmem:[#allocation3 + $0x210] sm:$0xff] 0.0
      %421 = vst [vmem:[#allocation3 + $0x218] sm:$0xff] 0.0
      %422 = vst [vmem:[#allocation3 + $0x220] sm:$0xff] 0.0
      %423 = vst [vmem:[#allocation3 + $0x228] sm:$0xff] 0.0
      %424 = vst [vmem:[#allocation3 + $0x230] sm:$0xff] 0.0
      %425 = vst [vmem:[#allocation3 + $0x238] sm:$0xff] 0.0
      %426 = vst [vmem:[#allocation3 + $0x240] sm:$0xff] 0.0
      %427 = vst [vmem:[#allocation3 + $0x248] sm:$0xff] 0.0
      %428 = vst [vmem:[#allocation3 + $0x250] sm:$0xff] 0.0
      %429 = vst [vmem:[#allocation3 + $0x258] sm:$0xff] 0.0
      %430 = vst [vmem:[#allocation3 + $0x260] sm:$0xff] 0.0
      %431 = vst [vmem:[#allocation3 + $0x268] sm:$0xff] 0.0
      %432 = vst [vmem:[#allocation3 + $0x270] sm:$0xff] 0.0
      %433 = vst [vmem:[#allocation3 + $0x278] sm:$0xff] 0.0
      %434 = vst [vmem:[#allocation3 + $0x280] sm:$0xff] 0.0
      %435 = vst [vmem:[#allocation3 + $0x288] sm:$0xff] 0.0
      %436 = vst [vmem:[#allocation3 + $0x290] sm:$0xff] 0.0
      %437 = vst [vmem:[#allocation3 + $0x298] sm:$0xff] 0.0
      %438 = vst [vmem:[#allocation3 + $0x2a0] sm:$0xff] 0.0
      %439 = vst [vmem:[#allocation3 + $0x2a8] sm:$0xff] 0.0
      %440 = vst [vmem:[#allocation3 + $0x2b0] sm:$0xff] 0.0
      %441 = vst [vmem:[#allocation3 + $0x2b8] sm:$0xff] 0.0
      %442 = vst [vmem:[#allocation3 + $0x2c0] sm:$0xff] 0.0
      %443 = vst [vmem:[#allocation3 + $0x2c8] sm:$0xff] 0.0
      %444 = vst [vmem:[#allocation3 + $0x2d0] sm:$0xff] 0.0
      %445 = vst [vmem:[#allocation3 + $0x2d8] sm:$0xff] 0.0
      %446 = vst [vmem:[#allocation3 + $0x2e0] sm:$0xff] 0.0
      %447 = vst [vmem:[#allocation3 + $0x2e8] sm:$0xff] 0.0
      %448 = vst [vmem:[#allocation3 + $0x2f0] sm:$0xff] 0.0
      %449 = vst [vmem:[#allocation3 + $0x2f8] sm:$0xff] 0.0
      %450 = vst [vmem:[#allocation3 + $0x300] sm:$0xff] 0.0
      %451 = vst [vmem:[#allocation3 + $0x308] sm:$0xff] 0.0
      %452 = vst [vmem:[#allocation3 + $0x310] sm:$0xff] 0.0
      %453 = vst [vmem:[#allocation3 + $0x318] sm:$0xff] 0.0
      %454 = vst [vmem:[#allocation3 + $0x320] sm:$0xff] 0.0
      %455 = vst [vmem:[#allocation3 + $0x328] sm:$0xff] 0.0
      %456 = vst [vmem:[#allocation3 + $0x330] sm:$0xff] 0.0
      %457 = vst [vmem:[#allocation3 + $0x338] sm:$0xff] 0.0
      %458 = vst [vmem:[#allocation3 + $0x340] sm:$0xff] 0.0
      %459 = vst [vmem:[#allocation3 + $0x348] sm:$0xff] 0.0
      %460 = vst [vmem:[#allocation3 + $0x350] sm:$0xff] 0.0
      %461 = vst [vmem:[#allocation3 + $0x358] sm:$0xff] 0.0
      %462 = vst [vmem:[#allocation3 + $0x360] sm:$0xff] 0.0
      %463 = vst [vmem:[#allocation3 + $0x368] sm:$0xff] 0.0
      %464 = vst [vmem:[#allocation3 + $0x370] sm:$0xff] 0.0
      %465 = vst [vmem:[#allocation3 + $0x378] sm:$0xff] 0.0
      %466 = vst [vmem:[#allocation3 + $0x380] sm:$0xff] 0.0
      %467 = vst [vmem:[#allocation3 + $0x388] sm:$0xff] 0.0
      %468 = vst [vmem:[#allocation3 + $0x390] sm:$0xff] 0.0
      %469 = vst [vmem:[#allocation3 + $0x398] sm:$0xff] 0.0
      %470 = vst [vmem:[#allocation3 + $0x3a0] sm:$0xff] 0.0
      %471 = vst [vmem:[#allocation3 + $0x3a8] sm:$0xff] 0.0
      %472 = vst [vmem:[#allocation3 + $0x3b0] sm:$0xff] 0.0
      %473 = vst [vmem:[#allocation3 + $0x3b8] sm:$0xff] 0.0
      %474 = vst [vmem:[#allocation3 + $0x3c0] sm:$0xff] 0.0
      %475 = vst [vmem:[#allocation3 + $0x3c8] sm:$0xff] 0.0
      %476 = vst [vmem:[#allocation3 + $0x3d0] sm:$0xff] 0.0
      %477 = vst [vmem:[#allocation3 + $0x3d8] sm:$0xff] 0.0
      %478 = vst [vmem:[#allocation3 + $0x3e0] sm:$0xff] 0.0
      %479 = vst [vmem:[#allocation3 + $0x3e8] sm:$0xff] 0.0
      %480 = vst [vmem:[#allocation3 + $0x3f0] sm:$0xff] 0.0
      %481 = vst [vmem:[#allocation3 + $0x3f8] sm:$0xff] 0.0
      %482 = vst [vmem:[#allocation3 + $0x400] sm:$0xff] 0.0
      %483 = vst [vmem:[#allocation3 + $0x408] sm:$0xff] 0.0
      %484 = vst [vmem:[#allocation3 + $0x410] sm:$0xff] 0.0
      %485 = vst [vmem:[#allocation3 + $0x418] sm:$0xff] 0.0
      %486 = vst [vmem:[#allocation3 + $0x420] sm:$0xff] 0.0
      %487 = vst [vmem:[#allocation3 + $0x428] sm:$0xff] 0.0
      %488 = vst [vmem:[#allocation3 + $0x430] sm:$0xff] 0.0
      %489 = vst [vmem:[#allocation3 + $0x438] sm:$0xff] 0.0
      %490 = vst [vmem:[#allocation3 + $0x440] sm:$0xff] 0.0
      %491 = vst [vmem:[#allocation3 + $0x448] sm:$0xff] 0.0
      %492 = vst [vmem:[#allocation3 + $0x450] sm:$0xff] 0.0
      %493 = vst [vmem:[#allocation3 + $0x458] sm:$0xff] 0.0
      %494 = vst [vmem:[#allocation3 + $0x460] sm:$0xff] 0.0
      %495 = vst [vmem:[#allocation3 + $0x468] sm:$0xff] 0.0
      %496 = vst [vmem:[#allocation3 + $0x470] sm:$0xff] 0.0
      %497 = vst [vmem:[#allocation3 + $0x478] sm:$0xff] 0.0
      %498 = vst [vmem:[#allocation3 + $0x480] sm:$0xff] 0.0
      %499 = vst [vmem:[#allocation3 + $0x488] sm:$0xff] 0.0
      %500 = vst [vmem:[#allocation3 + $0x490] sm:$0xff] 0.0
      %501 = vst [vmem:[#allocation3 + $0x498] sm:$0xff] 0.0
      %502 = vst [vmem:[#allocation3 + $0x4a0] sm:$0xff] 0.0
      %503 = vst [vmem:[#allocation3 + $0x4a8] sm:$0xff] 0.0
      %504 = vst [vmem:[#allocation4] sm:$0xff] 0.0
      %505 = vst [vmem:[#allocation4 + $0x8] sm:$0xff] 0.0
      %506 = vst [vmem:[#allocation4 + $0x10] sm:$0xff] 0.0
      %507 = vst [vmem:[#allocation4 + $0x18] sm:$0xff] 0.0
      %508 = vst [vmem:[#allocation4 + $0x20] sm:$0xff] 0.0
      %509 = vst [vmem:[#allocation4 + $0x28] sm:$0xff] 0.0
      %510 = vst [vmem:[#allocation4 + $0x30] sm:$0xff] 0.0
      %511 = vst [vmem:[#allocation4 + $0x38] sm:$0xff] 0.0
      %512 = vst [vmem:[#allocation4 + $0x40] sm:$0xff] 0.0
      %513 = vst [vmem:[#allocation4 + $0x48] sm:$0xff] 0.0
      %514 = vst [vmem:[#allocation4 + $0x50] sm:$0xff] 0.0
      %515 = vst [vmem:[#allocation4 + $0x58] sm:$0xff] 0.0
      %516 = vst [vmem:[#allocation4 + $0x60] sm:$0xff] 0.0
      %517 = vst [vmem:[#allocation4 + $0x68] sm:$0xff] 0.0
      %518 = vst [vmem:[#allocation4 + $0x70] sm:$0xff] 0.0
      %519 = vst [vmem:[#allocation4 + $0x78] sm:$0xff] 0.0
      %520 = vst [vmem:[#allocation4 + $0x80] sm:$0xff] 0.0
      %521 = vst [vmem:[#allocation4 + $0x88] sm:$0xff] 0.0
      %522 = vst [vmem:[#allocation4 + $0x90] sm:$0xff] 0.0
      %523 = vst [vmem:[#allocation4 + $0x98] sm:$0xff] 0.0
      %524 = vst [vmem:[#allocation4 + $0xa0] sm:$0xff] 0.0
      %525 = vst [vmem:[#allocation4 + $0xa8] sm:$0xff] 0.0
      %526 = vst [vmem:[#allocation4 + $0xb0] sm:$0xff] 0.0
      %527 = vst [vmem:[#allocation4 + $0xb8] sm:$0xff] 0.0
      %528 = vst [vmem:[#allocation4 + $0xc0] sm:$0xff] 0.0
      %529 = vst [vmem:[#allocation4 + $0xc8] sm:$0xff] 0.0
      %530 = vst [vmem:[#allocation4 + $0xd0] sm:$0xff] 0.0
      %531 = vst [vmem:[#allocation4 + $0xd8] sm:$0xff] 0.0
      %532 = vst [vmem:[#allocation4 + $0xe0] sm:$0xff] 0.0
      %533 = vst [vmem:[#allocation4 + $0xe8] sm:$0xff] 0.0
      %534 = vst [vmem:[#allocation4 + $0xf0] sm:$0xff] 0.0
      %535 = vst [vmem:[#allocation4 + $0xf8] sm:$0xff] 0.0
      %536 = vst [vmem:[#allocation4 + $0x100] sm:$0xff] 0.0
      %537 = vst [vmem:[#allocation4 + $0x108] sm:$0xff] 0.0
      %538 = vst [vmem:[#allocation4 + $0x110] sm:$0xff] 0.0
      %539 = vst [vmem:[#allocation4 + $0x118] sm:$0xff] 0.0
      %540 = vst [vmem:[#allocation4 + $0x120] sm:$0xff] 0.0
      %541 = vst [vmem:[#allocation4 + $0x128] sm:$0xff] 0.0
      %542 = vst [vmem:[#allocation4 + $0x130] sm:$0xff] 0.0
      %543 = vst [vmem:[#allocation4 + $0x138] sm:$0xff] 0.0
      %544 = vst [vmem:[#allocation4 + $0x140] sm:$0xff] 0.0
      %545 = vst [vmem:[#allocation4 + $0x148] sm:$0xff] 0.0
      %546 = vst [vmem:[#allocation4 + $0x150] sm:$0xff] 0.0
      %547 = vst [vmem:[#allocation4 + $0x158] sm:$0xff] 0.0
      %548 = vst [vmem:[#allocation4 + $0x160] sm:$0xff] 0.0
      %549 = vst [vmem:[#allocation4 + $0x168] sm:$0xff] 0.0
      %550 = vst [vmem:[#allocation4 + $0x170] sm:$0xff] 0.0
      %551 = vst [vmem:[#allocation4 + $0x178] sm:$0xff] 0.0
      %552 = vst [vmem:[#allocation4 + $0x180] sm:$0xff] 0.0
      %553 = vst [vmem:[#allocation4 + $0x188] sm:$0xff] 0.0
      %554 = vst [vmem:[#allocation4 + $0x190] sm:$0xff] 0.0
      %555 = vst [vmem:[#allocation4 + $0x198] sm:$0xff] 0.0
      %556 = vst [vmem:[#allocation4 + $0x1a0] sm:$0xff] 0.0
      %557 = vst [vmem:[#allocation4 + $0x1a8] sm:$0xff] 0.0
      %558 = vst [vmem:[#allocation4 + $0x1b0] sm:$0xff] 0.0
      %559 = vst [vmem:[#allocation4 + $0x1b8] sm:$0xff] 0.0
      %560 = vst [vmem:[#allocation4 + $0x1c0] sm:$0xff] 0.0
      %561 = vst [vmem:[#allocation4 + $0x1c8] sm:$0xff] 0.0
      %562 = vst [vmem:[#allocation4 + $0x1d0] sm:$0xff] 0.0
      %563 = vst [vmem:[#allocation4 + $0x1d8] sm:$0xff] 0.0
      %564 = vst [vmem:[#allocation4 + $0x1e0] sm:$0xff] 0.0
      %565 = vst [vmem:[#allocation4 + $0x1e8] sm:$0xff] 0.0
      %566 = vst [vmem:[#allocation4 + $0x1f0] sm:$0xff] 0.0
      %567 = vst [vmem:[#allocation4 + $0x1f8] sm:$0xff] 0.0
      %568 = vst [vmem:[#allocation4 + $0x200] sm:$0xff] 0.0
      %569 = vst [vmem:[#allocation4 + $0x208] sm:$0xff] 0.0
      %570 = vst [vmem:[#allocation4 + $0x210] sm:$0xff] 0.0
      %571 = vst [vmem:[#allocation4 + $0x218] sm:$0xff] 0.0
      %572 = vst [vmem:[#allocation4 + $0x220] sm:$0xff] 0.0
      %573 = vst [vmem:[#allocation4 + $0x228] sm:$0xff] 0.0
      %574 = vst [vmem:[#allocation4 + $0x230] sm:$0xff] 0.0
      %575 = vst [vmem:[#allocation4 + $0x238] sm:$0xff] 0.0
      %576 = vst [vmem:[#allocation4 + $0x240] sm:$0xff] 0.0
      %577 = vst [vmem:[#allocation4 + $0x248] sm:$0xff] 0.0
      %578 = vst [vmem:[#allocation4 + $0x250] sm:$0xff] 0.0
      %579 = vst [vmem:[#allocation4 + $0x258] sm:$0xff] 0.0
      %580 = vst [vmem:[#allocation4 + $0x260] sm:$0xff] 0.0
      %581 = vst [vmem:[#allocation4 + $0x268] sm:$0xff] 0.0
      %582 = vst [vmem:[#allocation4 + $0x270] sm:$0xff] 0.0
      %583 = vst [vmem:[#allocation4 + $0x278] sm:$0xff] 0.0
      %584 = vst [vmem:[#allocation4 + $0x280] sm:$0xff] 0.0
      %585 = vst [vmem:[#allocation4 + $0x288] sm:$0xff] 0.0
      %586 = vst [vmem:[#allocation4 + $0x290] sm:$0xff] 0.0
      %587 = vst [vmem:[#allocation4 + $0x298] sm:$0xff] 0.0
      %588 = vst [vmem:[#allocation4 + $0x2a0] sm:$0xff] 0.0
      %589 = vst [vmem:[#allocation4 + $0x2a8] sm:$0xff] 0.0
      %590 = vst [vmem:[#allocation4 + $0x2b0] sm:$0xff] 0.0
      %591 = vst [vmem:[#allocation4 + $0x2b8] sm:$0xff] 0.0
      %592 = vst [vmem:[#allocation4 + $0x2c0] sm:$0xff] 0.0
      %593 = vst [vmem:[#allocation4 + $0x2c8] sm:$0xff] 0.0
      %594 = vst [vmem:[#allocation4 + $0x2d0] sm:$0xff] 0.0
      %595 = vst [vmem:[#allocation4 + $0x2d8] sm:$0xff] 0.0
      %596 = vst [vmem:[#allocation4 + $0x2e0] sm:$0xff] 0.0
      %597 = vst [vmem:[#allocation4 + $0x2e8] sm:$0xff] 0.0
      %598 = vst [vmem:[#allocation4 + $0x2f0] sm:$0xff] 0.0
      %599 = vst [vmem:[#allocation4 + $0x2f8] sm:$0xff] 0.0
      %600 = vst [vmem:[#allocation4 + $0x300] sm:$0xff] 0.0
      %601 = vst [vmem:[#allocation4 + $0x308] sm:$0xff] 0.0
      %602 = vst [vmem:[#allocation4 + $0x310] sm:$0xff] 0.0
      %603 = vst [vmem:[#allocation4 + $0x318] sm:$0xff] 0.0
      %v604 = vlaneseq
      %v605 = vshrl.u32 %v604, 7
      %v606 = vadd.s32 %v605, 8
      %v607 = vadd.s32 %v605, 16
      %v608 = vadd.s32 %v605, 24
      %v609 = vadd.s32 %v605, 32
      %v610 = vadd.s32 %v605, 40
      %v611 = vadd.s32 %v605, 48
      %v612 = vadd.s32 %v605, 56
      %v613 = vadd.s32 %v605, 64
      %v614 = vadd.s32 %v605, 72
      %v615 = vadd.s32 %v605, 80
      %v616 = vadd.s32 %v605, 88
      %v617 = vadd.s32 %v605, 96
      %v618 = vadd.s32 %v605, 104
      %v619 = vadd.s32 %v605, 112
      %v620 = vadd.s32 %v605, 120
      %v621 = vlaneseq
      %v622 = vand.u32 %v621, 127
      %v623 = vmul.u32 %v605, 2
      %v624 = vmul.u32 %v606, 2
      %v625 = vmul.u32 %v607, 2
      %v626 = vmul.u32 %v608, 2
      %v627 = vmul.u32 %v609, 2
      %v628 = vmul.u32 %v610, 2
      %v629 = vmul.u32 %v611, 2
      %v630 = vmul.u32 %v612, 2
      %v631 = vmul.u32 %v613, 2
      %v632 = vmul.u32 %v614, 2
      %v633 = vmul.u32 %v615, 2
      %v634 = vmul.u32 %v616, 2
      %v635 = vmul.u32 %v617, 2
      %v636 = vmul.u32 %v618, 2
      %v637 = vmul.u32 %v619, 2
      %v638 = vmul.u32 %v620, 2
      %v639 = vadd.s32 %v623, 3
      %v640 = vadd.s32 %v624, 3
      %v641 = vadd.s32 %v625, 3
      %v642 = vadd.s32 %v626, 3
      %v643 = vadd.s32 %v627, 3
      %v644 = vadd.s32 %v628, 3
      %v645 = vadd.s32 %v629, 3
      %v646 = vadd.s32 %v630, 3
      %v647 = vadd.s32 %v631, 3
      %v648 = vadd.s32 %v632, 3
      %v649 = vadd.s32 %v633, 3
      %v650 = vadd.s32 %v634, 3
      %v651 = vadd.s32 %v635, 3
      %v652 = vadd.s32 %v636, 3
      %v653 = vadd.s32 %v637, 3
      %v654 = vadd.s32 %v638, 3
      %vm655 = vcmp.eq.s32.totalorder %v622, %v639
      %vm656 = vcmp.eq.s32.totalorder %v622, %v640
      %vm657 = vcmp.eq.s32.totalorder %v622, %v641
      %vm658 = vcmp.eq.s32.totalorder %v622, %v642
      %vm659 = vcmp.eq.s32.totalorder %v622, %v643
      %vm660 = vcmp.eq.s32.totalorder %v622, %v644
      %vm661 = vcmp.eq.s32.totalorder %v622, %v645
      %vm662 = vcmp.eq.s32.totalorder %v622, %v646
      %vm663 = vcmp.eq.s32.totalorder %v622, %v647
      %vm664 = vcmp.eq.s32.totalorder %v622, %v648
      %vm665 = vcmp.eq.s32.totalorder %v622, %v649
      %vm666 = vcmp.eq.s32.totalorder %v622, %v650
      %vm667 = vcmp.eq.s32.totalorder %v622, %v651
      %vm668 = vcmp.eq.s32.totalorder %v622, %v652
      %vm669 = vcmp.eq.s32.totalorder %v622, %v653
      %vm670 = vcmp.eq.s32.totalorder %v622, %v654
      %vm671 = vcmp.lt.s32.totalorder %v605, 35
      %vm672 = vcmp.lt.s32.totalorder %v606, 35
      %vm673 = vcmp.lt.s32.totalorder %v607, 35
      %vm674 = vcmp.lt.s32.totalorder %v608, 35
      %vm675 = vcmp.lt.s32.totalorder %v609, 35
      %vm676 = vcmp.lt.s32.totalorder %v610, 35
      %vm677 = vcmp.lt.s32.totalorder %v611, 35
      %vm678 = vcmp.lt.s32.totalorder %v612, 35
      %vm679 = vcmp.lt.s32.totalorder %v613, 35
      %vm680 = vcmp.lt.s32.totalorder %v614, 35
      %vm681 = vcmp.lt.s32.totalorder %v615, 35
      %vm682 = vcmp.lt.s32.totalorder %v616, 35
      %vm683 = vcmp.lt.s32.totalorder %v617, 35
      %vm684 = vcmp.lt.s32.totalorder %v618, 35
      %vm685 = vcmp.lt.s32.totalorder %v619, 35
      %vm686 = vcmp.lt.s32.totalorder %v620, 35
      %vm687 = vmand %vm655, %vm671
      %vm688 = vmand %vm656, %vm672
      %vm689 = vmand %vm657, %vm673
      %vm690 = vmand %vm658, %vm674
      %vm691 = vmand %vm659, %vm675
      %vm692 = vmand %vm660, %vm676
      %vm693 = vmand %vm661, %vm677
      %vm694 = vmand %vm662, %vm678
      %vm695 = vmand %vm663, %vm679
      %vm696 = vmand %vm664, %vm680
      %vm697 = vmand %vm665, %vm681
      %vm698 = vmand %vm666, %vm682
      %vm699 = vmand %vm667, %vm683
      %vm700 = vmand %vm668, %vm684
      %vm701 = vmand %vm669, %vm685
      %vm702 = vmand %vm670, %vm686
      %v703 = vsel %vm687, 1.0, 0.0
      %v704 = vsel %vm688, 1.0, 0.0
      %v705 = vsel %vm689, 1.0, 0.0
      %v706 = vsel %vm690, 1.0, 0.0
      %v707 = vsel %vm691, 1.0, 0.0
      %v708 = vsel %vm692, 1.0, 0.0
      %v709 = vsel %vm693, 1.0, 0.0
      %v710 = vsel %vm694, 1.0, 0.0
      %v711 = vsel %vm695, 1.0, 0.0
      %v712 = vsel %vm696, 1.0, 0.0
      %v713 = vsel %vm697, 1.0, 0.0
      %v714 = vsel %vm698, 1.0, 0.0
      %v715 = vsel %vm699, 1.0, 0.0
      %v716 = vsel %vm700, 1.0, 0.0
      %v717 = vsel %vm701, 1.0, 0.0
      %v718 = vsel %vm702, 1.0, 0.0
      %v719 = vadd.s32 %v605, 2
      %v720 = vadd.s32 %v606, 2
      %v721 = vadd.s32 %v607, 2
      %v722 = vadd.s32 %v608, 2
      %v723 = vadd.s32 %v609, 2
      %v724 = vadd.s32 %v610, 2
      %v725 = vadd.s32 %v611, 2
      %v726 = vadd.s32 %v612, 2
      %v727 = vadd.s32 %v613, 2
      %v728 = vadd.s32 %v614, 2
      %v729 = vadd.s32 %v615, 2
      %v730 = vadd.s32 %v616, 2
      %v731 = vadd.s32 %v617, 2
      %v732 = vadd.s32 %v618, 2
      %v733 = vadd.s32 %v619, 2
      %v734 = vadd.s32 %v620, 2
      %vm735 = vcmp.eq.s32.totalorder %v622, %v719
      %vm736 = vcmp.eq.s32.totalorder %v622, %v720
      %vm737 = vcmp.eq.s32.totalorder %v622, %v721
      %vm738 = vcmp.eq.s32.totalorder %v622, %v722
      %vm739 = vcmp.eq.s32.totalorder %v622, %v723
      %vm740 = vcmp.eq.s32.totalorder %v622, %v724
      %vm741 = vcmp.eq.s32.totalorder %v622, %v725
      %vm742 = vcmp.eq.s32.totalorder %v622, %v726
      %vm743 = vcmp.eq.s32.totalorder %v622, %v727
      %vm744 = vcmp.eq.s32.totalorder %v622, %v728
      %vm745 = vcmp.eq.s32.totalorder %v622, %v729
      %vm746 = vcmp.eq.s32.totalorder %v622, %v730
      %vm747 = vcmp.eq.s32.totalorder %v622, %v731
      %vm748 = vcmp.eq.s32.totalorder %v622, %v732
      %vm749 = vcmp.eq.s32.totalorder %v622, %v733
      %vm750 = vcmp.eq.s32.totalorder %v622, %v734
      %vm751 = vcmp.lt.s32.totalorder %v605, 71
      %vm752 = vcmp.lt.s32.totalorder %v606, 71
      %vm753 = vcmp.lt.s32.totalorder %v607, 71
      %vm754 = vcmp.lt.s32.totalorder %v608, 71
      %vm755 = vcmp.lt.s32.totalorder %v609, 71
      %vm756 = vcmp.lt.s32.totalorder %v610, 71
      %vm757 = vcmp.lt.s32.totalorder %v611, 71
      %vm758 = vcmp.lt.s32.totalorder %v612, 71
      %vm759 = vcmp.lt.s32.totalorder %v613, 71
      %vm760 = vcmp.lt.s32.totalorder %v614, 71
      %vm761 = vcmp.lt.s32.totalorder %v615, 71
      %vm762 = vcmp.lt.s32.totalorder %v616, 71
      %vm763 = vcmp.lt.s32.totalorder %v617, 71
      %vm764 = vcmp.lt.s32.totalorder %v618, 71
      %vm765 = vcmp.lt.s32.totalorder %v619, 71
      %vm766 = vcmp.lt.s32.totalorder %v620, 71
      %vm767 = vmand %vm735, %vm751
      %vm768 = vmand %vm736, %vm752
      %vm769 = vmand %vm737, %vm753
      %vm770 = vmand %vm738, %vm754
      %vm771 = vmand %vm739, %vm755
      %vm772 = vmand %vm740, %vm756
      %vm773 = vmand %vm741, %vm757
      %vm774 = vmand %vm742, %vm758
      %vm775 = vmand %vm743, %vm759
      %vm776 = vmand %vm744, %vm760
      %vm777 = vmand %vm745, %vm761
      %vm778 = vmand %vm746, %vm762
      %vm779 = vmand %vm747, %vm763
      %vm780 = vmand %vm748, %vm764
      %vm781 = vmand %vm749, %vm765
      %vm782 = vmand %vm750, %vm766
      %v783 = vsel %vm767, 1.0, 0.0
      %v784 = vsel %vm768, 1.0, 0.0
      %v785 = vsel %vm769, 1.0, 0.0
      %v786 = vsel %vm770, 1.0, 0.0
      %v787 = vsel %vm771, 1.0, 0.0
      %v788 = vsel %vm772, 1.0, 0.0
      %v789 = vsel %vm773, 1.0, 0.0
      %v790 = vsel %vm774, 1.0, 0.0
      %v791 = vsel %vm775, 1.0, 0.0
      %v792 = vsel %vm776, 1.0, 0.0
      %v793 = vsel %vm777, 1.0, 0.0
      %v794 = vsel %vm778, 1.0, 0.0
      %v795 = vsel %vm779, 1.0, 0.0
      %v796 = vsel %vm780, 1.0, 0.0
      %v797 = vsel %vm781, 1.0, 0.0
      %v798 = vsel %vm782, 1.0, 0.0
      %v799 = vld [vmem:[%s1] sm:$0xff]
      %v800 = vld [vmem:[%s1 + $0x8] sm:$0xff]
      %v801 = vld [vmem:[%s2] sm:$0xff]
      %803 = vset.pattern.permute.xlu0 0
      %804 = vperm.xlu0 %803, %v801
      %v805 = vpop.permute.xlu0 %804
      loop: start=0, step=1, limit=9
      $region49: #{hyper_decoder.1} parent=47 // loop_pre_header
        _
      $region50: #{hyper_decoder.1} parent=47 // loop_header
        %s808 = sphi 0, %s812
        %p809 = scmp.ge.s32.totalorder %s808, 9
      $region51: #{hyper_decoder.1} parent=47 // loop_header_branch
        %811 = sbr.rel (%p809) target = $region55
      $region52: #{hyper_decoder.1} parent=47 // loop_body
        %s813 = smul.u32 %s808, 4
        %p814 = scmp.lt.s32.totalorder %s813, 31
        %s815 = scalar_select %p814, %s813, 31
        %s816 = smul.u32 %s815, 8
        %s817 = scalar_lea.vmem %s273, %s816
        %v818 = vld [vmem:[%s817] sm:$0xff]
        %s819 = sadd.s32 %s815, 1
        %s820 = smul.u32 %s819, 8
        %s821 = scalar_lea.vmem %s273, %s820
        %v822 = vld [vmem:[%s821] sm:$0xff]
        %s823 = sadd.s32 %s815, 2
        %s824 = smul.u32 %s823, 8
        %s825 = scalar_lea.vmem %s273, %s824
        %v826 = vld [vmem:[%s825] sm:$0xff]
        %s827 = sadd.s32 %s815, 3
        %s828 = smul.u32 %s827, 8
        %s829 = scalar_lea.vmem %s273, %s828
        %v830 = vld [vmem:[%s829] sm:$0xff]
        %s831 = sadd.s32 %s815, 4
        %s832 = smul.u32 %s831, 8
        %s833 = scalar_lea.vmem %s273, %s832
        %v834 = vld [vmem:[%s833] sm:$0xff]
        %s835 = sadd.s32 %s815, 5
        %s836 = smul.u32 %s835, 8
        %s837 = scalar_lea.vmem %s273, %s836
        %v838 = vld [vmem:[%s837] sm:$0xff]
        %s839 = sadd.s32 %s815, 6
        %s840 = smul.u32 %s839, 8
        %s841 = scalar_lea.vmem %s273, %s840
        %v842 = vld [vmem:[%s841] sm:$0xff]
        %s843 = sadd.s32 %s815, 7
        %s844 = smul.u32 %s843, 8
        %s845 = scalar_lea.vmem %s273, %s844
        %v846 = vld [vmem:[%s845] sm:$0xff]
        %vm847 = vcmask 285696
        %848 = vst.msk [vmem:[#allocation4] sm:$0xff] %vm847, %v818
        %850 = vrot.lane.b32.xlu0 %v818, 127
        %v851 = vpop.permute.xlu0 %850
        %853 = vst.msk [vmem:[#allocation4 + $0x20] sm:$0xff] %vm847, %v851
        %854 = vrot.lane.b32.xlu0 %v818, 126
        %v855 = vpop.permute.xlu0 %854
        %857 = vst.msk [vmem:[#allocation4 + $0x40] sm:$0xff] %vm847, %v855
        %858 = vrot.lane.b32.xlu0 %v818, 125
        %v859 = vpop.permute.xlu0 %858
        %861 = vst.msk [vmem:[#allocation4 + $0x60] sm:$0xff] %vm847, %v859
        %862 = vrot.lane.b32.xlu0 %v818, 124
        %v863 = vpop.permute.xlu0 %862
        %865 = vst.msk [vmem:[#allocation4 + $0x80] sm:$0xff] %vm847, %v863
        %866 = vst.msk [vmem:[#allocation4 + $0xa0] sm:$0xff] %vm847, %v822
        %868 = vrot.lane.b32.xlu0 %v822, 127
        %v869 = vpop.permute.xlu0 %868
        %871 = vst.msk [vmem:[#allocation4 + $0xc0] sm:$0xff] %vm847, %v869
        %872 = vrot.lane.b32.xlu0 %v822, 126
        %v873 = vpop.permute.xlu0 %872
        %875 = vst.msk [vmem:[#allocation4 + $0xe0] sm:$0xff] %vm847, %v873
        %876 = vrot.lane.b32.xlu0 %v822, 125
        %v877 = vpop.permute.xlu0 %876
        %879 = vst.msk [vmem:[#allocation4 + $0x100] sm:$0xff] %vm847, %v877
        %880 = vrot.lane.b32.xlu0 %v822, 124
        %v881 = vpop.permute.xlu0 %880
        %883 = vst.msk [vmem:[#allocation4 + $0x120] sm:$0xff] %vm847, %v881
        %884 = vst.msk [vmem:[#allocation4 + $0x140] sm:$0xff] %vm847, %v826
        %886 = vrot.lane.b32.xlu0 %v826, 127
        %v887 = vpop.permute.xlu0 %886
        %889 = vst.msk [vmem:[#allocation4 + $0x160] sm:$0xff] %vm847, %v887
        %890 = vrot.lane.b32.xlu0 %v826, 126
        %v891 = vpop.permute.xlu0 %890
        %893 = vst.msk [vmem:[#allocation4 + $0x180] sm:$0xff] %vm847, %v891
        %894 = vrot.lane.b32.xlu0 %v826, 125
        %v895 = vpop.permute.xlu0 %894
        %897 = vst.msk [vmem:[#allocation4 + $0x1a0] sm:$0xff] %vm847, %v895
        %898 = vrot.lane.b32.xlu0 %v826, 124
        %v899 = vpop.permute.xlu0 %898
        %901 = vst.msk [vmem:[#allocation4 + $0x1c0] sm:$0xff] %vm847, %v899
        %902 = vst.msk [vmem:[#allocation4 + $0x1e0] sm:$0xff] %vm847, %v830
        %904 = vrot.lane.b32.xlu0 %v830, 127
        %v905 = vpop.permute.xlu0 %904
        %907 = vst.msk [vmem:[#allocation4 + $0x200] sm:$0xff] %vm847, %v905
        %908 = vrot.lane.b32.xlu0 %v830, 126
        %v909 = vpop.permute.xlu0 %908
        %911 = vst.msk [vmem:[#allocation4 + $0x220] sm:$0xff] %vm847, %v909
        %912 = vrot.lane.b32.xlu0 %v830, 125
        %v913 = vpop.permute.xlu0 %912
        %915 = vst.msk [vmem:[#allocation4 + $0x240] sm:$0xff] %vm847, %v913
        %916 = vrot.lane.b32.xlu0 %v830, 124
        %v917 = vpop.permute.xlu0 %916
        %919 = vst.msk [vmem:[#allocation4 + $0x260] sm:$0xff] %vm847, %v917
        %920 = vst.msk [vmem:[#allocation4 + $0x280] sm:$0xff] %vm847, %v834
        %922 = vrot.lane.b32.xlu0 %v834, 127
        %v923 = vpop.permute.xlu0 %922
        %925 = vst.msk [vmem:[#allocation4 + $0x2a0] sm:$0xff] %vm847, %v923
        %926 = vrot.lane.b32.xlu0 %v834, 126
        %v927 = vpop.permute.xlu0 %926
        %929 = vst.msk [vmem:[#allocation4 + $0x2c0] sm:$0xff] %vm847, %v927
        %930 = vrot.lane.b32.xlu0 %v834, 125
        %v931 = vpop.permute.xlu0 %930
        %933 = vst.msk [vmem:[#allocation4 + $0x2e0] sm:$0xff] %vm847, %v931
        %934 = vrot.lane.b32.xlu0 %v834, 124
        %v935 = vpop.permute.xlu0 %934
        %937 = vst.msk [vmem:[#allocation4 + $0x300] sm:$0xff] %vm847, %v935
        %938 = vst.msk [vmem:[#allocation4 + $0x8] sm:$0xff] %vm847, %v822
        %939 = vst.msk [vmem:[#allocation4 + $0x28] sm:$0xff] %vm847, %v869
        %940 = vst.msk [vmem:[#allocation4 + $0x48] sm:$0xff] %vm847, %v873
        %941 = vst.msk [vmem:[#allocation4 + $0x68] sm:$0xff] %vm847, %v877
        %942 = vst.msk [vmem:[#allocation4 + $0x88] sm:$0xff] %vm847, %v881
        %943 = vst.msk [vmem:[#allocation4 + $0xa8] sm:$0xff] %vm847, %v826
        %944 = vst.msk [vmem:[#allocation4 + $0xc8] sm:$0xff] %vm847, %v887
        %945 = vst.msk [vmem:[#allocation4 + $0xe8] sm:$0xff] %vm847, %v891
        %946 = vst.msk [vmem:[#allocation4 + $0x108] sm:$0xff] %vm847, %v895
        %947 = vst.msk [vmem:[#allocation4 + $0x128] sm:$0xff] %vm847, %v899
        %948 = vst.msk [vmem:[#allocation4 + $0x148] sm:$0xff] %vm847, %v830
        %949 = vst.msk [vmem:[#allocation4 + $0x168] sm:$0xff] %vm847, %v905
        %950 = vst.msk [vmem:[#allocation4 + $0x188] sm:$0xff] %vm847, %v909
        %951 = vst.msk [vmem:[#allocation4 + $0x1a8] sm:$0xff] %vm847, %v913
        %952 = vst.msk [vmem:[#allocation4 + $0x1c8] sm:$0xff] %vm847, %v917
        %953 = vst.msk [vmem:[#allocation4 + $0x1e8] sm:$0xff] %vm847, %v834
        %954 = vst.msk [vmem:[#allocation4 + $0x208] sm:$0xff] %vm847, %v923
        %955 = vst.msk [vmem:[#allocation4 + $0x228] sm:$0xff] %vm847, %v927
        %956 = vst.msk [vmem:[#allocation4 + $0x248] sm:$0xff] %vm847, %v931
        %957 = vst.msk [vmem:[#allocation4 + $0x268] sm:$0xff] %vm847, %v935
        %958 = vst.msk [vmem:[#allocation4 + $0x288] sm:$0xff] %vm847, %v838
        %960 = vrot.lane.b32.xlu0 %v838, 127
        %v961 = vpop.permute.xlu0 %960
        %963 = vst.msk [vmem:[#allocation4 + $0x2a8] sm:$0xff] %vm847, %v961
        %964 = vrot.lane.b32.xlu0 %v838, 126
        %v965 = vpop.permute.xlu0 %964
        %967 = vst.msk [vmem:[#allocation4 + $0x2c8] sm:$0xff] %vm847, %v965
        %968 = vrot.lane.b32.xlu0 %v838, 125
        %v969 = vpop.permute.xlu0 %968
        %971 = vst.msk [vmem:[#allocation4 + $0x2e8] sm:$0xff] %vm847, %v969
        %972 = vrot.lane.b32.xlu0 %v838, 124
        %v973 = vpop.permute.xlu0 %972
        %975 = vst.msk [vmem:[#allocation4 + $0x308] sm:$0xff] %vm847, %v973
        %976 = vst.msk [vmem:[#allocation4 + $0x10] sm:$0xff] %vm847, %v826
        %977 = vst.msk [vmem:[#allocation4 + $0x30] sm:$0xff] %vm847, %v887
        %978 = vst.msk [vmem:[#allocation4 + $0x50] sm:$0xff] %vm847, %v891
        %979 = vst.msk [vmem:[#allocation4 + $0x70] sm:$0xff] %vm847, %v895
        %980 = vst.msk [vmem:[#allocation4 + $0x90] sm:$0xff] %vm847, %v899
        %981 = vst.msk [vmem:[#allocation4 + $0xb0] sm:$0xff] %vm847, %v830
        %982 = vst.msk [vmem:[#allocation4 + $0xd0] sm:$0xff] %vm847, %v905
        %983 = vst.msk [vmem:[#allocation4 + $0xf0] sm:$0xff] %vm847, %v909
        %984 = vst.msk [vmem:[#allocation4 + $0x110] sm:$0xff] %vm847, %v913
        %985 = vst.msk [vmem:[#allocation4 + $0x130] sm:$0xff] %vm847, %v917
        %986 = vst.msk [vmem:[#allocation4 + $0x150] sm:$0xff] %vm847, %v834
        %987 = vst.msk [vmem:[#allocation4 + $0x170] sm:$0xff] %vm847, %v923
        %988 = vst.msk [vmem:[#allocation4 + $0x190] sm:$0xff] %vm847, %v927
        %989 = vst.msk [vmem:[#allocation4 + $0x1b0] sm:$0xff] %vm847, %v931
        %990 = vst.msk [vmem:[#allocation4 + $0x1d0] sm:$0xff] %vm847, %v935
        %991 = vst.msk [vmem:[#allocation4 + $0x1f0] sm:$0xff] %vm847, %v838
        %992 = vst.msk [vmem:[#allocation4 + $0x210] sm:$0xff] %vm847, %v961
        %993 = vst.msk [vmem:[#allocation4 + $0x230] sm:$0xff] %vm847, %v965
        %994 = vst.msk [vmem:[#allocation4 + $0x250] sm:$0xff] %vm847, %v969
        %995 = vst.msk [vmem:[#allocation4 + $0x270] sm:$0xff] %vm847, %v973
        %996 = vst.msk [vmem:[#allocation4 + $0x290] sm:$0xff] %vm847, %v842
        %998 = vrot.lane.b32.xlu0 %v842, 127
        %v999 = vpop.permute.xlu0 %998
        %1001 = vst.msk [vmem:[#allocation4 + $0x2b0] sm:$0xff] %vm847, %v999
        %1002 = vrot.lane.b32.xlu0 %v842, 126
        %v1003 = vpop.permute.xlu0 %1002
        %1005 = vst.msk [vmem:[#allocation4 + $0x2d0] sm:$0xff] %vm847, %v1003
        %1006 = vrot.lane.b32.xlu0 %v842, 125
        %v1007 = vpop.permute.xlu0 %1006
        %1009 = vst.msk [vmem:[#allocation4 + $0x2f0] sm:$0xff] %vm847, %v1007
        %1010 = vrot.lane.b32.xlu0 %v842, 124
        %v1011 = vpop.permute.xlu0 %1010
        %1013 = vst.msk [vmem:[#allocation4 + $0x310] sm:$0xff] %vm847, %v1011
        %1014 = vst.msk [vmem:[#allocation4 + $0x18] sm:$0xff] %vm847, %v830
        %1015 = vst.msk [vmem:[#allocation4 + $0x38] sm:$0xff] %vm847, %v905
        %1016 = vst.msk [vmem:[#allocation4 + $0x58] sm:$0xff] %vm847, %v909
        %1017 = vst.msk [vmem:[#allocation4 + $0x78] sm:$0xff] %vm847, %v913
        %1018 = vst.msk [vmem:[#allocation4 + $0x98] sm:$0xff] %vm847, %v917
        %1019 = vst.msk [vmem:[#allocation4 + $0xb8] sm:$0xff] %vm847, %v834
        %1020 = vst.msk [vmem:[#allocation4 + $0xd8] sm:$0xff] %vm847, %v923
        %1021 = vst.msk [vmem:[#allocation4 + $0xf8] sm:$0xff] %vm847, %v927
        %1022 = vst.msk [vmem:[#allocation4 + $0x118] sm:$0xff] %vm847, %v931
        %1023 = vst.msk [vmem:[#allocation4 + $0x138] sm:$0xff] %vm847, %v935
        %1024 = vst.msk [vmem:[#allocation4 + $0x158] sm:$0xff] %vm847, %v838
        %1025 = vst.msk [vmem:[#allocation4 + $0x178] sm:$0xff] %vm847, %v961
        %1026 = vst.msk [vmem:[#allocation4 + $0x198] sm:$0xff] %vm847, %v965
        %1027 = vst.msk [vmem:[#allocation4 + $0x1b8] sm:$0xff] %vm847, %v969
        %1028 = vst.msk [vmem:[#allocation4 + $0x1d8] sm:$0xff] %vm847, %v973
        %1029 = vst.msk [vmem:[#allocation4 + $0x1f8] sm:$0xff] %vm847, %v842
        %1030 = vst.msk [vmem:[#allocation4 + $0x218] sm:$0xff] %vm847, %v999
        %1031 = vst.msk [vmem:[#allocation4 + $0x238] sm:$0xff] %vm847, %v1003
        %1032 = vst.msk [vmem:[#allocation4 + $0x258] sm:$0xff] %vm847, %v1007
        %1033 = vst.msk [vmem:[#allocation4 + $0x278] sm:$0xff] %vm847, %v1011
        %1034 = vst.msk [vmem:[#allocation4 + $0x298] sm:$0xff] %vm847, %v846
        %1036 = vrot.lane.b32.xlu0 %v846, 127
        %v1037 = vpop.permute.xlu0 %1036
        %1039 = vst.msk [vmem:[#allocation4 + $0x2b8] sm:$0xff] %vm847, %v1037
        %1040 = vrot.lane.b32.xlu0 %v846, 126
        %v1041 = vpop.permute.xlu0 %1040
        %1043 = vst.msk [vmem:[#allocation4 + $0x2d8] sm:$0xff] %vm847, %v1041
        %1044 = vrot.lane.b32.xlu0 %v846, 125
        %v1045 = vpop.permute.xlu0 %1044
        %1047 = vst.msk [vmem:[#allocation4 + $0x2f8] sm:$0xff] %vm847, %v1045
        %1048 = vrot.lane.b32.xlu0 %v846, 124
        %v1049 = vpop.permute.xlu0 %1048
        %1051 = vst.msk [vmem:[#allocation4 + $0x318] sm:$0xff] %vm847, %v1049
        %v1052 = vld [vmem:[#allocation4] sm:$0xff]
        %v1053 = vld [vmem:[#allocation4 + $0x8] sm:$0xff]
        %v1054 = vld [vmem:[#allocation4 + $0x10] sm:$0xff]
        %v1055 = vld [vmem:[#allocation4 + $0x18] sm:$0xff]
        %v1056 = vld [vmem:[#allocation4 + $0x20] sm:$0xff]
        %v1057 = vld [vmem:[#allocation4 + $0x28] sm:$0xff]
        %v1058 = vld [vmem:[#allocation4 + $0x30] sm:$0xff]
        %v1059 = vld [vmem:[#allocation4 + $0x38] sm:$0xff]
        %v1060 = vld [vmem:[#allocation4 + $0x40] sm:$0xff]
        %v1061 = vld [vmem:[#allocation4 + $0x48] sm:$0xff]
        %v1062 = vld [vmem:[#allocation4 + $0x50] sm:$0xff]
        %v1063 = vld [vmem:[#allocation4 + $0x58] sm:$0xff]
        %v1064 = vld [vmem:[#allocation4 + $0x60] sm:$0xff]
        %v1065 = vld [vmem:[#allocation4 + $0x68] sm:$0xff]
        %v1066 = vld [vmem:[#allocation4 + $0x70] sm:$0xff]
        %v1067 = vld [vmem:[#allocation4 + $0x78] sm:$0xff]
        %v1068 = vld [vmem:[#allocation4 + $0x80] sm:$0xff]
        %v1069 = vld [vmem:[#allocation4 + $0x88] sm:$0xff]
        %v1070 = vld [vmem:[#allocation4 + $0x90] sm:$0xff]
        %v1071 = vld [vmem:[#allocation4 + $0x98] sm:$0xff]
        %v1072 = vld [vmem:[#allocation4 + $0xa0] sm:$0xff]
        %v1073 = vld [vmem:[#allocation4 + $0xa8] sm:$0xff]
        %v1074 = vld [vmem:[#allocation4 + $0xb0] sm:$0xff]
        %v1075 = vld [vmem:[#allocation4 + $0xb8] sm:$0xff]
        %v1076 = vld [vmem:[#allocation4 + $0xc0] sm:$0xff]
        %v1077 = vld [vmem:[#allocation4 + $0xc8] sm:$0xff]
        %v1078 = vld [vmem:[#allocation4 + $0xd0] sm:$0xff]
        %v1079 = vld [vmem:[#allocation4 + $0xd8] sm:$0xff]
        %v1080 = vld [vmem:[#allocation4 + $0xe0] sm:$0xff]
        %v1081 = vld [vmem:[#allocation4 + $0xe8] sm:$0xff]
        %v1082 = vld [vmem:[#allocation4 + $0xf0] sm:$0xff]
        %v1083 = vld [vmem:[#allocation4 + $0xf8] sm:$0xff]
        %v1084 = vld [vmem:[#allocation4 + $0x100] sm:$0xff]
        %v1085 = vld [vmem:[#allocation4 + $0x108] sm:$0xff]
        %v1086 = vld [vmem:[#allocation4 + $0x110] sm:$0xff]
        %v1087 = vld [vmem:[#allocation4 + $0x118] sm:$0xff]
        %v1088 = vld [vmem:[#allocation4 + $0x120] sm:$0xff]
        %v1089 = vld [vmem:[#allocation4 + $0x128] sm:$0xff]
        %v1090 = vld [vmem:[#allocation4 + $0x130] sm:$0xff]
        %v1091 = vld [vmem:[#allocation4 + $0x138] sm:$0xff]
        %v1092 = vld [vmem:[#allocation4 + $0x140] sm:$0xff]
        %v1093 = vld [vmem:[#allocation4 + $0x148] sm:$0xff]
        %v1094 = vld [vmem:[#allocation4 + $0x150] sm:$0xff]
        %v1095 = vld [vmem:[#allocation4 + $0x158] sm:$0xff]
        %v1096 = vld [vmem:[#allocation4 + $0x160] sm:$0xff]
        %v1097 = vld [vmem:[#allocation4 + $0x168] sm:$0xff]
        %v1098 = vld [vmem:[#allocation4 + $0x170] sm:$0xff]
        %v1099 = vld [vmem:[#allocation4 + $0x178] sm:$0xff]
        %v1100 = vld [vmem:[#allocation4 + $0x180] sm:$0xff]
        %v1101 = vld [vmem:[#allocation4 + $0x188] sm:$0xff]
        %v1102 = vld [vmem:[#allocation4 + $0x190] sm:$0xff]
        %v1103 = vld [vmem:[#allocation4 + $0x198] sm:$0xff]
        %v1104 = vld [vmem:[#allocation4 + $0x1a0] sm:$0xff]
        %v1105 = vld [vmem:[#allocation4 + $0x1a8] sm:$0xff]
        %v1106 = vld [vmem:[#allocation4 + $0x1b0] sm:$0xff]
        %v1107 = vld [vmem:[#allocation4 + $0x1b8] sm:$0xff]
        %v1108 = vld [vmem:[#allocation4 + $0x1c0] sm:$0xff]
        %v1109 = vld [vmem:[#allocation4 + $0x1c8] sm:$0xff]
        %v1110 = vld [vmem:[#allocation4 + $0x1d0] sm:$0xff]
        %v1111 = vld [vmem:[#allocation4 + $0x1d8] sm:$0xff]
        %v1112 = vld [vmem:[#allocation4 + $0x1e0] sm:$0xff]
        %v1113 = vld [vmem:[#allocation4 + $0x1e8] sm:$0xff]
        %v1114 = vld [vmem:[#allocation4 + $0x1f0] sm:$0xff]
        %v1115 = vld [vmem:[#allocation4 + $0x1f8] sm:$0xff]
        %v1116 = vld [vmem:[#allocation4 + $0x200] sm:$0xff]
        %v1117 = vld [vmem:[#allocation4 + $0x208] sm:$0xff]
        %v1118 = vld [vmem:[#allocation4 + $0x210] sm:$0xff]
        %v1119 = vld [vmem:[#allocation4 + $0x218] sm:$0xff]
        %v1120 = vld [vmem:[#allocation4 + $0x220] sm:$0xff]
        %v1121 = vld [vmem:[#allocation4 + $0x228] sm:$0xff]
        %v1122 = vld [vmem:[#allocation4 + $0x230] sm:$0xff]
        %v1123 = vld [vmem:[#allocation4 + $0x238] sm:$0xff]
        %v1124 = vld [vmem:[#allocation4 + $0x240] sm:$0xff]
        %v1125 = vld [vmem:[#allocation4 + $0x248] sm:$0xff]
        %v1126 = vld [vmem:[#allocation4 + $0x250] sm:$0xff]
        %v1127 = vld [vmem:[#allocation4 + $0x258] sm:$0xff]
        %v1128 = vld [vmem:[#allocation4 + $0x260] sm:$0xff]
        %v1129 = vld [vmem:[#allocation4 + $0x268] sm:$0xff]
        %v1130 = vld [vmem:[#allocation4 + $0x270] sm:$0xff]
        %v1131 = vld [vmem:[#allocation4 + $0x278] sm:$0xff]
        %v1132 = vld [vmem:[#allocation4 + $0x280] sm:$0xff]
        %v1133 = vld [vmem:[#allocation4 + $0x288] sm:$0xff]
        %v1134 = vld [vmem:[#allocation4 + $0x290] sm:$0xff]
        %v1135 = vld [vmem:[#allocation4 + $0x298] sm:$0xff]
        %v1136 = vld [vmem:[#allocation4 + $0x2a0] sm:$0xff]
        %v1137 = vld [vmem:[#allocation4 + $0x2a8] sm:$0xff]
        %v1138 = vld [vmem:[#allocation4 + $0x2b0] sm:$0xff]
        %v1139 = vld [vmem:[#allocation4 + $0x2b8] sm:$0xff]
        %v1140 = vld [vmem:[#allocation4 + $0x2c0] sm:$0xff]
        %v1141 = vld [vmem:[#allocation4 + $0x2c8] sm:$0xff]
        %v1142 = vld [vmem:[#allocation4 + $0x2d0] sm:$0xff]
        %v1143 = vld [vmem:[#allocation4 + $0x2d8] sm:$0xff]
        %v1144 = vld [vmem:[#allocation4 + $0x2e0] sm:$0xff]
        %v1145 = vld [vmem:[#allocation4 + $0x2e8] sm:$0xff]
        %v1146 = vld [vmem:[#allocation4 + $0x2f0] sm:$0xff]
        %v1147 = vld [vmem:[#allocation4 + $0x2f8] sm:$0xff]
        %v1148 = vld [vmem:[#allocation4 + $0x300] sm:$0xff]
        %v1149 = vld [vmem:[#allocation4 + $0x308] sm:$0xff]
        %v1150 = vld [vmem:[#allocation4 + $0x310] sm:$0xff]
        %v1151 = vld [vmem:[#allocation4 + $0x318] sm:$0xff]
        %vm1152 = vcmask 588800
        %v1154 = vsel %vm1152, %v800, 0
        %1156 = vmatpush.msra.mxu0 %v1112
        %1157 = vmatpush.msra.mxu0 %v1108
        %1158 = vmatpush.msra.mxu0 %v1104
        %1159 = vmatpush.msra.mxu0 %v1100
        %1160 = vmatpush.msra.mxu0 %v1096
        %1161 = vmatpush.msra.mxu0 %v1092
        %1162 = vmatpush.msra.mxu0 %v1088
        %1163 = vmatpush.msra.mxu0 %v1084
        %1164 = vmatpush.msra.mxu0 %v1080
        %1165 = vmatpush.msra.mxu0 %v1076
        %1166 = vmatpush.msra.mxu0 %v1072
        %1167 = vmatpush.msra.mxu0 %v1068
        %1168 = vmatpush.msra.mxu0 %v1064
        %1169 = vmatpush.msra.mxu0 %v1060
        %1170 = vmatpush.msra.mxu0 %v1056
        %1171 = vmatpush.msra.mxu0 %v1052
        %1172 = vmatmul.f32.gmra.mxu0 %v799
        %v1173 = vpop.f32.mrf.mxu0
        %v1174 = vadd.f32 %v805, %v1173
        %1175 = vdwg.mxu0
        %1176 = vmatpush.msra.mxu0 0.0
        %1177 = vmatpush.msra.mxu0 0.0
        %1178 = vmatpush.msra.mxu0 0.0
        %1179 = vmatpush.msra.mxu0 0.0
        %1180 = vmatpush.msra.mxu0 0.0
        %1181 = vmatpush.msra.mxu0 0.0
        %1182 = vmatpush.msra.mxu0 0.0
        %1183 = vmatpush.msra.mxu0 %v1148
        %1184 = vmatpush.msra.mxu0 %v1144
        %1185 = vmatpush.msra.mxu0 %v1140
        %1186 = vmatpush.msra.mxu0 %v1136
        %1187 = vmatpush.msra.mxu0 %v1132
        %1188 = vmatpush.msra.mxu0 %v1128
        %1189 = vmatpush.msra.mxu0 %v1124
        %1190 = vmatpush.msra.mxu0 %v1120
        %1191 = vmatpush.msra.mxu0 %v1116
        %1192 = vmatmul.f32.gmra.mxu0 %v1154
        %v1193 = vpop.f32.mrf.mxu0
        %v1194 = vadd.f32 %v1174, %v1193
        %1195 = vdwg.mxu0
        %1196 = vmatpush.msra.mxu0 %v1113
        %1197 = vmatpush.msra.mxu0 %v1109
        %1198 = vmatpush.msra.mxu0 %v1105
        %1199 = vmatpush.msra.mxu0 %v1101
        %1200 = vmatpush.msra.mxu0 %v1097
        %1201 = vmatpush.msra.mxu0 %v1093
        %1202 = vmatpush.msra.mxu0 %v1089
        %1203 = vmatpush.msra.mxu0 %v1085
        %1204 = vmatpush.msra.mxu0 %v1081
        %1205 = vmatpush.msra.mxu0 %v1077
        %1206 = vmatpush.msra.mxu0 %v1073
        %1207 = vmatpush.msra.mxu0 %v1069
        %1208 = vmatpush.msra.mxu0 %v1065
        %1209 = vmatpush.msra.mxu0 %v1061
        %1210 = vmatpush.msra.mxu0 %v1057
        %1211 = vmatpush.msra.mxu0 %v1053
        %1212 = vmatmul.f32.gmra.mxu0 %v799
        %v1213 = vpop.f32.mrf.mxu0
        %v1214 = vadd.f32 %v805, %v1213
        %1215 = vdwg.mxu0
        %1216 = vmatpush.msra.mxu0 0.0
        %1217 = vmatpush.msra.mxu0 0.0
        %1218 = vmatpush.msra.mxu0 0.0
        %1219 = vmatpush.msra.mxu0 0.0
        %1220 = vmatpush.msra.mxu0 0.0
        %1221 = vmatpush.msra.mxu0 0.0
        %1222 = vmatpush.msra.mxu0 0.0
        %1223 = vmatpush.msra.mxu0 %v1149
        %1224 = vmatpush.msra.mxu0 %v1145
        %1225 = vmatpush.msra.mxu0 %v1141
        %1226 = vmatpush.msra.mxu0 %v1137
        %1227 = vmatpush.msra.mxu0 %v1133
        %1228 = vmatpush.msra.mxu0 %v1129
        %1229 = vmatpush.msra.mxu0 %v1125
        %1230 = vmatpush.msra.mxu0 %v1121
        %1231 = vmatpush.msra.mxu0 %v1117
        %1232 = vmatmul.f32.gmra.mxu0 %v1154
        %v1233 = vpop.f32.mrf.mxu0
        %v1234 = vadd.f32 %v1214, %v1233
        %1235 = vdwg.mxu0
        %1236 = vmatpush.msra.mxu0 %v1114
        %1237 = vmatpush.msra.mxu0 %v1110
        %1238 = vmatpush.msra.mxu0 %v1106
        %1239 = vmatpush.msra.mxu0 %v1102
        %1240 = vmatpush.msra.mxu0 %v1098
        %1241 = vmatpush.msra.mxu0 %v1094
        %1242 = vmatpush.msra.mxu0 %v1090
        %1243 = vmatpush.msra.mxu0 %v1086
        %1244 = vmatpush.msra.mxu0 %v1082
        %1245 = vmatpush.msra.mxu0 %v1078
        %1246 = vmatpush.msra.mxu0 %v1074
        %1247 = vmatpush.msra.mxu0 %v1070
        %1248 = vmatpush.msra.mxu0 %v1066
        %1249 = vmatpush.msra.mxu0 %v1062
        %1250 = vmatpush.msra.mxu0 %v1058
        %1251 = vmatpush.msra.mxu0 %v1054
        %1252 = vmatmul.f32.gmra.mxu0 %v799
        %v1253 = vpop.f32.mrf.mxu0
        %v1254 = vadd.f32 %v805, %v1253
        %1255 = vdwg.mxu0
        %1256 = vmatpush.msra.mxu0 0.0
        %1257 = vmatpush.msra.mxu0 0.0
        %1258 = vmatpush.msra.mxu0 0.0
        %1259 = vmatpush.msra.mxu0 0.0
        %1260 = vmatpush.msra.mxu0 0.0
        %1261 = vmatpush.msra.mxu0 0.0
        %1262 = vmatpush.msra.mxu0 0.0
        %1263 = vmatpush.msra.mxu0 %v1150
        %1264 = vmatpush.msra.mxu0 %v1146
        %1265 = vmatpush.msra.mxu0 %v1142
        %1266 = vmatpush.msra.mxu0 %v1138
        %1267 = vmatpush.msra.mxu0 %v1134
        %1268 = vmatpush.msra.mxu0 %v1130
        %1269 = vmatpush.msra.mxu0 %v1126
        %1270 = vmatpush.msra.mxu0 %v1122
        %1271 = vmatpush.msra.mxu0 %v1118
        %1272 = vmatmul.f32.gmra.mxu0 %v1154
        %v1273 = vpop.f32.mrf.mxu0
        %v1274 = vadd.f32 %v1254, %v1273
        %1275 = vdwg.mxu0
        %1276 = vmatpush.msra.mxu0 %v1115
        %1277 = vmatpush.msra.mxu0 %v1111
        %1278 = vmatpush.msra.mxu0 %v1107
        %1279 = vmatpush.msra.mxu0 %v1103
        %1280 = vmatpush.msra.mxu0 %v1099
        %1281 = vmatpush.msra.mxu0 %v1095
        %1282 = vmatpush.msra.mxu0 %v1091
        %1283 = vmatpush.msra.mxu0 %v1087
        %1284 = vmatpush.msra.mxu0 %v1083
        %1285 = vmatpush.msra.mxu0 %v1079
        %1286 = vmatpush.msra.mxu0 %v1075
        %1287 = vmatpush.msra.mxu0 %v1071
        %1288 = vmatpush.msra.mxu0 %v1067
        %1289 = vmatpush.msra.mxu0 %v1063
        %1290 = vmatpush.msra.mxu0 %v1059
        %1291 = vmatpush.msra.mxu0 %v1055
        %1292 = vmatmul.f32.gmra.mxu0 %v799
        %v1293 = vpop.f32.mrf.mxu0
        %v1294 = vadd.f32 %v805, %v1293
        %1295 = vdwg.mxu0
        %1296 = vmatpush.msra.mxu0 0.0
        %1297 = vmatpush.msra.mxu0 0.0
        %1298 = vmatpush.msra.mxu0 0.0
        %1299 = vmatpush.msra.mxu0 0.0
        %1300 = vmatpush.msra.mxu0 0.0
        %1301 = vmatpush.msra.mxu0 0.0
        %1302 = vmatpush.msra.mxu0 0.0
        %1303 = vmatpush.msra.mxu0 %v1151
        %1304 = vmatpush.msra.mxu0 %v1147
        %1305 = vmatpush.msra.mxu0 %v1143
        %1306 = vmatpush.msra.mxu0 %v1139
        %1307 = vmatpush.msra.mxu0 %v1135
        %1308 = vmatpush.msra.mxu0 %v1131
        %1309 = vmatpush.msra.mxu0 %v1127
        %1310 = vmatpush.msra.mxu0 %v1123
        %1311 = vmatpush.msra.mxu0 %v1119
        %1312 = vmatmul.f32.gmra.mxu0 %v1154
        %v1313 = vpop.f32.mrf.mxu0
        %v1314 = vadd.f32 %v1294, %v1313
        %1315 = vdwg.mxu0
        %vm1316 = vcmp.ge.f32.partialorder %v1194, 0.0
        %vm1317 = vcmp.ge.f32.partialorder %v1234, 0.0
        %vm1318 = vcmp.ge.f32.partialorder %v1274, 0.0
        %vm1319 = vcmp.ge.f32.partialorder %v1314, 0.0
        %v1320 = vmul.f32 %v1194, 0.01
        %v1321 = vmul.f32 %v1234, 0.01
        %v1322 = vmul.f32 %v1274, 0.01
        %v1323 = vmul.f32 %v1314, 0.01
        %v1324 = vsel %vm1316, %v1194, %v1320
        %v1325 = vsel %vm1317, %v1234, %v1321
        %v1326 = vsel %vm1318, %v1274, %v1322
        %v1327 = vsel %vm1319, %v1314, %v1323
        %1328 = vmatpush.msra.mxu0 %v718
        %1329 = vmatpush.msra.mxu0 %v717
        %1330 = vmatpush.msra.mxu0 %v716
        %1331 = vmatpush.msra.mxu0 %v715
        %1332 = vmatpush.msra.mxu0 %v714
        %1333 = vmatpush.msra.mxu0 %v713
        %1334 = vmatpush.msra.mxu0 %v712
        %1335 = vmatpush.msra.mxu0 %v711
        %1336 = vmatpush.msra.mxu0 %v710
        %1337 = vmatpush.msra.mxu0 %v709
        %1338 = vmatpush.msra.mxu0 %v708
        %1339 = vmatpush.msra.mxu0 %v707
        %1340 = vmatpush.msra.mxu0 %v706
        %1341 = vmatpush.msra.mxu0 %v705
        %1342 = vmatpush.msra.mxu0 %v704
        %1343 = vmatpush.msra.mxu0 %v703
        %1344 = vmatmul.f32.gmra.mxu0 %v1324
        %v1345 = vpop.f32.mrf.mxu0
        %v1346 = vadd.f32 0.0, %v1345
        %1347 = vdwg.mxu0
        %s1348 = smul.u32 %s815, 2
        %s1349 = sadd.s32 %s1348, 3
        %s1350 = smul.u32 %s1349, 8
        %s1351 = scalar_lea.vmem [#allocation2], %s1350
        %1352 = vst [vmem:[%s1351] sm:$0xff] %v1346
        %1353 = vmatpush.msra.mxu0 %v718
        %1354 = vmatpush.msra.mxu0 %v717
        %1355 = vmatpush.msra.mxu0 %v716
        %1356 = vmatpush.msra.mxu0 %v715
        %1357 = vmatpush.msra.mxu0 %v714
        %1358 = vmatpush.msra.mxu0 %v713
        %1359 = vmatpush.msra.mxu0 %v712
        %1360 = vmatpush.msra.mxu0 %v711
        %1361 = vmatpush.msra.mxu0 %v710
        %1362 = vmatpush.msra.mxu0 %v709
        %1363 = vmatpush.msra.mxu0 %v708
        %1364 = vmatpush.msra.mxu0 %v707
        %1365 = vmatpush.msra.mxu0 %v706
        %1366 = vmatpush.msra.mxu0 %v705
        %1367 = vmatpush.msra.mxu0 %v704
        %1368 = vmatpush.msra.mxu0 %v703
        %1369 = vmatmul.f32.gmra.mxu0 %v1325
        %v1370 = vpop.f32.mrf.mxu0
        %v1371 = vadd.f32 0.0, %v1370
        %1372 = vdwg.mxu0
        %s1373 = smul.u32 %s819, 2
        %s1374 = sadd.s32 %s1373, 3
        %s1375 = smul.u32 %s1374, 8
        %s1376 = scalar_lea.vmem [#allocation2], %s1375
        %1377 = vst [vmem:[%s1376] sm:$0xff] %v1371
        %1378 = vmatpush.msra.mxu0 %v718
        %1379 = vmatpush.msra.mxu0 %v717
        %1380 = vmatpush.msra.mxu0 %v716
        %1381 = vmatpush.msra.mxu0 %v715
        %1382 = vmatpush.msra.mxu0 %v714
        %1383 = vmatpush.msra.mxu0 %v713
        %1384 = vmatpush.msra.mxu0 %v712
        %1385 = vmatpush.msra.mxu0 %v711
        %1386 = vmatpush.msra.mxu0 %v710
        %1387 = vmatpush.msra.mxu0 %v709
        %1388 = vmatpush.msra.mxu0 %v708
        %1389 = vmatpush.msra.mxu0 %v707
        %1390 = vmatpush.msra.mxu0 %v706
        %1391 = vmatpush.msra.mxu0 %v705
        %1392 = vmatpush.msra.mxu0 %v704
        %1393 = vmatpush.msra.mxu0 %v703
        %1394 = vmatmul.f32.gmra.mxu0 %v1326
        %v1395 = vpop.f32.mrf.mxu0
        %v1396 = vadd.f32 0.0, %v1395
        %1397 = vdwg.mxu0
        %s1398 = smul.u32 %s823, 2
        %s1399 = sadd.s32 %s1398, 3
        %s1400 = smul.u32 %s1399, 8
        %s1401 = scalar_lea.vmem [#allocation2], %s1400
        %1402 = vst [vmem:[%s1401] sm:$0xff] %v1396
        %1403 = vmatpush.msra.mxu0 %v718
        %1404 = vmatpush.msra.mxu0 %v717
        %1405 = vmatpush.msra.mxu0 %v716
        %1406 = vmatpush.msra.mxu0 %v715
        %1407 = vmatpush.msra.mxu0 %v714
        %1408 = vmatpush.msra.mxu0 %v713
        %1409 = vmatpush.msra.mxu0 %v712
        %1410 = vmatpush.msra.mxu0 %v711
        %1411 = vmatpush.msra.mxu0 %v710
        %1412 = vmatpush.msra.mxu0 %v709
        %1413 = vmatpush.msra.mxu0 %v708
        %1414 = vmatpush.msra.mxu0 %v707
        %1415 = vmatpush.msra.mxu0 %v706
        %1416 = vmatpush.msra.mxu0 %v705
        %1417 = vmatpush.msra.mxu0 %v704
        %1418 = vmatpush.msra.mxu0 %v703
        %1419 = vmatmul.f32.gmra.mxu0 %v1327
        %v1420 = vpop.f32.mrf.mxu0
        %v1421 = vadd.f32 0.0, %v1420
        %1422 = vdwg.mxu0
        %s1423 = smul.u32 %s827, 2
        %s1424 = sadd.s32 %s1423, 3
        %s1425 = smul.u32 %s1424, 8
        %s1426 = scalar_lea.vmem [#allocation2], %s1425
        %1427 = vst [vmem:[%s1426] sm:$0xff] %v1421
      $region53: #{hyper_decoder.1} parent=47 // loop_footer
        %s812 = sadd.s32 1, %s808
      $region54: #{hyper_decoder.1} parent=47 // loop_footer_branch
        %807 = sbr.rel target = $region50
      $region55: #{hyper_decoder.1} parent=47 // loop_exit
        _
      %v1428 = vld [vmem:[%s3] sm:$0xff]
      %v1429 = vld [vmem:[%s3 + $0x8] sm:$0xff]
      %v1430 = vld [vmem:[%s3 + $0x10] sm:$0xff]
      %v1431 = vld [vmem:[%s3 + $0x18] sm:$0xff]
      %v1432 = vld [vmem:[%s4] sm:$0xff]
      %v1433 = vld [vmem:[%s4 + $0x8] sm:$0xff]
      %1435 = vset.pattern.permute.xlu0 0
      %1436 = vperm.xlu0 %1435, %v1432
      %v1437 = vpop.permute.xlu0 %1436
      %1440 = vset.pattern.permute.xlu0 0
      %1441 = vperm.xlu0 %1440, %v1433
      %v1442 = vpop.permute.xlu0 %1441
      loop: start=0, step=1, limit=18
      $region56: #{hyper_decoder.1} parent=47 // loop_pre_header
        _
      $region57: #{hyper_decoder.1} parent=47 // loop_header
        %s1445 = sphi 0, %s1449
        %p1446 = scmp.ge.s32.totalorder %s1445, 18
      $region58: #{hyper_decoder.1} parent=47 // loop_header_branch
        %1448 = sbr.rel (%p1446) target = $region62
      $region59: #{hyper_decoder.1} parent=47 // loop_body
        %s1450 = smul.u32 %s1445, 4
        %p1451 = scmp.lt.s32.totalorder %s1450, 67
        %s1452 = scalar_select %p1451, %s1450, 67
        %s1453 = smul.u32 %s1452, 8
        %s1454 = scalar_lea.vmem [#allocation2], %s1453
        %v1455 = vld [vmem:[%s1454] sm:$0xff]
        %s1456 = sadd.s32 %s1452, 1
        %s1457 = smul.u32 %s1456, 8
        %s1458 = scalar_lea.vmem [#allocation2], %s1457
        %v1459 = vld [vmem:[%s1458] sm:$0xff]
        %s1460 = sadd.s32 %s1452, 2
        %s1461 = smul.u32 %s1460, 8
        %s1462 = scalar_lea.vmem [#allocation2], %s1461
        %v1463 = vld [vmem:[%s1462] sm:$0xff]
        %s1464 = sadd.s32 %s1452, 3
        %s1465 = smul.u32 %s1464, 8
        %s1466 = scalar_lea.vmem [#allocation2], %s1465
        %v1467 = vld [vmem:[%s1466] sm:$0xff]
        %s1468 = sadd.s32 %s1452, 4
        %s1469 = smul.u32 %s1468, 8
        %s1470 = scalar_lea.vmem [#allocation2], %s1469
        %v1471 = vld [vmem:[%s1470] sm:$0xff]
        %s1472 = sadd.s32 %s1452, 5
        %s1473 = smul.u32 %s1472, 8
        %s1474 = scalar_lea.vmem [#allocation2], %s1473
        %v1475 = vld [vmem:[%s1474] sm:$0xff]
        %s1476 = sadd.s32 %s1452, 6
        %s1477 = smul.u32 %s1476, 8
        %s1478 = scalar_lea.vmem [#allocation2], %s1477
        %v1479 = vld [vmem:[%s1478] sm:$0xff]
        %s1480 = sadd.s32 %s1452, 7
        %s1481 = smul.u32 %s1480, 8
        %s1482 = scalar_lea.vmem [#allocation2], %s1481
        %v1483 = vld [vmem:[%s1482] sm:$0xff]
        %vm1484 = vcmask 580608
        %1485 = vst.msk [vmem:[#allocation4] sm:$0xff] %vm1484, %v1455
        %1487 = vrot.lane.b32.xlu0 %v1455, 127
        %v1488 = vpop.permute.xlu0 %1487
        %1490 = vst.msk [vmem:[#allocation4 + $0x20] sm:$0xff] %vm1484, %v1488
        %1491 = vrot.lane.b32.xlu0 %v1455, 126
        %v1492 = vpop.permute.xlu0 %1491
        %1494 = vst.msk [vmem:[#allocation4 + $0x40] sm:$0xff] %vm1484, %v1492
        %1495 = vrot.lane.b32.xlu0 %v1455, 125
        %v1496 = vpop.permute.xlu0 %1495
        %1498 = vst.msk [vmem:[#allocation4 + $0x60] sm:$0xff] %vm1484, %v1496
        %1499 = vrot.lane.b32.xlu0 %v1455, 124
        %v1500 = vpop.permute.xlu0 %1499
        %1502 = vst.msk [vmem:[#allocation4 + $0x80] sm:$0xff] %vm1484, %v1500
        %1503 = vst.msk [vmem:[#allocation4 + $0xa0] sm:$0xff] %vm1484, %v1459
        %1505 = vrot.lane.b32.xlu0 %v1459, 127
        %v1506 = vpop.permute.xlu0 %1505
        %1508 = vst.msk [vmem:[#allocation4 + $0xc0] sm:$0xff] %vm1484, %v1506
        %1509 = vrot.lane.b32.xlu0 %v1459, 126
        %v1510 = vpop.permute.xlu0 %1509
        %1512 = vst.msk [vmem:[#allocation4 + $0xe0] sm:$0xff] %vm1484, %v1510
        %1513 = vrot.lane.b32.xlu0 %v1459, 125
        %v1514 = vpop.permute.xlu0 %1513
        %1516 = vst.msk [vmem:[#allocation4 + $0x100] sm:$0xff] %vm1484, %v1514
        %1517 = vrot.lane.b32.xlu0 %v1459, 124
        %v1518 = vpop.permute.xlu0 %1517
        %1520 = vst.msk [vmem:[#allocation4 + $0x120] sm:$0xff] %vm1484, %v1518
        %1521 = vst.msk [vmem:[#allocation4 + $0x140] sm:$0xff] %vm1484, %v1463
        %1523 = vrot.lane.b32.xlu0 %v1463, 127
        %v1524 = vpop.permute.xlu0 %1523
        %1526 = vst.msk [vmem:[#allocation4 + $0x160] sm:$0xff] %vm1484, %v1524
        %1527 = vrot.lane.b32.xlu0 %v1463, 126
        %v1528 = vpop.permute.xlu0 %1527
        %1530 = vst.msk [vmem:[#allocation4 + $0x180] sm:$0xff] %vm1484, %v1528
        %1531 = vrot.lane.b32.xlu0 %v1463, 125
        %v1532 = vpop.permute.xlu0 %1531
        %1534 = vst.msk [vmem:[#allocation4 + $0x1a0] sm:$0xff] %vm1484, %v1532
        %1535 = vrot.lane.b32.xlu0 %v1463, 124
        %v1536 = vpop.permute.xlu0 %1535
        %1538 = vst.msk [vmem:[#allocation4 + $0x1c0] sm:$0xff] %vm1484, %v1536
        %1539 = vst.msk [vmem:[#allocation4 + $0x1e0] sm:$0xff] %vm1484, %v1467
        %1541 = vrot.lane.b32.xlu0 %v1467, 127
        %v1542 = vpop.permute.xlu0 %1541
        %1544 = vst.msk [vmem:[#allocation4 + $0x200] sm:$0xff] %vm1484, %v1542
        %1545 = vrot.lane.b32.xlu0 %v1467, 126
        %v1546 = vpop.permute.xlu0 %1545
        %1548 = vst.msk [vmem:[#allocation4 + $0x220] sm:$0xff] %vm1484, %v1546
        %1549 = vrot.lane.b32.xlu0 %v1467, 125
        %v1550 = vpop.permute.xlu0 %1549
        %1552 = vst.msk [vmem:[#allocation4 + $0x240] sm:$0xff] %vm1484, %v1550
        %1553 = vrot.lane.b32.xlu0 %v1467, 124
        %v1554 = vpop.permute.xlu0 %1553
        %1556 = vst.msk [vmem:[#allocation4 + $0x260] sm:$0xff] %vm1484, %v1554
        %1557 = vst.msk [vmem:[#allocation4 + $0x280] sm:$0xff] %vm1484, %v1471
        %1559 = vrot.lane.b32.xlu0 %v1471, 127
        %v1560 = vpop.permute.xlu0 %1559
        %1562 = vst.msk [vmem:[#allocation4 + $0x2a0] sm:$0xff] %vm1484, %v1560
        %1563 = vrot.lane.b32.xlu0 %v1471, 126
        %v1564 = vpop.permute.xlu0 %1563
        %1566 = vst.msk [vmem:[#allocation4 + $0x2c0] sm:$0xff] %vm1484, %v1564
        %1567 = vrot.lane.b32.xlu0 %v1471, 125
        %v1568 = vpop.permute.xlu0 %1567
        %1570 = vst.msk [vmem:[#allocation4 + $0x2e0] sm:$0xff] %vm1484, %v1568
        %1571 = vrot.lane.b32.xlu0 %v1471, 124
        %v1572 = vpop.permute.xlu0 %1571
        %1574 = vst.msk [vmem:[#allocation4 + $0x300] sm:$0xff] %vm1484, %v1572
        %1575 = vst.msk [vmem:[#allocation4 + $0x8] sm:$0xff] %vm1484, %v1459
        %1576 = vst.msk [vmem:[#allocation4 + $0x28] sm:$0xff] %vm1484, %v1506
        %1577 = vst.msk [vmem:[#allocation4 + $0x48] sm:$0xff] %vm1484, %v1510
        %1578 = vst.msk [vmem:[#allocation4 + $0x68] sm:$0xff] %vm1484, %v1514
        %1579 = vst.msk [vmem:[#allocation4 + $0x88] sm:$0xff] %vm1484, %v1518
        %1580 = vst.msk [vmem:[#allocation4 + $0xa8] sm:$0xff] %vm1484, %v1463
        %1581 = vst.msk [vmem:[#allocation4 + $0xc8] sm:$0xff] %vm1484, %v1524
        %1582 = vst.msk [vmem:[#allocation4 + $0xe8] sm:$0xff] %vm1484, %v1528
        %1583 = vst.msk [vmem:[#allocation4 + $0x108] sm:$0xff] %vm1484, %v1532
        %1584 = vst.msk [vmem:[#allocation4 + $0x128] sm:$0xff] %vm1484, %v1536
        %1585 = vst.msk [vmem:[#allocation4 + $0x148] sm:$0xff] %vm1484, %v1467
        %1586 = vst.msk [vmem:[#allocation4 + $0x168] sm:$0xff] %vm1484, %v1542
        %1587 = vst.msk [vmem:[#allocation4 + $0x188] sm:$0xff] %vm1484, %v1546
        %1588 = vst.msk [vmem:[#allocation4 + $0x1a8] sm:$0xff] %vm1484, %v1550
        %1589 = vst.msk [vmem:[#allocation4 + $0x1c8] sm:$0xff] %vm1484, %v1554
        %1590 = vst.msk [vmem:[#allocation4 + $0x1e8] sm:$0xff] %vm1484, %v1471
        %1591 = vst.msk [vmem:[#allocation4 + $0x208] sm:$0xff] %vm1484, %v1560
        %1592 = vst.msk [vmem:[#allocation4 + $0x228] sm:$0xff] %vm1484, %v1564
        %1593 = vst.msk [vmem:[#allocation4 + $0x248] sm:$0xff] %vm1484, %v1568
        %1594 = vst.msk [vmem:[#allocation4 + $0x268] sm:$0xff] %vm1484, %v1572
        %1595 = vst.msk [vmem:[#allocation4 + $0x288] sm:$0xff] %vm1484, %v1475
        %1597 = vrot.lane.b32.xlu0 %v1475, 127
        %v1598 = vpop.permute.xlu0 %1597
        %1600 = vst.msk [vmem:[#allocation4 + $0x2a8] sm:$0xff] %vm1484, %v1598
        %1601 = vrot.lane.b32.xlu0 %v1475, 126
        %v1602 = vpop.permute.xlu0 %1601
        %1604 = vst.msk [vmem:[#allocation4 + $0x2c8] sm:$0xff] %vm1484, %v1602
        %1605 = vrot.lane.b32.xlu0 %v1475, 125
        %v1606 = vpop.permute.xlu0 %1605
        %1608 = vst.msk [vmem:[#allocation4 + $0x2e8] sm:$0xff] %vm1484, %v1606
        %1609 = vrot.lane.b32.xlu0 %v1475, 124
        %v1610 = vpop.permute.xlu0 %1609
        %1612 = vst.msk [vmem:[#allocation4 + $0x308] sm:$0xff] %vm1484, %v1610
        %1613 = vst.msk [vmem:[#allocation4 + $0x10] sm:$0xff] %vm1484, %v1463
        %1614 = vst.msk [vmem:[#allocation4 + $0x30] sm:$0xff] %vm1484, %v1524
        %1615 = vst.msk [vmem:[#allocation4 + $0x50] sm:$0xff] %vm1484, %v1528
        %1616 = vst.msk [vmem:[#allocation4 + $0x70] sm:$0xff] %vm1484, %v1532
        %1617 = vst.msk [vmem:[#allocation4 + $0x90] sm:$0xff] %vm1484, %v1536
        %1618 = vst.msk [vmem:[#allocation4 + $0xb0] sm:$0xff] %vm1484, %v1467
        %1619 = vst.msk [vmem:[#allocation4 + $0xd0] sm:$0xff] %vm1484, %v1542
        %1620 = vst.msk [vmem:[#allocation4 + $0xf0] sm:$0xff] %vm1484, %v1546
        %1621 = vst.msk [vmem:[#allocation4 + $0x110] sm:$0xff] %vm1484, %v1550
        %1622 = vst.msk [vmem:[#allocation4 + $0x130] sm:$0xff] %vm1484, %v1554
        %1623 = vst.msk [vmem:[#allocation4 + $0x150] sm:$0xff] %vm1484, %v1471
        %1624 = vst.msk [vmem:[#allocation4 + $0x170] sm:$0xff] %vm1484, %v1560
        %1625 = vst.msk [vmem:[#allocation4 + $0x190] sm:$0xff] %vm1484, %v1564
        %1626 = vst.msk [vmem:[#allocation4 + $0x1b0] sm:$0xff] %vm1484, %v1568
        %1627 = vst.msk [vmem:[#allocation4 + $0x1d0] sm:$0xff] %vm1484, %v1572
        %1628 = vst.msk [vmem:[#allocation4 + $0x1f0] sm:$0xff] %vm1484, %v1475
        %1629 = vst.msk [vmem:[#allocation4 + $0x210] sm:$0xff] %vm1484, %v1598
        %1630 = vst.msk [vmem:[#allocation4 + $0x230] sm:$0xff] %vm1484, %v1602
        %1631 = vst.msk [vmem:[#allocation4 + $0x250] sm:$0xff] %vm1484, %v1606
        %1632 = vst.msk [vmem:[#allocation4 + $0x270] sm:$0xff] %vm1484, %v1610
        %1633 = vst.msk [vmem:[#allocation4 + $0x290] sm:$0xff] %vm1484, %v1479
        %1635 = vrot.lane.b32.xlu0 %v1479, 127
        %v1636 = vpop.permute.xlu0 %1635
        %1638 = vst.msk [vmem:[#allocation4 + $0x2b0] sm:$0xff] %vm1484, %v1636
        %1639 = vrot.lane.b32.xlu0 %v1479, 126
        %v1640 = vpop.permute.xlu0 %1639
        %1642 = vst.msk [vmem:[#allocation4 + $0x2d0] sm:$0xff] %vm1484, %v1640
        %1643 = vrot.lane.b32.xlu0 %v1479, 125
        %v1644 = vpop.permute.xlu0 %1643
        %1646 = vst.msk [vmem:[#allocation4 + $0x2f0] sm:$0xff] %vm1484, %v1644
        %1647 = vrot.lane.b32.xlu0 %v1479, 124
        %v1648 = vpop.permute.xlu0 %1647
        %1650 = vst.msk [vmem:[#allocation4 + $0x310] sm:$0xff] %vm1484, %v1648
        %1651 = vst.msk [vmem:[#allocation4 + $0x18] sm:$0xff] %vm1484, %v1467
        %1652 = vst.msk [vmem:[#allocation4 + $0x38] sm:$0xff] %vm1484, %v1542
        %1653 = vst.msk [vmem:[#allocation4 + $0x58] sm:$0xff] %vm1484, %v1546
        %1654 = vst.msk [vmem:[#allocation4 + $0x78] sm:$0xff] %vm1484, %v1550
        %1655 = vst.msk [vmem:[#allocation4 + $0x98] sm:$0xff] %vm1484, %v1554
        %1656 = vst.msk [vmem:[#allocation4 + $0xb8] sm:$0xff] %vm1484, %v1471
        %1657 = vst.msk [vmem:[#allocation4 + $0xd8] sm:$0xff] %vm1484, %v1560
        %1658 = vst.msk [vmem:[#allocation4 + $0xf8] sm:$0xff] %vm1484, %v1564
        %1659 = vst.msk [vmem:[#allocation4 + $0x118] sm:$0xff] %vm1484, %v1568
        %1660 = vst.msk [vmem:[#allocation4 + $0x138] sm:$0xff] %vm1484, %v1572
        %1661 = vst.msk [vmem:[#allocation4 + $0x158] sm:$0xff] %vm1484, %v1475
        %1662 = vst.msk [vmem:[#allocation4 + $0x178] sm:$0xff] %vm1484, %v1598
        %1663 = vst.msk [vmem:[#allocation4 + $0x198] sm:$0xff] %vm1484, %v1602
        %1664 = vst.msk [vmem:[#allocation4 + $0x1b8] sm:$0xff] %vm1484, %v1606
        %1665 = vst.msk [vmem:[#allocation4 + $0x1d8] sm:$0xff] %vm1484, %v1610
        %1666 = vst.msk [vmem:[#allocation4 + $0x1f8] sm:$0xff] %vm1484, %v1479
        %1667 = vst.msk [vmem:[#allocation4 + $0x218] sm:$0xff] %vm1484, %v1636
        %1668 = vst.msk [vmem:[#allocation4 + $0x238] sm:$0xff] %vm1484, %v1640
        %1669 = vst.msk [vmem:[#allocation4 + $0x258] sm:$0xff] %vm1484, %v1644
        %1670 = vst.msk [vmem:[#allocation4 + $0x278] sm:$0xff] %vm1484, %v1648
        %1671 = vst.msk [vmem:[#allocation4 + $0x298] sm:$0xff] %vm1484, %v1483
        %1673 = vrot.lane.b32.xlu0 %v1483, 127
        %v1674 = vpop.permute.xlu0 %1673
        %1676 = vst.msk [vmem:[#allocation4 + $0x2b8] sm:$0xff] %vm1484, %v1674
        %1677 = vrot.lane.b32.xlu0 %v1483, 126
        %v1678 = vpop.permute.xlu0 %1677
        %1680 = vst.msk [vmem:[#allocation4 + $0x2d8] sm:$0xff] %vm1484, %v1678
        %1681 = vrot.lane.b32.xlu0 %v1483, 125
        %v1682 = vpop.permute.xlu0 %1681
        %1684 = vst.msk [vmem:[#allocation4 + $0x2f8] sm:$0xff] %vm1484, %v1682
        %1685 = vrot.lane.b32.xlu0 %v1483, 124
        %v1686 = vpop.permute.xlu0 %1685
        %1688 = vst.msk [vmem:[#allocation4 + $0x318] sm:$0xff] %vm1484, %v1686
        %v1689 = vld [vmem:[#allocation4] sm:$0xff]
        %v1690 = vld [vmem:[#allocation4 + $0x8] sm:$0xff]
        %v1691 = vld [vmem:[#allocation4 + $0x10] sm:$0xff]
        %v1692 = vld [vmem:[#allocation4 + $0x18] sm:$0xff]
        %v1693 = vld [vmem:[#allocation4 + $0x20] sm:$0xff]
        %v1694 = vld [vmem:[#allocation4 + $0x28] sm:$0xff]
        %v1695 = vld [vmem:[#allocation4 + $0x30] sm:$0xff]
        %v1696 = vld [vmem:[#allocation4 + $0x38] sm:$0xff]
        %v1697 = vld [vmem:[#allocation4 + $0x40] sm:$0xff]
        %v1698 = vld [vmem:[#allocation4 + $0x48] sm:$0xff]
        %v1699 = vld [vmem:[#allocation4 + $0x50] sm:$0xff]
        %v1700 = vld [vmem:[#allocation4 + $0x58] sm:$0xff]
        %v1701 = vld [vmem:[#allocation4 + $0x60] sm:$0xff]
        %v1702 = vld [vmem:[#allocation4 + $0x68] sm:$0xff]
        %v1703 = vld [vmem:[#allocation4 + $0x70] sm:$0xff]
        %v1704 = vld [vmem:[#allocation4 + $0x78] sm:$0xff]
        %v1705 = vld [vmem:[#allocation4 + $0x80] sm:$0xff]
        %v1706 = vld [vmem:[#allocation4 + $0x88] sm:$0xff]
        %v1707 = vld [vmem:[#allocation4 + $0x90] sm:$0xff]
        %v1708 = vld [vmem:[#allocation4 + $0x98] sm:$0xff]
        %v1709 = vld [vmem:[#allocation4 + $0xa0] sm:$0xff]
        %v1710 = vld [vmem:[#allocation4 + $0xa8] sm:$0xff]
        %v1711 = vld [vmem:[#allocation4 + $0xb0] sm:$0xff]
        %v1712 = vld [vmem:[#allocation4 + $0xb8] sm:$0xff]
        %v1713 = vld [vmem:[#allocation4 + $0xc0] sm:$0xff]
        %v1714 = vld [vmem:[#allocation4 + $0xc8] sm:$0xff]
        %v1715 = vld [vmem:[#allocation4 + $0xd0] sm:$0xff]
        %v1716 = vld [vmem:[#allocation4 + $0xd8] sm:$0xff]
        %v1717 = vld [vmem:[#allocation4 + $0xe0] sm:$0xff]
        %v1718 = vld [vmem:[#allocation4 + $0xe8] sm:$0xff]
        %v1719 = vld [vmem:[#allocation4 + $0xf0] sm:$0xff]
        %v1720 = vld [vmem:[#allocation4 + $0xf8] sm:$0xff]
        %v1721 = vld [vmem:[#allocation4 + $0x100] sm:$0xff]
        %v1722 = vld [vmem:[#allocation4 + $0x108] sm:$0xff]
        %v1723 = vld [vmem:[#allocation4 + $0x110] sm:$0xff]
        %v1724 = vld [vmem:[#allocation4 + $0x118] sm:$0xff]
        %v1725 = vld [vmem:[#allocation4 + $0x120] sm:$0xff]
        %v1726 = vld [vmem:[#allocation4 + $0x128] sm:$0xff]
        %v1727 = vld [vmem:[#allocation4 + $0x130] sm:$0xff]
        %v1728 = vld [vmem:[#allocation4 + $0x138] sm:$0xff]
        %v1729 = vld [vmem:[#allocation4 + $0x140] sm:$0xff]
        %v1730 = vld [vmem:[#allocation4 + $0x148] sm:$0xff]
        %v1731 = vld [vmem:[#allocation4 + $0x150] sm:$0xff]
        %v1732 = vld [vmem:[#allocation4 + $0x158] sm:$0xff]
        %v1733 = vld [vmem:[#allocation4 + $0x160] sm:$0xff]
        %v1734 = vld [vmem:[#allocation4 + $0x168] sm:$0xff]
        %v1735 = vld [vmem:[#allocation4 + $0x170] sm:$0xff]
        %v1736 = vld [vmem:[#allocation4 + $0x178] sm:$0xff]
        %v1737 = vld [vmem:[#allocation4 + $0x180] sm:$0xff]
        %v1738 = vld [vmem:[#allocation4 + $0x188] sm:$0xff]
        %v1739 = vld [vmem:[#allocation4 + $0x190] sm:$0xff]
        %v1740 = vld [vmem:[#allocation4 + $0x198] sm:$0xff]
        %v1741 = vld [vmem:[#allocation4 + $0x1a0] sm:$0xff]
        %v1742 = vld [vmem:[#allocation4 + $0x1a8] sm:$0xff]
        %v1743 = vld [vmem:[#allocation4 + $0x1b0] sm:$0xff]
        %v1744 = vld [vmem:[#allocation4 + $0x1b8] sm:$0xff]
        %v1745 = vld [vmem:[#allocation4 + $0x1c0] sm:$0xff]
        %v1746 = vld [vmem:[#allocation4 + $0x1c8] sm:$0xff]
        %v1747 = vld [vmem:[#allocation4 + $0x1d0] sm:$0xff]
        %v1748 = vld [vmem:[#allocation4 + $0x1d8] sm:$0xff]
        %v1749 = vld [vmem:[#allocation4 + $0x1e0] sm:$0xff]
        %v1750 = vld [vmem:[#allocation4 + $0x1e8] sm:$0xff]
        %v1751 = vld [vmem:[#allocation4 + $0x1f0] sm:$0xff]
        %v1752 = vld [vmem:[#allocation4 + $0x1f8] sm:$0xff]
        %v1753 = vld [vmem:[#allocation4 + $0x200] sm:$0xff]
        %v1754 = vld [vmem:[#allocation4 + $0x208] sm:$0xff]
        %v1755 = vld [vmem:[#allocation4 + $0x210] sm:$0xff]
        %v1756 = vld [vmem:[#allocation4 + $0x218] sm:$0xff]
        %v1757 = vld [vmem:[#allocation4 + $0x220] sm:$0xff]
        %v1758 = vld [vmem:[#allocation4 + $0x228] sm:$0xff]
        %v1759 = vld [vmem:[#allocation4 + $0x230] sm:$0xff]
        %v1760 = vld [vmem:[#allocation4 + $0x238] sm:$0xff]
        %v1761 = vld [vmem:[#allocation4 + $0x240] sm:$0xff]
        %v1762 = vld [vmem:[#allocation4 + $0x248] sm:$0xff]
        %v1763 = vld [vmem:[#allocation4 + $0x250] sm:$0xff]
        %v1764 = vld [vmem:[#allocation4 + $0x258] sm:$0xff]
        %v1765 = vld [vmem:[#allocation4 + $0x260] sm:$0xff]
        %v1766 = vld [vmem:[#allocation4 + $0x268] sm:$0xff]
        %v1767 = vld [vmem:[#allocation4 + $0x270] sm:$0xff]
        %v1768 = vld [vmem:[#allocation4 + $0x278] sm:$0xff]
        %v1769 = vld [vmem:[#allocation4 + $0x280] sm:$0xff]
        %v1770 = vld [vmem:[#allocation4 + $0x288] sm:$0xff]
        %v1771 = vld [vmem:[#allocation4 + $0x290] sm:$0xff]
        %v1772 = vld [vmem:[#allocation4 + $0x298] sm:$0xff]
        %v1773 = vld [vmem:[#allocation4 + $0x2a0] sm:$0xff]
        %v1774 = vld [vmem:[#allocation4 + $0x2a8] sm:$0xff]
        %v1775 = vld [vmem:[#allocation4 + $0x2b0] sm:$0xff]
        %v1776 = vld [vmem:[#allocation4 + $0x2b8] sm:$0xff]
        %v1777 = vld [vmem:[#allocation4 + $0x2c0] sm:$0xff]
        %v1778 = vld [vmem:[#allocation4 + $0x2c8] sm:$0xff]
        %v1779 = vld [vmem:[#allocation4 + $0x2d0] sm:$0xff]
        %v1780 = vld [vmem:[#allocation4 + $0x2d8] sm:$0xff]
        %v1781 = vld [vmem:[#allocation4 + $0x2e0] sm:$0xff]
        %v1782 = vld [vmem:[#allocation4 + $0x2e8] sm:$0xff]
        %v1783 = vld [vmem:[#allocation4 + $0x2f0] sm:$0xff]
        %v1784 = vld [vmem:[#allocation4 + $0x2f8] sm:$0xff]
        %v1785 = vld [vmem:[#allocation4 + $0x300] sm:$0xff]
        %v1786 = vld [vmem:[#allocation4 + $0x308] sm:$0xff]
        %v1787 = vld [vmem:[#allocation4 + $0x310] sm:$0xff]
        %v1788 = vld [vmem:[#allocation4 + $0x318] sm:$0xff]
        %vm1789 = vcmask 588800
        %v1791 = vsel %vm1789, %v1429, 0
        %v1794 = vsel %vm1789, %v1431, 0
        %1796 = vmatpush.msra.mxu0 %v1749
        %1797 = vmatpush.msra.mxu0 %v1745
        %1798 = vmatpush.msra.mxu0 %v1741
        %1799 = vmatpush.msra.mxu0 %v1737
        %1800 = vmatpush.msra.mxu0 %v1733
        %1801 = vmatpush.msra.mxu0 %v1729
        %1802 = vmatpush.msra.mxu0 %v1725
        %1803 = vmatpush.msra.mxu0 %v1721
        %1804 = vmatpush.msra.mxu0 %v1717
        %1805 = vmatpush.msra.mxu0 %v1713
        %1806 = vmatpush.msra.mxu0 %v1709
        %1807 = vmatpush.msra.mxu0 %v1705
        %1808 = vmatpush.msra.mxu0 %v1701
        %1809 = vmatpush.msra.mxu0 %v1697
        %1810 = vmatpush.msra.mxu0 %v1693
        %1811 = vmatpush.msra.mxu0 %v1689
        %1812 = vmatmul.f32.gmra.mxu0 %v1428
        %v1813 = vpop.f32.mrf.mxu0
        %v1814 = vadd.f32 %v1437, %v1813
        %1815 = vmatmul.f32.gmra.mxu0 %v1430
        %v1816 = vpop.f32.mrf.mxu0
        %v1817 = vadd.f32 %v1442, %v1816
        %1818 = vdwg.mxu0
        %1819 = vmatpush.msra.mxu0 0.0
        %1820 = vmatpush.msra.mxu0 0.0
        %1821 = vmatpush.msra.mxu0 0.0
        %1822 = vmatpush.msra.mxu0 0.0
        %1823 = vmatpush.msra.mxu0 0.0
        %1824 = vmatpush.msra.mxu0 0.0
        %1825 = vmatpush.msra.mxu0 0.0
        %1826 = vmatpush.msra.mxu0 %v1785
        %1827 = vmatpush.msra.mxu0 %v1781
        %1828 = vmatpush.msra.mxu0 %v1777
        %1829 = vmatpush.msra.mxu0 %v1773
        %1830 = vmatpush.msra.mxu0 %v1769
        %1831 = vmatpush.msra.mxu0 %v1765
        %1832 = vmatpush.msra.mxu0 %v1761
        %1833 = vmatpush.msra.mxu0 %v1757
        %1834 = vmatpush.msra.mxu0 %v1753
        %1835 = vmatmul.f32.gmra.mxu0 %v1791
        %v1836 = vpop.f32.mrf.mxu0
        %v1837 = vadd.f32 %v1814, %v1836
        %1838 = vmatmul.f32.gmra.mxu0 %v1794
        %v1839 = vpop.f32.mrf.mxu0
        %v1840 = vadd.f32 %v1817, %v1839
        %1841 = vdwg.mxu0
        %1842 = vmatpush.msra.mxu0 %v1750
        %1843 = vmatpush.msra.mxu0 %v1746
        %1844 = vmatpush.msra.mxu0 %v1742
        %1845 = vmatpush.msra.mxu0 %v1738
        %1846 = vmatpush.msra.mxu0 %v1734
        %1847 = vmatpush.msra.mxu0 %v1730
        %1848 = vmatpush.msra.mxu0 %v1726
        %1849 = vmatpush.msra.mxu0 %v1722
        %1850 = vmatpush.msra.mxu0 %v1718
        %1851 = vmatpush.msra.mxu0 %v1714
        %1852 = vmatpush.msra.mxu0 %v1710
        %1853 = vmatpush.msra.mxu0 %v1706
        %1854 = vmatpush.msra.mxu0 %v1702
        %1855 = vmatpush.msra.mxu0 %v1698
        %1856 = vmatpush.msra.mxu0 %v1694
        %1857 = vmatpush.msra.mxu0 %v1690
        %1858 = vmatmul.f32.gmra.mxu0 %v1428
        %v1859 = vpop.f32.mrf.mxu0
        %v1860 = vadd.f32 %v1437, %v1859
        %1861 = vmatmul.f32.gmra.mxu0 %v1430
        %v1862 = vpop.f32.mrf.mxu0
        %v1863 = vadd.f32 %v1442, %v1862
        %1864 = vdwg.mxu0
        %1865 = vmatpush.msra.mxu0 0.0
        %1866 = vmatpush.msra.mxu0 0.0
        %1867 = vmatpush.msra.mxu0 0.0
        %1868 = vmatpush.msra.mxu0 0.0
        %1869 = vmatpush.msra.mxu0 0.0
        %1870 = vmatpush.msra.mxu0 0.0
        %1871 = vmatpush.msra.mxu0 0.0
        %1872 = vmatpush.msra.mxu0 %v1786
        %1873 = vmatpush.msra.mxu0 %v1782
        %1874 = vmatpush.msra.mxu0 %v1778
        %1875 = vmatpush.msra.mxu0 %v1774
        %1876 = vmatpush.msra.mxu0 %v1770
        %1877 = vmatpush.msra.mxu0 %v1766
        %1878 = vmatpush.msra.mxu0 %v1762
        %1879 = vmatpush.msra.mxu0 %v1758
        %1880 = vmatpush.msra.mxu0 %v1754
        %1881 = vmatmul.f32.gmra.mxu0 %v1791
        %v1882 = vpop.f32.mrf.mxu0
        %v1883 = vadd.f32 %v1860, %v1882
        %1884 = vmatmul.f32.gmra.mxu0 %v1794
        %v1885 = vpop.f32.mrf.mxu0
        %v1886 = vadd.f32 %v1863, %v1885
        %1887 = vdwg.mxu0
        %1888 = vmatpush.msra.mxu0 %v1751
        %1889 = vmatpush.msra.mxu0 %v1747
        %1890 = vmatpush.msra.mxu0 %v1743
        %1891 = vmatpush.msra.mxu0 %v1739
        %1892 = vmatpush.msra.mxu0 %v1735
        %1893 = vmatpush.msra.mxu0 %v1731
        %1894 = vmatpush.msra.mxu0 %v1727
        %1895 = vmatpush.msra.mxu0 %v1723
        %1896 = vmatpush.msra.mxu0 %v1719
        %1897 = vmatpush.msra.mxu0 %v1715
        %1898 = vmatpush.msra.mxu0 %v1711
        %1899 = vmatpush.msra.mxu0 %v1707
        %1900 = vmatpush.msra.mxu0 %v1703
        %1901 = vmatpush.msra.mxu0 %v1699
        %1902 = vmatpush.msra.mxu0 %v1695
        %1903 = vmatpush.msra.mxu0 %v1691
        %1904 = vmatmul.f32.gmra.mxu0 %v1428
        %v1905 = vpop.f32.mrf.mxu0
        %v1906 = vadd.f32 %v1437, %v1905
        %1907 = vmatmul.f32.gmra.mxu0 %v1430
        %v1908 = vpop.f32.mrf.mxu0
        %v1909 = vadd.f32 %v1442, %v1908
        %1910 = vdwg.mxu0
        %1911 = vmatpush.msra.mxu0 0.0
        %1912 = vmatpush.msra.mxu0 0.0
        %1913 = vmatpush.msra.mxu0 0.0
        %1914 = vmatpush.msra.mxu0 0.0
        %1915 = vmatpush.msra.mxu0 0.0
        %1916 = vmatpush.msra.mxu0 0.0
        %1917 = vmatpush.msra.mxu0 0.0
        %1918 = vmatpush.msra.mxu0 %v1787
        %1919 = vmatpush.msra.mxu0 %v1783
        %1920 = vmatpush.msra.mxu0 %v1779
        %1921 = vmatpush.msra.mxu0 %v1775
        %1922 = vmatpush.msra.mxu0 %v1771
        %1923 = vmatpush.msra.mxu0 %v1767
        %1924 = vmatpush.msra.mxu0 %v1763
        %1925 = vmatpush.msra.mxu0 %v1759
        %1926 = vmatpush.msra.mxu0 %v1755
        %1927 = vmatmul.f32.gmra.mxu0 %v1791
        %v1928 = vpop.f32.mrf.mxu0
        %v1929 = vadd.f32 %v1906, %v1928
        %1930 = vmatmul.f32.gmra.mxu0 %v1794
        %v1931 = vpop.f32.mrf.mxu0
        %v1932 = vadd.f32 %v1909, %v1931
        %1933 = vdwg.mxu0
        %1934 = vmatpush.msra.mxu0 %v1752
        %1935 = vmatpush.msra.mxu0 %v1748
        %1936 = vmatpush.msra.mxu0 %v1744
        %1937 = vmatpush.msra.mxu0 %v1740
        %1938 = vmatpush.msra.mxu0 %v1736
        %1939 = vmatpush.msra.mxu0 %v1732
        %1940 = vmatpush.msra.mxu0 %v1728
        %1941 = vmatpush.msra.mxu0 %v1724
        %1942 = vmatpush.msra.mxu0 %v1720
        %1943 = vmatpush.msra.mxu0 %v1716
        %1944 = vmatpush.msra.mxu0 %v1712
        %1945 = vmatpush.msra.mxu0 %v1708
        %1946 = vmatpush.msra.mxu0 %v1704
        %1947 = vmatpush.msra.mxu0 %v1700
        %1948 = vmatpush.msra.mxu0 %v1696
        %1949 = vmatpush.msra.mxu0 %v1692
        %1950 = vmatmul.f32.gmra.mxu0 %v1428
        %v1951 = vpop.f32.mrf.mxu0
        %v1952 = vadd.f32 %v1437, %v1951
        %1953 = vmatmul.f32.gmra.mxu0 %v1430
        %v1954 = vpop.f32.mrf.mxu0
        %v1955 = vadd.f32 %v1442, %v1954
        %1956 = vdwg.mxu0
        %1957 = vmatpush.msra.mxu0 0.0
        %1958 = vmatpush.msra.mxu0 0.0
        %1959 = vmatpush.msra.mxu0 0.0
        %1960 = vmatpush.msra.mxu0 0.0
        %1961 = vmatpush.msra.mxu0 0.0
        %1962 = vmatpush.msra.mxu0 0.0
        %1963 = vmatpush.msra.mxu0 0.0
        %1964 = vmatpush.msra.mxu0 %v1788
        %1965 = vmatpush.msra.mxu0 %v1784
        %1966 = vmatpush.msra.mxu0 %v1780
        %1967 = vmatpush.msra.mxu0 %v1776
        %1968 = vmatpush.msra.mxu0 %v1772
        %1969 = vmatpush.msra.mxu0 %v1768
        %1970 = vmatpush.msra.mxu0 %v1764
        %1971 = vmatpush.msra.mxu0 %v1760
        %1972 = vmatpush.msra.mxu0 %v1756
        %1973 = vmatmul.f32.gmra.mxu0 %v1791
        %v1974 = vpop.f32.mrf.mxu0
        %v1975 = vadd.f32 %v1952, %v1974
        %1976 = vmatmul.f32.gmra.mxu0 %v1794
        %v1977 = vpop.f32.mrf.mxu0
        %v1978 = vadd.f32 %v1955, %v1977
        %1979 = vdwg.mxu0
        %vm1980 = vcmp.ge.f32.partialorder %v1837, 0.0
        %vm1981 = vcmp.ge.f32.partialorder %v1883, 0.0
        %vm1982 = vcmp.ge.f32.partialorder %v1929, 0.0
        %vm1983 = vcmp.ge.f32.partialorder %v1975, 0.0
        %vm1984 = vcmp.ge.f32.partialorder %v1840, 0.0
        %vm1985 = vcmp.ge.f32.partialorder %v1886, 0.0
        %vm1986 = vcmp.ge.f32.partialorder %v1932, 0.0
        %vm1987 = vcmp.ge.f32.partialorder %v1978, 0.0
        %v1988 = vmul.f32 %v1837, 0.01
        %v1989 = vmul.f32 %v1883, 0.01
        %v1990 = vmul.f32 %v1929, 0.01
        %v1991 = vmul.f32 %v1975, 0.01
        %v1992 = vmul.f32 %v1840, 0.01
        %v1993 = vmul.f32 %v1886, 0.01
        %v1994 = vmul.f32 %v1932, 0.01
        %v1995 = vmul.f32 %v1978, 0.01
        %v1996 = vsel %vm1980, %v1837, %v1988
        %v1997 = vsel %vm1981, %v1883, %v1989
        %v1998 = vsel %vm1982, %v1929, %v1990
        %v1999 = vsel %vm1983, %v1975, %v1991
        %v2000 = vsel %vm1984, %v1840, %v1992
        %v2001 = vsel %vm1985, %v1886, %v1993
        %v2002 = vsel %vm1986, %v1932, %v1994
        %v2003 = vsel %vm1987, %v1978, %v1995
        %2004 = vmatpush.msra.mxu0 %v798
        %2005 = vmatpush.msra.mxu0 %v797
        %2006 = vmatpush.msra.mxu0 %v796
        %2007 = vmatpush.msra.mxu0 %v795
        %2008 = vmatpush.msra.mxu0 %v794
        %2009 = vmatpush.msra.mxu0 %v793
        %2010 = vmatpush.msra.mxu0 %v792
        %2011 = vmatpush.msra.mxu0 %v791
        %2012 = vmatpush.msra.mxu0 %v790
        %2013 = vmatpush.msra.mxu0 %v789
        %2014 = vmatpush.msra.mxu0 %v788
        %2015 = vmatpush.msra.mxu0 %v787
        %2016 = vmatpush.msra.mxu0 %v786
        %2017 = vmatpush.msra.mxu0 %v785
        %2018 = vmatpush.msra.mxu0 %v784
        %2019 = vmatpush.msra.mxu0 %v783
        %2020 = vmatmul.f32.gmra.mxu0 %v1996
        %v2021 = vpop.f32.mrf.mxu0
        %v2022 = vadd.f32 0.0, %v2021
        %2023 = vmatmul.f32.gmra.mxu0 %v2000
        %v2024 = vpop.f32.mrf.mxu0
        %v2025 = vadd.f32 0.0, %v2024
        %2026 = vdwg.mxu0
        %s2027 = smul.u32 %s1460, 16
        %s2028 = scalar_lea.vmem [#allocation3], %s2027
        %2029 = vst [vmem:[%s2028] sm:$0xff] %v2022
        %2030 = vst [vmem:[%s2028 + $0x8] sm:$0xff] %v2025
        %2031 = vmatpush.msra.mxu0 %v798
        %2032 = vmatpush.msra.mxu0 %v797
        %2033 = vmatpush.msra.mxu0 %v796
        %2034 = vmatpush.msra.mxu0 %v795
        %2035 = vmatpush.msra.mxu0 %v794
        %2036 = vmatpush.msra.mxu0 %v793
        %2037 = vmatpush.msra.mxu0 %v792
        %2038 = vmatpush.msra.mxu0 %v791
        %2039 = vmatpush.msra.mxu0 %v790
        %2040 = vmatpush.msra.mxu0 %v789
        %2041 = vmatpush.msra.mxu0 %v788
        %2042 = vmatpush.msra.mxu0 %v787
        %2043 = vmatpush.msra.mxu0 %v786
        %2044 = vmatpush.msra.mxu0 %v785
        %2045 = vmatpush.msra.mxu0 %v784
        %2046 = vmatpush.msra.mxu0 %v783
        %2047 = vmatmul.f32.gmra.mxu0 %v1997
        %v2048 = vpop.f32.mrf.mxu0
        %v2049 = vadd.f32 0.0, %v2048
        %2050 = vmatmul.f32.gmra.mxu0 %v2001
        %v2051 = vpop.f32.mrf.mxu0
        %v2052 = vadd.f32 0.0, %v2051
        %2053 = vdwg.mxu0
        %s2054 = smul.u32 %s1464, 16
        %s2055 = scalar_lea.vmem [#allocation3], %s2054
        %2056 = vst [vmem:[%s2055] sm:$0xff] %v2049
        %2057 = vst [vmem:[%s2055 + $0x8] sm:$0xff] %v2052
        %2058 = vmatpush.msra.mxu0 %v798
        %2059 = vmatpush.msra.mxu0 %v797
        %2060 = vmatpush.msra.mxu0 %v796
        %2061 = vmatpush.msra.mxu0 %v795
        %2062 = vmatpush.msra.mxu0 %v794
        %2063 = vmatpush.msra.mxu0 %v793
        %2064 = vmatpush.msra.mxu0 %v792
        %2065 = vmatpush.msra.mxu0 %v791
        %2066 = vmatpush.msra.mxu0 %v790
        %2067 = vmatpush.msra.mxu0 %v789
        %2068 = vmatpush.msra.mxu0 %v788
        %2069 = vmatpush.msra.mxu0 %v787
        %2070 = vmatpush.msra.mxu0 %v786
        %2071 = vmatpush.msra.mxu0 %v785
        %2072 = vmatpush.msra.mxu0 %v784
        %2073 = vmatpush.msra.mxu0 %v783
        %2074 = vmatmul.f32.gmra.mxu0 %v1998
        %v2075 = vpop.f32.mrf.mxu0
        %v2076 = vadd.f32 0.0, %v2075
        %2077 = vmatmul.f32.gmra.mxu0 %v2002
        %v2078 = vpop.f32.mrf.mxu0
        %v2079 = vadd.f32 0.0, %v2078
        %2080 = vdwg.mxu0
        %s2081 = smul.u32 %s1468, 16
        %s2082 = scalar_lea.vmem [#allocation3], %s2081
        %2083 = vst [vmem:[%s2082] sm:$0xff] %v2076
        %2084 = vst [vmem:[%s2082 + $0x8] sm:$0xff] %v2079
        %2085 = vmatpush.msra.mxu0 %v798
        %2086 = vmatpush.msra.mxu0 %v797
        %2087 = vmatpush.msra.mxu0 %v796
        %2088 = vmatpush.msra.mxu0 %v795
        %2089 = vmatpush.msra.mxu0 %v794
        %2090 = vmatpush.msra.mxu0 %v793
        %2091 = vmatpush.msra.mxu0 %v792
        %2092 = vmatpush.msra.mxu0 %v791
        %2093 = vmatpush.msra.mxu0 %v790
        %2094 = vmatpush.msra.mxu0 %v789
        %2095 = vmatpush.msra.mxu0 %v788
        %2096 = vmatpush.msra.mxu0 %v787
        %2097 = vmatpush.msra.mxu0 %v786
        %2098 = vmatpush.msra.mxu0 %v785
        %2099 = vmatpush.msra.mxu0 %v784
        %2100 = vmatpush.msra.mxu0 %v783
        %2101 = vmatmul.f32.gmra.mxu0 %v1999
        %v2102 = vpop.f32.mrf.mxu0
        %v2103 = vadd.f32 0.0, %v2102
        %2104 = vmatmul.f32.gmra.mxu0 %v2003
        %v2105 = vpop.f32.mrf.mxu0
        %v2106 = vadd.f32 0.0, %v2105
        %2107 = vdwg.mxu0
        %s2108 = smul.u32 %s1472, 16
        %s2109 = scalar_lea.vmem [#allocation3], %s2108
        %2110 = vst [vmem:[%s2109] sm:$0xff] %v2103
        %2111 = vst [vmem:[%s2109 + $0x8] sm:$0xff] %v2106
      $region60: #{hyper_decoder.1} parent=47 // loop_footer
        %s1449 = sadd.s32 1, %s1445
      $region61: #{hyper_decoder.1} parent=47 // loop_footer_branch
        %1444 = sbr.rel target = $region57
      $region62: #{hyper_decoder.1} parent=47 // loop_exit
        _
      %v2112 = vld [vmem:[%s5] sm:$0xff]
      %v2113 = vld [vmem:[%s5 + $0x8] sm:$0xff]
      %v2114 = vld [vmem:[%s5 + $0x10] sm:$0xff]
      %v2115 = vld [vmem:[%s5 + $0x18] sm:$0xff]
      %v2116 = vld [vmem:[%s6] sm:$0xff]
      %v2117 = vld [vmem:[%s6 + $0x8] sm:$0xff]
      %2119 = vset.pattern.permute.xlu0 0
      %2120 = vperm.xlu0 %2119, %v2116
      %v2121 = vpop.permute.xlu0 %2120
      %2124 = vset.pattern.permute.xlu0 0
      %2125 = vperm.xlu0 %2124, %v2117
      %v2126 = vpop.permute.xlu0 %2125
      loop: start=0, step=1, limit=19
      $region63: #{hyper_decoder.1} parent=47 // loop_pre_header
        _
      $region64: #{hyper_decoder.1} parent=47 // loop_header
        %s2129 = sphi 0, %s2133
        %p2130 = scmp.ge.s32.totalorder %s2129, 19
      $region65: #{hyper_decoder.1} parent=47 // loop_header_branch
        %2132 = sbr.rel (%p2130) target = $region69
      $region66: #{hyper_decoder.1} parent=47 // loop_body
        %s2134 = smul.u32 %s2129, 4
        %p2135 = scmp.lt.s32.totalorder %s2134, 69
        %s2136 = scalar_select %p2135, %s2134, 69
        %s2137 = smul.u32 %s2136, 16
        %s2138 = scalar_lea.vmem [#allocation3], %s2137
        %v2139 = vld [vmem:[%s2138] sm:$0xff]
        %v2140 = vld [vmem:[%s2138 + $0x8] sm:$0xff]
        %s2141 = sadd.s32 %s2136, 1
        %s2142 = smul.u32 %s2141, 16
        %s2143 = scalar_lea.vmem [#allocation3], %s2142
        %v2144 = vld [vmem:[%s2143] sm:$0xff]
        %v2145 = vld [vmem:[%s2143 + $0x8] sm:$0xff]
        %s2146 = sadd.s32 %s2136, 2
        %s2147 = smul.u32 %s2146, 16
        %s2148 = scalar_lea.vmem [#allocation3], %s2147
        %v2149 = vld [vmem:[%s2148] sm:$0xff]
        %v2150 = vld [vmem:[%s2148 + $0x8] sm:$0xff]
        %s2151 = sadd.s32 %s2136, 3
        %s2152 = smul.u32 %s2151, 16
        %s2153 = scalar_lea.vmem [#allocation3], %s2152
        %v2154 = vld [vmem:[%s2153] sm:$0xff]
        %v2155 = vld [vmem:[%s2153 + $0x8] sm:$0xff]
        %s2156 = sadd.s32 %s2136, 4
        %s2157 = smul.u32 %s2156, 16
        %s2158 = scalar_lea.vmem [#allocation3], %s2157
        %v2159 = vld [vmem:[%s2158] sm:$0xff]
        %v2160 = vld [vmem:[%s2158 + $0x8] sm:$0xff]
        %s2161 = sadd.s32 %s2136, 5
        %s2162 = smul.u32 %s2161, 16
        %s2163 = scalar_lea.vmem [#allocation3], %s2162
        %v2164 = vld [vmem:[%s2163] sm:$0xff]
        %v2165 = vld [vmem:[%s2163 + $0x8] sm:$0xff]
        %vm2166 = vcmask 596992
        %2167 = vst.msk [vmem:[#allocation4] sm:$0xff] %vm2166, %v2139
        %2168 = vst.msk [vmem:[#allocation4 + $0x20] sm:$0xff] %vm2166, %v2140
        %2171 = vrot.lane.b32.xlu0 %v2139, 127
        %v2172 = vpop.permute.xlu0 %2171
        %2173 = vrot.lane.b32.xlu0 %v2140, 127
        %v2174 = vpop.permute.xlu0 %2173
        %2177 = vst.msk [vmem:[#allocation4 + $0x40] sm:$0xff] %vm2166, %v2172
        %2178 = vst.msk [vmem:[#allocation4 + $0x60] sm:$0xff] %vm2166, %v2174
        %2179 = vrot.lane.b32.xlu0 %v2139, 126
        %v2180 = vpop.permute.xlu0 %2179
        %2181 = vrot.lane.b32.xlu0 %v2140, 126
        %v2182 = vpop.permute.xlu0 %2181
        %2185 = vst.msk [vmem:[#allocation4 + $0x80] sm:$0xff] %vm2166, %v2180
        %2186 = vst.msk [vmem:[#allocation4 + $0xa0] sm:$0xff] %vm2166, %v2182
        %2187 = vst.msk [vmem:[#allocation4 + $0xc0] sm:$0xff] %vm2166, %v2144
        %2188 = vst.msk [vmem:[#allocation4 + $0xe0] sm:$0xff] %vm2166, %v2145
        %2191 = vrot.lane.b32.xlu0 %v2144, 127
        %v2192 = vpop.permute.xlu0 %2191
        %2193 = vrot.lane.b32.xlu0 %v2145, 127
        %v2194 = vpop.permute.xlu0 %2193
        %2197 = vst.msk [vmem:[#allocation4 + $0x100] sm:$0xff] %vm2166, %v2192
        %2198 = vst.msk [vmem:[#allocation4 + $0x120] sm:$0xff] %vm2166, %v2194
        %2199 = vrot.lane.b32.xlu0 %v2144, 126
        %v2200 = vpop.permute.xlu0 %2199
        %2201 = vrot.lane.b32.xlu0 %v2145, 126
        %v2202 = vpop.permute.xlu0 %2201
        %2205 = vst.msk [vmem:[#allocation4 + $0x140] sm:$0xff] %vm2166, %v2200
        %2206 = vst.msk [vmem:[#allocation4 + $0x160] sm:$0xff] %vm2166, %v2202
        %2207 = vst.msk [vmem:[#allocation4 + $0x180] sm:$0xff] %vm2166, %v2149
        %2208 = vst.msk [vmem:[#allocation4 + $0x1a0] sm:$0xff] %vm2166, %v2150
        %2211 = vrot.lane.b32.xlu0 %v2149, 127
        %v2212 = vpop.permute.xlu0 %2211
        %2213 = vrot.lane.b32.xlu0 %v2150, 127
        %v2214 = vpop.permute.xlu0 %2213
        %2217 = vst.msk [vmem:[#allocation4 + $0x1c0] sm:$0xff] %vm2166, %v2212
        %2218 = vst.msk [vmem:[#allocation4 + $0x1e0] sm:$0xff] %vm2166, %v2214
        %2219 = vrot.lane.b32.xlu0 %v2149, 126
        %v2220 = vpop.permute.xlu0 %2219
        %2221 = vrot.lane.b32.xlu0 %v2150, 126
        %v2222 = vpop.permute.xlu0 %2221
        %2225 = vst.msk [vmem:[#allocation4 + $0x200] sm:$0xff] %vm2166, %v2220
        %2226 = vst.msk [vmem:[#allocation4 + $0x220] sm:$0xff] %vm2166, %v2222
        %2227 = vst.msk [vmem:[#allocation4 + $0x8] sm:$0xff] %vm2166, %v2144
        %2228 = vst.msk [vmem:[#allocation4 + $0x28] sm:$0xff] %vm2166, %v2145
        %2229 = vst.msk [vmem:[#allocation4 + $0x48] sm:$0xff] %vm2166, %v2192
        %2230 = vst.msk [vmem:[#allocation4 + $0x68] sm:$0xff] %vm2166, %v2194
        %2231 = vst.msk [vmem:[#allocation4 + $0x88] sm:$0xff] %vm2166, %v2200
        %2232 = vst.msk [vmem:[#allocation4 + $0xa8] sm:$0xff] %vm2166, %v2202
        %2233 = vst.msk [vmem:[#allocation4 + $0xc8] sm:$0xff] %vm2166, %v2149
        %2234 = vst.msk [vmem:[#allocation4 + $0xe8] sm:$0xff] %vm2166, %v2150
        %2235 = vst.msk [vmem:[#allocation4 + $0x108] sm:$0xff] %vm2166, %v2212
        %2236 = vst.msk [vmem:[#allocation4 + $0x128] sm:$0xff] %vm2166, %v2214
        %2237 = vst.msk [vmem:[#allocation4 + $0x148] sm:$0xff] %vm2166, %v2220
        %2238 = vst.msk [vmem:[#allocation4 + $0x168] sm:$0xff] %vm2166, %v2222
        %2239 = vst.msk [vmem:[#allocation4 + $0x188] sm:$0xff] %vm2166, %v2154
        %2240 = vst.msk [vmem:[#allocation4 + $0x1a8] sm:$0xff] %vm2166, %v2155
        %2243 = vrot.lane.b32.xlu0 %v2154, 127
        %v2244 = vpop.permute.xlu0 %2243
        %2245 = vrot.lane.b32.xlu0 %v2155, 127
        %v2246 = vpop.permute.xlu0 %2245
        %2249 = vst.msk [vmem:[#allocation4 + $0x1c8] sm:$0xff] %vm2166, %v2244
        %2250 = vst.msk [vmem:[#allocation4 + $0x1e8] sm:$0xff] %vm2166, %v2246
        %2251 = vrot.lane.b32.xlu0 %v2154, 126
        %v2252 = vpop.permute.xlu0 %2251
        %2253 = vrot.lane.b32.xlu0 %v2155, 126
        %v2254 = vpop.permute.xlu0 %2253
        %2257 = vst.msk [vmem:[#allocation4 + $0x208] sm:$0xff] %vm2166, %v2252
        %2258 = vst.msk [vmem:[#allocation4 + $0x228] sm:$0xff] %vm2166, %v2254
        %2259 = vst.msk [vmem:[#allocation4 + $0x10] sm:$0xff] %vm2166, %v2149
        %2260 = vst.msk [vmem:[#allocation4 + $0x30] sm:$0xff] %vm2166, %v2150
        %2261 = vst.msk [vmem:[#allocation4 + $0x50] sm:$0xff] %vm2166, %v2212
        %2262 = vst.msk [vmem:[#allocation4 + $0x70] sm:$0xff] %vm2166, %v2214
        %2263 = vst.msk [vmem:[#allocation4 + $0x90] sm:$0xff] %vm2166, %v2220
        %2264 = vst.msk [vmem:[#allocation4 + $0xb0] sm:$0xff] %vm2166, %v2222
        %2265 = vst.msk [vmem:[#allocation4 + $0xd0] sm:$0xff] %vm2166, %v2154
        %2266 = vst.msk [vmem:[#allocation4 + $0xf0] sm:$0xff] %vm2166, %v2155
        %2267 = vst.msk [vmem:[#allocation4 + $0x110] sm:$0xff] %vm2166, %v2244
        %2268 = vst.msk [vmem:[#allocation4 + $0x130] sm:$0xff] %vm2166, %v2246
        %2269 = vst.msk [vmem:[#allocation4 + $0x150] sm:$0xff] %vm2166, %v2252
        %2270 = vst.msk [vmem:[#allocation4 + $0x170] sm:$0xff] %vm2166, %v2254
        %2271 = vst.msk [vmem:[#allocation4 + $0x190] sm:$0xff] %vm2166, %v2159
        %2272 = vst.msk [vmem:[#allocation4 + $0x1b0] sm:$0xff] %vm2166, %v2160
        %2275 = vrot.lane.b32.xlu0 %v2159, 127
        %v2276 = vpop.permute.xlu0 %2275
        %2277 = vrot.lane.b32.xlu0 %v2160, 127
        %v2278 = vpop.permute.xlu0 %2277
        %2281 = vst.msk [vmem:[#allocation4 + $0x1d0] sm:$0xff] %vm2166, %v2276
        %2282 = vst.msk [vmem:[#allocation4 + $0x1f0] sm:$0xff] %vm2166, %v2278
        %2283 = vrot.lane.b32.xlu0 %v2159, 126
        %v2284 = vpop.permute.xlu0 %2283
        %2285 = vrot.lane.b32.xlu0 %v2160, 126
        %v2286 = vpop.permute.xlu0 %2285
        %2289 = vst.msk [vmem:[#allocation4 + $0x210] sm:$0xff] %vm2166, %v2284
        %2290 = vst.msk [vmem:[#allocation4 + $0x230] sm:$0xff] %vm2166, %v2286
        %2291 = vst.msk [vmem:[#allocation4 + $0x18] sm:$0xff] %vm2166, %v2154
        %2292 = vst.msk [vmem:[#allocation4 + $0x38] sm:$0xff] %vm2166, %v2155
        %2293 = vst.msk [vmem:[#allocation4 + $0x58] sm:$0xff] %vm2166, %v2244
        %2294 = vst.msk [vmem:[#allocation4 + $0x78] sm:$0xff] %vm2166, %v2246
        %2295 = vst.msk [vmem:[#allocation4 + $0x98] sm:$0xff] %vm2166, %v2252
        %2296 = vst.msk [vmem:[#allocation4 + $0xb8] sm:$0xff] %vm2166, %v2254
        %2297 = vst.msk [vmem:[#allocation4 + $0xd8] sm:$0xff] %vm2166, %v2159
        %2298 = vst.msk [vmem:[#allocation4 + $0xf8] sm:$0xff] %vm2166, %v2160
        %2299 = vst.msk [vmem:[#allocation4 + $0x118] sm:$0xff] %vm2166, %v2276
        %2300 = vst.msk [vmem:[#allocation4 + $0x138] sm:$0xff] %vm2166, %v2278
        %2301 = vst.msk [vmem:[#allocation4 + $0x158] sm:$0xff] %vm2166, %v2284
        %2302 = vst.msk [vmem:[#allocation4 + $0x178] sm:$0xff] %vm2166, %v2286
        %2303 = vst.msk [vmem:[#allocation4 + $0x198] sm:$0xff] %vm2166, %v2164
        %2304 = vst.msk [vmem:[#allocation4 + $0x1b8] sm:$0xff] %vm2166, %v2165
        %2307 = vrot.lane.b32.xlu0 %v2164, 127
        %v2308 = vpop.permute.xlu0 %2307
        %2309 = vrot.lane.b32.xlu0 %v2165, 127
        %v2310 = vpop.permute.xlu0 %2309
        %2313 = vst.msk [vmem:[#allocation4 + $0x1d8] sm:$0xff] %vm2166, %v2308
        %2314 = vst.msk [vmem:[#allocation4 + $0x1f8] sm:$0xff] %vm2166, %v2310
        %2315 = vrot.lane.b32.xlu0 %v2164, 126
        %v2316 = vpop.permute.xlu0 %2315
        %2317 = vrot.lane.b32.xlu0 %v2165, 126
        %v2318 = vpop.permute.xlu0 %2317
        %2321 = vst.msk [vmem:[#allocation4 + $0x218] sm:$0xff] %vm2166, %v2316
        %2322 = vst.msk [vmem:[#allocation4 + $0x238] sm:$0xff] %vm2166, %v2318
        %v2323 = vld [vmem:[#allocation4] sm:$0xff]
        %v2324 = vld [vmem:[#allocation4 + $0x8] sm:$0xff]
        %v2325 = vld [vmem:[#allocation4 + $0x10] sm:$0xff]
        %v2326 = vld [vmem:[#allocation4 + $0x18] sm:$0xff]
        %v2327 = vld [vmem:[#allocation4 + $0x20] sm:$0xff]
        %v2328 = vld [vmem:[#allocation4 + $0x28] sm:$0xff]
        %v2329 = vld [vmem:[#allocation4 + $0x30] sm:$0xff]
        %v2330 = vld [vmem:[#allocation4 + $0x38] sm:$0xff]
        %v2331 = vld [vmem:[#allocation4 + $0x40] sm:$0xff]
        %v2332 = vld [vmem:[#allocation4 + $0x48] sm:$0xff]
        %v2333 = vld [vmem:[#allocation4 + $0x50] sm:$0xff]
        %v2334 = vld [vmem:[#allocation4 + $0x58] sm:$0xff]
        %v2335 = vld [vmem:[#allocation4 + $0x60] sm:$0xff]
        %v2336 = vld [vmem:[#allocation4 + $0x68] sm:$0xff]
        %v2337 = vld [vmem:[#allocation4 + $0x70] sm:$0xff]
        %v2338 = vld [vmem:[#allocation4 + $0x78] sm:$0xff]
        %v2339 = vld [vmem:[#allocation4 + $0x80] sm:$0xff]
        %v2340 = vld [vmem:[#allocation4 + $0x88] sm:$0xff]
        %v2341 = vld [vmem:[#allocation4 + $0x90] sm:$0xff]
        %v2342 = vld [vmem:[#allocation4 + $0x98] sm:$0xff]
        %v2343 = vld [vmem:[#allocation4 + $0xa0] sm:$0xff]
        %v2344 = vld [vmem:[#allocation4 + $0xa8] sm:$0xff]
        %v2345 = vld [vmem:[#allocation4 + $0xb0] sm:$0xff]
        %v2346 = vld [vmem:[#allocation4 + $0xb8] sm:$0xff]
        %v2347 = vld [vmem:[#allocation4 + $0xc0] sm:$0xff]
        %v2348 = vld [vmem:[#allocation4 + $0xc8] sm:$0xff]
        %v2349 = vld [vmem:[#allocation4 + $0xd0] sm:$0xff]
        %v2350 = vld [vmem:[#allocation4 + $0xd8] sm:$0xff]
        %v2351 = vld [vmem:[#allocation4 + $0xe0] sm:$0xff]
        %v2352 = vld [vmem:[#allocation4 + $0xe8] sm:$0xff]
        %v2353 = vld [vmem:[#allocation4 + $0xf0] sm:$0xff]
        %v2354 = vld [vmem:[#allocation4 + $0xf8] sm:$0xff]
        %v2355 = vld [vmem:[#allocation4 + $0x100] sm:$0xff]
        %v2356 = vld [vmem:[#allocation4 + $0x108] sm:$0xff]
        %v2357 = vld [vmem:[#allocation4 + $0x110] sm:$0xff]
        %v2358 = vld [vmem:[#allocation4 + $0x118] sm:$0xff]
        %v2359 = vld [vmem:[#allocation4 + $0x120] sm:$0xff]
        %v2360 = vld [vmem:[#allocation4 + $0x128] sm:$0xff]
        %v2361 = vld [vmem:[#allocation4 + $0x130] sm:$0xff]
        %v2362 = vld [vmem:[#allocation4 + $0x138] sm:$0xff]
        %v2363 = vld [vmem:[#allocation4 + $0x140] sm:$0xff]
        %v2364 = vld [vmem:[#allocation4 + $0x148] sm:$0xff]
        %v2365 = vld [vmem:[#allocation4 + $0x150] sm:$0xff]
        %v2366 = vld [vmem:[#allocation4 + $0x158] sm:$0xff]
        %v2367 = vld [vmem:[#allocation4 + $0x160] sm:$0xff]
        %v2368 = vld [vmem:[#allocation4 + $0x168] sm:$0xff]
        %v2369 = vld [vmem:[#allocation4 + $0x170] sm:$0xff]
        %v2370 = vld [vmem:[#allocation4 + $0x178] sm:$0xff]
        %v2371 = vld [vmem:[#allocation4 + $0x180] sm:$0xff]
        %v2372 = vld [vmem:[#allocation4 + $0x188] sm:$0xff]
        %v2373 = vld [vmem:[#allocation4 + $0x190] sm:$0xff]
        %v2374 = vld [vmem:[#allocation4 + $0x198] sm:$0xff]
        %v2375 = vld [vmem:[#allocation4 + $0x1a0] sm:$0xff]
        %v2376 = vld [vmem:[#allocation4 + $0x1a8] sm:$0xff]
        %v2377 = vld [vmem:[#allocation4 + $0x1b0] sm:$0xff]
        %v2378 = vld [vmem:[#allocation4 + $0x1b8] sm:$0xff]
        %v2379 = vld [vmem:[#allocation4 + $0x1c0] sm:$0xff]
        %v2380 = vld [vmem:[#allocation4 + $0x1c8] sm:$0xff]
        %v2381 = vld [vmem:[#allocation4 + $0x1d0] sm:$0xff]
        %v2382 = vld [vmem:[#allocation4 + $0x1d8] sm:$0xff]
        %v2383 = vld [vmem:[#allocation4 + $0x1e0] sm:$0xff]
        %v2384 = vld [vmem:[#allocation4 + $0x1e8] sm:$0xff]
        %v2385 = vld [vmem:[#allocation4 + $0x1f0] sm:$0xff]
        %v2386 = vld [vmem:[#allocation4 + $0x1f8] sm:$0xff]
        %v2387 = vld [vmem:[#allocation4 + $0x200] sm:$0xff]
        %v2388 = vld [vmem:[#allocation4 + $0x208] sm:$0xff]
        %v2389 = vld [vmem:[#allocation4 + $0x210] sm:$0xff]
        %v2390 = vld [vmem:[#allocation4 + $0x218] sm:$0xff]
        %v2391 = vld [vmem:[#allocation4 + $0x220] sm:$0xff]
        %v2392 = vld [vmem:[#allocation4 + $0x228] sm:$0xff]
        %v2393 = vld [vmem:[#allocation4 + $0x230] sm:$0xff]
        %v2394 = vld [vmem:[#allocation4 + $0x238] sm:$0xff]
        %vm2395 = vcmask 130048
        %v2397 = vsel %vm2395, %v2113, 0
        %v2400 = vsel %vm2395, %v2115, 0
        %2402 = vmatpush.msra.mxu0 %v2383
        %2403 = vmatpush.msra.mxu0 %v2379
        %2404 = vmatpush.msra.mxu0 %v2375
        %2405 = vmatpush.msra.mxu0 %v2371
        %2406 = vmatpush.msra.mxu0 %v2367
        %2407 = vmatpush.msra.mxu0 %v2363
        %2408 = vmatpush.msra.mxu0 %v2359
        %2409 = vmatpush.msra.mxu0 %v2355
        %2410 = vmatpush.msra.mxu0 %v2351
        %2411 = vmatpush.msra.mxu0 %v2347
        %2412 = vmatpush.msra.mxu0 %v2343
        %2413 = vmatpush.msra.mxu0 %v2339
        %2414 = vmatpush.msra.mxu0 %v2335
        %2415 = vmatpush.msra.mxu0 %v2331
        %2416 = vmatpush.msra.mxu0 %v2327
        %2417 = vmatpush.msra.mxu0 %v2323
        %2418 = vmatmul.f32.gmra.mxu0 %v2112
        %v2419 = vpop.f32.mrf.mxu0
        %v2420 = vadd.f32 %v2121, %v2419
        %2421 = vmatmul.f32.gmra.mxu0 %v2114
        %v2422 = vpop.f32.mrf.mxu0
        %v2423 = vadd.f32 %v2126, %v2422
        %2424 = vdwg.mxu0
        %2425 = vmatpush.msra.mxu0 0.0
        %2426 = vmatpush.msra.mxu0 0.0
        %2427 = vmatpush.msra.mxu0 0.0
        %2428 = vmatpush.msra.mxu0 0.0
        %2429 = vmatpush.msra.mxu0 0.0
        %2430 = vmatpush.msra.mxu0 0.0
        %2431 = vmatpush.msra.mxu0 0.0
        %2432 = vmatpush.msra.mxu0 0.0
        %2433 = vmatpush.msra.mxu0 0.0
        %2434 = vmatpush.msra.mxu0 0.0
        %2435 = vmatpush.msra.mxu0 0.0
        %2436 = vmatpush.msra.mxu0 0.0
        %2437 = vmatpush.msra.mxu0 0.0
        %2438 = vmatpush.msra.mxu0 0.0
        %2439 = vmatpush.msra.mxu0 %v2391
        %2440 = vmatpush.msra.mxu0 %v2387
        %2441 = vmatmul.f32.gmra.mxu0 %v2397
        %v2442 = vpop.f32.mrf.mxu0
        %v2443 = vadd.f32 %v2420, %v2442
        %2444 = vmatmul.f32.gmra.mxu0 %v2400
        %v2445 = vpop.f32.mrf.mxu0
        %v2446 = vadd.f32 %v2423, %v2445
        %2447 = vdwg.mxu0
        %2448 = vmatpush.msra.mxu0 %v2384
        %2449 = vmatpush.msra.mxu0 %v2380
        %2450 = vmatpush.msra.mxu0 %v2376
        %2451 = vmatpush.msra.mxu0 %v2372
        %2452 = vmatpush.msra.mxu0 %v2368
        %2453 = vmatpush.msra.mxu0 %v2364
        %2454 = vmatpush.msra.mxu0 %v2360
        %2455 = vmatpush.msra.mxu0 %v2356
        %2456 = vmatpush.msra.mxu0 %v2352
        %2457 = vmatpush.msra.mxu0 %v2348
        %2458 = vmatpush.msra.mxu0 %v2344
        %2459 = vmatpush.msra.mxu0 %v2340
        %2460 = vmatpush.msra.mxu0 %v2336
        %2461 = vmatpush.msra.mxu0 %v2332
        %2462 = vmatpush.msra.mxu0 %v2328
        %2463 = vmatpush.msra.mxu0 %v2324
        %2464 = vmatmul.f32.gmra.mxu0 %v2112
        %v2465 = vpop.f32.mrf.mxu0
        %v2466 = vadd.f32 %v2121, %v2465
        %2467 = vmatmul.f32.gmra.mxu0 %v2114
        %v2468 = vpop.f32.mrf.mxu0
        %v2469 = vadd.f32 %v2126, %v2468
        %2470 = vdwg.mxu0
        %2471 = vmatpush.msra.mxu0 0.0
        %2472 = vmatpush.msra.mxu0 0.0
        %2473 = vmatpush.msra.mxu0 0.0
        %2474 = vmatpush.msra.mxu0 0.0
        %2475 = vmatpush.msra.mxu0 0.0
        %2476 = vmatpush.msra.mxu0 0.0
        %2477 = vmatpush.msra.mxu0 0.0
        %2478 = vmatpush.msra.mxu0 0.0
        %2479 = vmatpush.msra.mxu0 0.0
        %2480 = vmatpush.msra.mxu0 0.0
        %2481 = vmatpush.msra.mxu0 0.0
        %2482 = vmatpush.msra.mxu0 0.0
        %2483 = vmatpush.msra.mxu0 0.0
        %2484 = vmatpush.msra.mxu0 0.0
        %2485 = vmatpush.msra.mxu0 %v2392
        %2486 = vmatpush.msra.mxu0 %v2388
        %2487 = vmatmul.f32.gmra.mxu0 %v2397
        %v2488 = vpop.f32.mrf.mxu0
        %v2489 = vadd.f32 %v2466, %v2488
        %2490 = vmatmul.f32.gmra.mxu0 %v2400
        %v2491 = vpop.f32.mrf.mxu0
        %v2492 = vadd.f32 %v2469, %v2491
        %2493 = vdwg.mxu0
        %2494 = vmatpush.msra.mxu0 %v2385
        %2495 = vmatpush.msra.mxu0 %v2381
        %2496 = vmatpush.msra.mxu0 %v2377
        %2497 = vmatpush.msra.mxu0 %v2373
        %2498 = vmatpush.msra.mxu0 %v2369
        %2499 = vmatpush.msra.mxu0 %v2365
        %2500 = vmatpush.msra.mxu0 %v2361
        %2501 = vmatpush.msra.mxu0 %v2357
        %2502 = vmatpush.msra.mxu0 %v2353
        %2503 = vmatpush.msra.mxu0 %v2349
        %2504 = vmatpush.msra.mxu0 %v2345
        %2505 = vmatpush.msra.mxu0 %v2341
        %2506 = vmatpush.msra.mxu0 %v2337
        %2507 = vmatpush.msra.mxu0 %v2333
        %2508 = vmatpush.msra.mxu0 %v2329
        %2509 = vmatpush.msra.mxu0 %v2325
        %2510 = vmatmul.f32.gmra.mxu0 %v2112
        %v2511 = vpop.f32.mrf.mxu0
        %v2512 = vadd.f32 %v2121, %v2511
        %2513 = vmatmul.f32.gmra.mxu0 %v2114
        %v2514 = vpop.f32.mrf.mxu0
        %v2515 = vadd.f32 %v2126, %v2514
        %2516 = vdwg.mxu0
        %2517 = vmatpush.msra.mxu0 0.0
        %2518 = vmatpush.msra.mxu0 0.0
        %2519 = vmatpush.msra.mxu0 0.0
        %2520 = vmatpush.msra.mxu0 0.0
        %2521 = vmatpush.msra.mxu0 0.0
        %2522 = vmatpush.msra.mxu0 0.0
        %2523 = vmatpush.msra.mxu0 0.0
        %2524 = vmatpush.msra.mxu0 0.0
        %2525 = vmatpush.msra.mxu0 0.0
        %2526 = vmatpush.msra.mxu0 0.0
        %2527 = vmatpush.msra.mxu0 0.0
        %2528 = vmatpush.msra.mxu0 0.0
        %2529 = vmatpush.msra.mxu0 0.0
        %2530 = vmatpush.msra.mxu0 0.0
        %2531 = vmatpush.msra.mxu0 %v2393
        %2532 = vmatpush.msra.mxu0 %v2389
        %2533 = vmatmul.f32.gmra.mxu0 %v2397
        %v2534 = vpop.f32.mrf.mxu0
        %v2535 = vadd.f32 %v2512, %v2534
        %2536 = vmatmul.f32.gmra.mxu0 %v2400
        %v2537 = vpop.f32.mrf.mxu0
        %v2538 = vadd.f32 %v2515, %v2537
        %2539 = vdwg.mxu0
        %2540 = vmatpush.msra.mxu0 %v2386
        %2541 = vmatpush.msra.mxu0 %v2382
        %2542 = vmatpush.msra.mxu0 %v2378
        %2543 = vmatpush.msra.mxu0 %v2374
        %2544 = vmatpush.msra.mxu0 %v2370
        %2545 = vmatpush.msra.mxu0 %v2366
        %2546 = vmatpush.msra.mxu0 %v2362
        %2547 = vmatpush.msra.mxu0 %v2358
        %2548 = vmatpush.msra.mxu0 %v2354
        %2549 = vmatpush.msra.mxu0 %v2350
        %2550 = vmatpush.msra.mxu0 %v2346
        %2551 = vmatpush.msra.mxu0 %v2342
        %2552 = vmatpush.msra.mxu0 %v2338
        %2553 = vmatpush.msra.mxu0 %v2334
        %2554 = vmatpush.msra.mxu0 %v2330
        %2555 = vmatpush.msra.mxu0 %v2326
        %2556 = vmatmul.f32.gmra.mxu0 %v2112
        %v2557 = vpop.f32.mrf.mxu0
        %v2558 = vadd.f32 %v2121, %v2557
        %2559 = vmatmul.f32.gmra.mxu0 %v2114
        %v2560 = vpop.f32.mrf.mxu0
        %v2561 = vadd.f32 %v2126, %v2560
        %2562 = vdwg.mxu0
        %2563 = vmatpush.msra.mxu0 0.0
        %2564 = vmatpush.msra.mxu0 0.0
        %2565 = vmatpush.msra.mxu0 0.0
        %2566 = vmatpush.msra.mxu0 0.0
        %2567 = vmatpush.msra.mxu0 0.0
        %2568 = vmatpush.msra.mxu0 0.0
        %2569 = vmatpush.msra.mxu0 0.0
        %2570 = vmatpush.msra.mxu0 0.0
        %2571 = vmatpush.msra.mxu0 0.0
        %2572 = vmatpush.msra.mxu0 0.0
        %2573 = vmatpush.msra.mxu0 0.0
        %2574 = vmatpush.msra.mxu0 0.0
        %2575 = vmatpush.msra.mxu0 0.0
        %2576 = vmatpush.msra.mxu0 0.0
        %2577 = vmatpush.msra.mxu0 %v2394
        %2578 = vmatpush.msra.mxu0 %v2390
        %2579 = vmatmul.f32.gmra.mxu0 %v2397
        %v2580 = vpop.f32.mrf.mxu0
        %v2581 = vadd.f32 %v2558, %v2580
        %2582 = vmatmul.f32.gmra.mxu0 %v2400
        %v2583 = vpop.f32.mrf.mxu0
        %v2584 = vadd.f32 %v2561, %v2583
        %2585 = vdwg.mxu0
        %s2586 = scalar_lea.vmem %s278, %s2137
        %2587 = vst [vmem:[%s2586] sm:$0xff] %v2443
        %2588 = vst [vmem:[%s2586 + $0x8] sm:$0xff] %v2446
        %s2589 = scalar_lea.vmem %s278, %s2142
        %2590 = vst [vmem:[%s2589] sm:$0xff] %v2489
        %2591 = vst [vmem:[%s2589 + $0x8] sm:$0xff] %v2492
        %s2592 = scalar_lea.vmem %s278, %s2147
        %2593 = vst [vmem:[%s2592] sm:$0xff] %v2535
        %2594 = vst [vmem:[%s2592 + $0x8] sm:$0xff] %v2538
        %s2595 = scalar_lea.vmem %s278, %s2152
        %2596 = vst [vmem:[%s2595] sm:$0xff] %v2581
        %2597 = vst [vmem:[%s2595 + $0x8] sm:$0xff] %v2584
      $region67: #{hyper_decoder.1} parent=47 // loop_footer
        %s2133 = sadd.s32 1, %s2129
      $region68: #{hyper_decoder.1} parent=47 // loop_footer_branch
        %2128 = sbr.rel target = $region64
      $region69: #{hyper_decoder.1} parent=47 // loop_exit
        _
      %p2598 = scmp.lt.s32.totalorder %s18, 1
      %s2599 = scalar_select %p2598, %s18, 1
      %s2600 = smul.addr %s2599, 146
      %s2601 = smul.addr %s2600, 8
      %s2602 = scalar_lea.vmem %s7, %s2601
      // Predicated region
      $region70: #{hyper_decoder.1} parent=47 // pred_check
        %p2603 = pneg %p188
      $region71: #{hyper_decoder.1} parent=47 // pred_check_branch
        %2605 = sbr.rel (%p2603) target = $region73
      $region72: #{hyper_decoder.1} parent=47 // pred_region
        _
      $region73: #{hyper_decoder.1} parent=47 // pred_fallthru
        _
    $region48: #{hyper_decoder.1} parent=5 // pred_fallthru
      _
    %p2606 = scmp.le.s32.totalorder 2, %s13
    // Predicated region
    $region74: #{hyper_decoder.1} parent=5 // pred_check
      %p2607 = pneg %p2606
    $region75: #{hyper_decoder.1} parent=5 // pred_check_branch
      %2609 = sbr.rel (%p2607) target = $region77
    $region76: #{hyper_decoder.1} parent=5 // pred_region
      %s2610 = ssub.s32 %s13, 2
      // Predicated region
      $region78: #{hyper_decoder.1} parent=76 // pred_check
        %p2611 = pneg %p194
      $region79: #{hyper_decoder.1} parent=76 // pred_check_branch
        %2613 = sbr.rel (%p2611) target = $region81
      $region80: #{hyper_decoder.1} parent=76 // pred_region
        %p2614 = scmp.lt.s32.totalorder %s19, 1
        %s2615 = scalar_select %p2614, %s19, 1
        %s2616 = smul.addr %s2615, 146
        %s2617 = smul.addr %s2616, 8
        %s2618 = scalar_lea.vmem %s7, %s2617
      $region81: #{hyper_decoder.1} parent=76 // pred_fallthru
        _
    $region77: #{hyper_decoder.1} parent=5 // pred_fallthru
      _
  $region6: #{hyper_decoder.1} parent=0 // loop_footer
    %s17 = sadd.s32 1, %s13
  $region7: #{hyper_decoder.1} parent=0 // loop_footer_branch
    %12 = sbr.rel target = $region3
  $region8: #{hyper_decoder.1} parent=0 // loop_exit
    _

</llo_original>
